<compile_context>
chip_gen: v5e
topology: v5e:2x2
jax: 0.10.0
libtpu: 0.0.40
codegen_flags: <defaults>
</compile_context>

<pallas_src>
import jax
import jax.numpy as jnp
from jax.experimental import pallas as pl
from jax.experimental.pallas import tpu as pltpu


_CHUNK = 8      # batch elements per inner-loop iteration (bounds vreg pressure)
_MAX_BT = 128   # diminishing returns beyond this (per-step HBM time >> overhead)


def _cdiv(a, b):
    return -(-a // b)


# ----------------------------------------------------------------------------
# Fused kernel: conv1 + relu + pool1 + conv2 + relu + pool2 + fc1 + relu + fc2
# One grid step processes Bt batch elements, in chunks of _CHUNK.
# ----------------------------------------------------------------------------
def _cnn_fused_kernel(x_ref, w1_ref, b1_ref, w2_ref, b2_ref,
                      wf1_ref, bf1_ref, wf2_ref, bf2_ref,
                      o_ref, h1_s, h2_s):
    # x_ref : (Bt*48, 1200)  conv1 im2col rows (t-major within each batch elem)
    # w1    : (1200, 64)     w2: (3, 64, 64)   wf1: (4, 64, 128)  wf2: (128, 128)
    # o_ref : (1, Bt, 128)
    # h1_s  : (C*48, 64) f32     h2_s : (C*8, 64) f32      (C = _CHUNK)
    c48 = h1_s.shape[0]                  # C * 48
    c8 = h2_s.shape[0]                   # C * 8
    C = c8 // 8
    n_chunks = x_ref.shape[0] // c48     # == Bt // C  (static)

    for c in range(n_chunks):
        # ---- conv1 as one GEMM over C*48 patch rows, + bias + ReLU ----------
        xs = x_ref[pl.ds(c * c48, c48), :]                       # (C*48, 1200)
        h1_s[...] = jnp.maximum(
            jnp.dot(xs, w1_ref[...], preferred_element_type=jnp.float32)
            + b1_ref[...], 0.0)

        # ---- maxpool1(2) fused with conv2 (3 kernel taps) + bias + ReLU -----
        # conv2 output row m = b*8 + s2 consumes pooled rows 3*s2+j, i.e. the
        # max of h1 rows 6*s2+2j and 6*s2+2j+1  ->  stride-6 reads of h1_s.
        acc2 = None
        for j in range(3):
            g = jnp.maximum(h1_s[pl.ds(2 * j, c8, stride=6), :],
                            h1_s[pl.ds(2 * j + 1, c8, stride=6), :])
            part = jnp.dot(g, w2_ref[j], preferred_element_type=jnp.float32)
            acc2 = part if acc2 is None else acc2 + part
        h2_s[...] = jnp.maximum(acc2 + b2_ref[...], 0.0)         # (C*8, 64)

        # ---- maxpool2(2) fused with fc1 (4 time-slot partials) + ReLU -------
        z = None
        for s in range(4):
            g = jnp.maximum(h2_s[pl.ds(2 * s, C, stride=8), :],
                            h2_s[pl.ds(2 * s + 1, C, stride=8), :])
            part = jnp.dot(g, wf1_ref[s], preferred_element_type=jnp.float32)
            z = part if z is None else z + part
        z = jnp.maximum(z + bf1_ref[...], 0.0)                   # (C, 128)

        # ---- fc2 (padded to 128 lanes -> dense, sublane-aligned store) ------
        o_ref[0, pl.ds(c * C, C), :] = (
            jnp.dot(z, wf2_ref[...], preferred_element_type=jnp.float32)
            + bf2_ref[...])


# ----------------------------------------------------------------------------
# Generation-aware tiling
# ----------------------------------------------------------------------------
def _tpu_config():
    kind = ""
    try:
        kind = jax.devices()[0].device_kind.lower()
    except Exception:
        pass
    if "v7" in kind or "7x" in kind:
        # 64 MiB physical VMEM, 2 TensorCores: stay well under ~48 MB.
        return 2, 44 * 1024 * 1024
    if any(g in kind for g in ("v6", "v5", "v4")):
        # 128 MiB physical VMEM, single TensorCore.
        return 1, 48 * 1024 * 1024
    # unknown backend: conservative defaults
    return 1, 32 * 1024 * 1024


def _plan_tiles(B, itemsize, num_cores, vmem_budget):
    """Choose (Bt, steps): 2x double-buffered input blocks + weights + scratch
    fit vmem_budget, Bt is a multiple of _CHUNK, and on multi-core parts the
    step count is a multiple of the core count."""
    # Conservative VMEM model (lane dims padded to 128, x2 for double buffers).
    weight_bytes = 2 * (1200 * 128 * itemsize       # W1 (64 -> 128 lanes)
                        + 3 * 64 * 128 * 4          # W2
                        + 4 * 64 * 128 * 4          # Wf1
                        + 128 * 128 * 4             # Wf2
                        + 4 * 8 * 128 * 4)          # biases
    scratch_bytes = (_CHUNK * 48 + _CHUNK * 8) * 128 * 4
    fixed = weight_bytes + scratch_bytes + (2 << 20)            # +2 MB margin
    per_elem = 2 * 48 * 1280 * itemsize + 2 * 128 * 4           # x block + out
    cap = (vmem_budget - fixed) // per_elem
    cap = max(_CHUNK, min(_MAX_BT, (cap // _CHUNK) * _CHUNK))

    min_steps = _cdiv(B, cap)                        # fewest steps VMEM allows
    if num_cores > 1:
        # >= 2 steps per core when the batch allows; always a multiple of the
        # core count so both TensorCores get equal work.
        useful = _cdiv(B, _CHUNK)
        steps = max(min_steps, min(2 * num_cores, useful))
        steps = _cdiv(steps, num_cores) * num_cores
    else:
        steps = min_steps
    bt = _cdiv(_cdiv(B, steps), _CHUNK) * _CHUNK     # balanced, multiple of C
    return bt, steps


# ----------------------------------------------------------------------------
# Wrapper
# ----------------------------------------------------------------------------
def cnn_forward(x, params):
    B, L, Cin = x.shape
    assert L == 192 and Cin == 300, "flatten->fc1(256) implies L=192, C=300"

    W1, b1 = params["W1"], params["b1"]        # (64, 300, 4), (64,)
    W2, b2 = params["W2"], params["b2"]        # (64, 64, 3),  (64,)
    Wf1, bf1 = params["Wf1"], params["bf1"]    # (128, 256),   (128,)
    Wf2, bf2 = params["Wf2"], params["bf2"]    # (3, 128),     (3,)

    # conv1 GEMM runs in bf16 only if the producer already supplies bf16
    # activations; everything downstream accumulates/operates in f32.
    compute_dtype = jnp.bfloat16 if x.dtype == jnp.bfloat16 else jnp.float32

    num_cores, vmem_budget = _tpu_config()
    itemsize = jnp.dtype(compute_dtype).itemsize
    Bt, steps = _plan_tiles(B, itemsize, num_cores, vmem_budget)
    B_pad = Bt * steps

    # conv1 im2col is a FREE contiguous reshape (stride == kernel_size):
    #   x2d[b*48 + t, j*300 + c] == x[b, 4*t + j, c]
    x2d = x.reshape(B * 48, 1200).astype(compute_dtype)
    if B_pad != B:
        x2d = jnp.pad(x2d, ((0, (B_pad - B) * 48), (0, 0)))

    W1r = W1.transpose(2, 1, 0).reshape(1200, 64).astype(compute_dtype)   # [j*300+c, o]
    b1r = b1.reshape(1, 64).astype(jnp.float32)
    W2r = W2.transpose(2, 1, 0).astype(jnp.float32)                       # (3,64,64) [j,c,o]
    b2r = b2.reshape(1, 64).astype(jnp.float32)
    # fc1 weight regrouped to match channel-major PyTorch flatten:
    #   Wf1r[s, c, h] = Wf1[h, c*4 + s]
    Wf1r = Wf1.reshape(128, 64, 4).transpose(2, 1, 0).astype(jnp.float32)  # (4,64,128)
    bf1r = bf1.reshape(1, 128).astype(jnp.float32)
    # fc2 zero-padded to 128 output lanes -> unmasked (lane-dense) stores
    Wf2r = jnp.zeros((128, 128), jnp.float32).at[:, :3].set(Wf2.T)
    bf2r = jnp.zeros((1, 128), jnp.float32).at[:, :3].set(bf2)

    flops = 2 * B_pad * (48 * 1200 * 64 + 8 * 3 * 64 * 64 + 4 * 64 * 128 + 128 * 128)
    weight_elems = 1200 * 64 + 3 * 64 * 64 + 4 * 64 * 128 + 128 * 128 + 64 + 64 + 128 + 128
    bytes_accessed = int(x2d.size) * itemsize + weight_elems * 4 + B_pad * 128 * 4

    out = pl.pallas_call(
        _cnn_fused_kernel,
        out_shape=jax.ShapeDtypeStruct((steps, Bt, 128), jnp.float32),
        grid=(steps,),
        in_specs=[
            pl.BlockSpec((Bt * 48, 1200), lambda i: (i, 0)),   # conv1 patches
            pl.BlockSpec((1200, 64), lambda i: (0, 0)),        # W1
            pl.BlockSpec((1, 64), lambda i: (0, 0)),           # b1
            pl.BlockSpec((3, 64, 64), lambda i: (0, 0, 0)),    # W2 (per tap)
            pl.BlockSpec((1, 64), lambda i: (0, 0)),           # b2
            pl.BlockSpec((4, 64, 128), lambda i: (0, 0, 0)),   # Wf1 (per slot)
            pl.BlockSpec((1, 128), lambda i: (0, 0)),          # bf1
            pl.BlockSpec((128, 128), lambda i: (0, 0)),        # Wf2 (padded)
            pl.BlockSpec((1, 128), lambda i: (0, 0)),          # bf2 (padded)
        ],
        out_specs=pl.BlockSpec((1, Bt, 128), lambda i: (i, 0, 0)),
        scratch_shapes=[
            pltpu.VMEM((_CHUNK * 48, 64), jnp.float32),        # relu(conv1) chunk
            pltpu.VMEM((_CHUNK * 8, 64), jnp.float32),         # relu(conv2) chunk
        ],
        compiler_params=pltpu.CompilerParams(
            dimension_semantics=("parallel",),
            vmem_limit_bytes=int(vmem_budget)),
        cost_estimate=pl.CostEstimate(
            flops=int(flops), transcendentals=0,
            bytes_accessed=int(bytes_accessed)),
    )(x2d, W1r, b1r, W2r, b2r, Wf1r, bf1r, Wf2r, bf2r)

    return out.reshape(B_pad, 128)[:B, :3]


# ----------------------------------------------------------------------------
# Deterministic parameter init (PyTorch-like uniform(-1/sqrt(fan_in), ...))
# ----------------------------------------------------------------------------
def init_params(key):
    ks = jax.random.split(key, 8)

    def u(k, shape, fan_in):
        bound = 1.0 / jnp.sqrt(jnp.float32(fan_in))
        return jax.random.uniform(k, shape, jnp.float32, -bound, bound)

    return {
        "W1": u(ks[0], (64, 300, 4), 300 * 4),
        "b1": u(ks[1], (64,), 300 * 4),
        "W2": u(ks[2], (64, 64, 3), 64 * 3),
        "b2": u(ks[3], (64,), 64 * 3),
        "Wf1": u(ks[4], (128, 256), 256),
        "bf1": u(ks[5], (128,), 256),
        "Wf2": u(ks[6], (3, 128), 128),
        "bf2": u(ks[7], (3,), 128),
    }


# ----------------------------------------------------------------------------
# Pure-JAX reference (mirrors the PyTorch forward; dropout = identity)
# ----------------------------------------------------------------------------
def reference_forward(x, P):
    hp = jax.lax.Precision.HIGHEST
    xc = jnp.transpose(x, (0, 2, 1))                        # (B, 300, 192) NCL
    h = jax.lax.conv_general_dilated(
        xc, P["W1"], window_strides=(4,), padding="VALID",
        dimension_numbers=("NCH", "OIH", "NCH"), precision=hp)
    h = jnp.maximum(h + P["b1"][None, :, None], 0.0)
    h = jax.lax.reduce_window(h, -jnp.inf, jax.lax.max,
                              (1, 1, 2), (1, 1, 2), "VALID")
    h = jax.lax.conv_general_dilated(
        h, P["W2"], window_strides=(3,), padding="VALID",
        dimension_numbers=("NCH", "OIH", "NCH"), precision=hp)
    h = jnp.maximum(h + P["b2"][None, :, None], 0.0)
    h = jax.lax.reduce_window(h, -jnp.inf, jax.lax.max,
                              (1, 1, 2), (1, 1, 2), "VALID")
    f = h.reshape(h.shape[0], -1)                           # channel-major flatten
    z = jnp.maximum(jnp.dot(f, P["Wf1"].T, precision=hp) + P["bf1"], 0.0)
    return jnp.dot(z, P["Wf2"].T, precision=hp) + P["bf2"]


if __name__ == "__main__":
    key = jax.random.PRNGKey(0)
    kx, kp = jax.random.split(key)

    # seq=192 and feat=300 are forced by the conv strides + fc1(256)
    B = 8
    x = jax.random.normal(kx, (B, 192, 300), dtype=jnp.float32)
    params = init_params(kp)

    ref = jax.block_until_ready(reference_forward(x, params))

    # f32 path
    out = jax.block_until_ready(jax.jit(cnn_forward)(x, params))
    assert out.shape == (B, 3) and out.dtype == jnp.float32
    assert jnp.allclose(out, ref, rtol=2e-3, atol=2e-3), (out, ref)

    # awkward batch size -> exercises the zero-padding path (no Bt=1 fallback)
    B2 = 5
    out5 = jax.block_until_ready(jax.jit(cnn_forward)(x[:B2], params))
    assert out5.shape == (B2, 3)
    assert jnp.allclose(out5, ref[:B2], rtol=2e-3, atol=2e-3), (out5, ref[:B2])

    # producer already supplies bf16 activations -> conv1 GEMM runs in bf16
    # (f32 accumulation); looser tolerance for the K=1200 bf16 contraction.
    x16 = x.astype(jnp.bfloat16)
    out16 = jax.block_until_ready(jax.jit(cnn_forward)(x16, params))
    assert jnp.allclose(out16, ref, rtol=5e-2, atol=5e-2), (out16, ref)

    print("KERNEL_OK")
</pallas_src>

<mosaic_0001>
module attributes {stable_mosaic.version = 11 : i64} {
  func.func @_cnn_fused_kernel(%arg0: i32, %arg1: memref<384x1200xf32, #tpu.memory_space<vmem>>, %arg2: memref<1200x64xf32, #tpu.memory_space<vmem>>, %arg3: memref<1x64xf32, #tpu.memory_space<vmem>>, %arg4: memref<3x64x64xf32, #tpu.memory_space<vmem>>, %arg5: memref<1x64xf32, #tpu.memory_space<vmem>>, %arg6: memref<4x64x128xf32, #tpu.memory_space<vmem>>, %arg7: memref<1x128xf32, #tpu.memory_space<vmem>>, %arg8: memref<128x128xf32, #tpu.memory_space<vmem>>, %arg9: memref<1x128xf32, #tpu.memory_space<vmem>>, %arg10: memref<1x8x128xf32, #tpu.memory_space<vmem>>, %arg11: memref<384x64xf32, #tpu.memory_space<vmem>>, %arg12: memref<64x64xf32, #tpu.memory_space<vmem>>) attributes {dimension_semantics = [#tpu.dimension_semantics<parallel>], iteration_bounds = array<i64: 1>, scalar_prefetch = 0 : i64, scratch_operands = 2 : i64, tpu.core_type = #tpu.core_type<tc>, window_params = [{transform_indices = @transform_0, window_bounds = array<i64: 384, 1200>}, {pipeline_mode = #tpu.pipeline_mode<synchronous>, transform_indices = @transform_1, window_bounds = array<i64: 1200, 64>}, {pipeline_mode = #tpu.pipeline_mode<synchronous>, transform_indices = @transform_2, window_bounds = array<i64: 1, 64>}, {pipeline_mode = #tpu.pipeline_mode<synchronous>, transform_indices = @transform_3, window_bounds = array<i64: 3, 64, 64>}, {pipeline_mode = #tpu.pipeline_mode<synchronous>, transform_indices = @transform_4, window_bounds = array<i64: 1, 64>}, {pipeline_mode = #tpu.pipeline_mode<synchronous>, transform_indices = @transform_5, window_bounds = array<i64: 4, 64, 128>}, {pipeline_mode = #tpu.pipeline_mode<synchronous>, transform_indices = @transform_6, window_bounds = array<i64: 1, 128>}, {pipeline_mode = #tpu.pipeline_mode<synchronous>, transform_indices = @transform_7, window_bounds = array<i64: 128, 128>}, {pipeline_mode = #tpu.pipeline_mode<synchronous>, transform_indices = @transform_8, window_bounds = array<i64: 1, 128>}, {transform_indices = @transform_9, window_bounds = array<i64: 1, 8, 128>}]} {
    %c0 = arith.constant 0 : index
    %c0_0 = arith.constant 0 : index
    %0 = vector.load %arg1[%c0, %c0_0] : memref<384x1200xf32, #tpu.memory_space<vmem>>, vector<384x1200xf32>
    %c0_1 = arith.constant 0 : index
    %c0_2 = arith.constant 0 : index
    %1 = vector.load %arg2[%c0_1, %c0_2] : memref<1200x64xf32, #tpu.memory_space<vmem>>, vector<1200x64xf32>
    %cst = arith.constant dense<0.000000e+00> : vector<384x64xf32>
    %2 = tpu.matmul %0, %1, %cst {dimension_numbers = #tpu.dot_dimension_numbers<[1], [0], [0], [1], [0, 0, 1, 1], [], []>} : vector<384x1200xf32>, vector<1200x64xf32>, vector<384x64xf32> -> vector<384x64xf32>
    %c0_3 = arith.constant 0 : index
    %c0_4 = arith.constant 0 : index
    %3 = vector.load %arg3[%c0_3, %c0_4] : memref<1x64xf32, #tpu.memory_space<vmem>>, vector<1x64xf32>
    %4 = vector.broadcast %3 : vector<1x64xf32> to vector<384x64xf32>
    %5 = arith.addf %2, %4 : vector<384x64xf32>
    %cst_5 = arith.constant 0.000000e+00 : f32
    %6 = vector.broadcast %cst_5 : f32 to vector<384x64xf32>
    %7 = arith.maximumf %5, %6 : vector<384x64xf32>
    %c0_6 = arith.constant 0 : index
    %c0_7 = arith.constant 0 : index
    %8 = vector.load %arg11[%c0_6, %c0_7] : memref<384x64xf32, #tpu.memory_space<vmem>>, vector<384x64xf32>
    tpu.vector_store %arg11[%c0_6, %c0_7], %7 {strides = array<i32>} : memref<384x64xf32, #tpu.memory_space<vmem>>, vector<384x64xf32>,
    %c0_8 = arith.constant 0 : index
    %c0_9 = arith.constant 0 : index
    %9 = tpu.strided_load %arg11[%c0_8, %c0_9] {strides = array<i32: 6, 1>} : memref<384x64xf32, #tpu.memory_space<vmem>>, vector<64x64xf32>
    %c1 = arith.constant 1 : index
    %c0_10 = arith.constant 0 : index
    %10 = tpu.strided_load %arg11[%c1, %c0_10] {strides = array<i32: 6, 1>} : memref<384x64xf32, #tpu.memory_space<vmem>>, vector<64x64xf32>
    %11 = arith.maximumf %9, %10 : vector<64x64xf32>
    %c0_11 = arith.constant 0 : index
    %c0_12 = arith.constant 0 : index
    %c0_13 = arith.constant 0 : index
    %12 = vector.load %arg4[%c0_11, %c0_12, %c0_13] : memref<3x64x64xf32, #tpu.memory_space<vmem>>, vector<1x64x64xf32>
    %13 = vector.shape_cast %12 : vector<1x64x64xf32> to vector<64x64xf32>
    %cst_14 = arith.constant dense<0.000000e+00> : vector<64x64xf32>
    %14 = tpu.matmul %11, %13, %cst_14 {dimension_numbers = #tpu.dot_dimension_numbers<[1], [0], [0], [1], [0, 0, 1, 1], [], []>} : vector<64x64xf32>, vector<64x64xf32>, vector<64x64xf32> -> vector<64x64xf32>
    %c2 = arith.constant 2 : index
    %c0_15 = arith.constant 0 : index
    %15 = tpu.strided_load %arg11[%c2, %c0_15] {strides = array<i32: 6, 1>} : memref<384x64xf32, #tpu.memory_space<vmem>>, vector<64x64xf32>
    %c3 = arith.constant 3 : index
    %c0_16 = arith.constant 0 : index
    %16 = tpu.strided_load %arg11[%c3, %c0_16] {strides = array<i32: 6, 1>} : memref<384x64xf32, #tpu.memory_space<vmem>>, vector<64x64xf32>
    %17 = arith.maximumf %15, %16 : vector<64x64xf32>
    %c1_17 = arith.constant 1 : index
    %c0_18 = arith.constant 0 : index
    %c0_19 = arith.constant 0 : index
    %18 = vector.load %arg4[%c1_17, %c0_18, %c0_19] : memref<3x64x64xf32, #tpu.memory_space<vmem>>, vector<1x64x64xf32>
    %19 = vector.shape_cast %18 : vector<1x64x64xf32> to vector<64x64xf32>
    %cst_20 = arith.constant dense<0.000000e+00> : vector<64x64xf32>
    %20 = tpu.matmul %17, %19, %cst_20 {dimension_numbers = #tpu.dot_dimension_numbers<[1], [0], [0], [1], [0, 0, 1, 1], [], []>} : vector<64x64xf32>, vector<64x64xf32>, vector<64x64xf32> -> vector<64x64xf32>
    %21 = arith.addf %14, %20 : vector<64x64xf32>
    %c4 = arith.constant 4 : index
    %c0_21 = arith.constant 0 : index
    %22 = tpu.strided_load %arg11[%c4, %c0_21] {strides = array<i32: 6, 1>} : memref<384x64xf32, #tpu.memory_space<vmem>>, vector<64x64xf32>
    %c5 = arith.constant 5 : index
    %c0_22 = arith.constant 0 : index
    %23 = tpu.strided_load %arg11[%c5, %c0_22] {strides = array<i32: 6, 1>} : memref<384x64xf32, #tpu.memory_space<vmem>>, vector<64x64xf32>
    %24 = arith.maximumf %22, %23 : vector<64x64xf32>
    %c2_23 = arith.constant 2 : index
    %c0_24 = arith.constant 0 : index
    %c0_25 = arith.constant 0 : index
    %25 = vector.load %arg4[%c2_23, %c0_24, %c0_25] : memref<3x64x64xf32, #tpu.memory_space<vmem>>, vector<1x64x64xf32>
    %26 = vector.shape_cast %25 : vector<1x64x64xf32> to vector<64x64xf32>
    %cst_26 = arith.constant dense<0.000000e+00> : vector<64x64xf32>
    %27 = tpu.matmul %24, %26, %cst_26 {dimension_numbers = #tpu.dot_dimension_numbers<[1], [0], [0], [1], [0, 0, 1, 1], [], []>} : vector<64x64xf32>, vector<64x64xf32>, vector<64x64xf32> -> vector<64x64xf32>
    %28 = arith.addf %21, %27 : vector<64x64xf32>
    %c0_27 = arith.constant 0 : index
    %c0_28 = arith.constant 0 : index
    %29 = vector.load %arg5[%c0_27, %c0_28] : memref<1x64xf32, #tpu.memory_space<vmem>>, vector<1x64xf32>
    %30 = vector.broadcast %29 : vector<1x64xf32> to vector<64x64xf32>
    %31 = arith.addf %28, %30 : vector<64x64xf32>
    %cst_29 = arith.constant 0.000000e+00 : f32
    %32 = vector.broadcast %cst_29 : f32 to vector<64x64xf32>
    %33 = arith.maximumf %31, %32 : vector<64x64xf32>
    %c0_30 = arith.constant 0 : index
    %c0_31 = arith.constant 0 : index
    %34 = vector.load %arg12[%c0_30, %c0_31] : memref<64x64xf32, #tpu.memory_space<vmem>>, vector<64x64xf32>
    tpu.vector_store %arg12[%c0_30, %c0_31], %33 {strides = array<i32>} : memref<64x64xf32, #tpu.memory_space<vmem>>, vector<64x64xf32>,
    %c0_32 = arith.constant 0 : index
    %c0_33 = arith.constant 0 : index
    %35 = tpu.strided_load %arg12[%c0_32, %c0_33] {strides = array<i32: 8, 1>} : memref<64x64xf32, #tpu.memory_space<vmem>>, vector<8x64xf32>
    %c1_34 = arith.constant 1 : index
    %c0_35 = arith.constant 0 : index
    %36 = tpu.strided_load %arg12[%c1_34, %c0_35] {strides = array<i32: 8, 1>} : memref<64x64xf32, #tpu.memory_space<vmem>>, vector<8x64xf32>
    %37 = arith.maximumf %35, %36 : vector<8x64xf32>
    %c0_36 = arith.constant 0 : index
    %c0_37 = arith.constant 0 : index
    %c0_38 = arith.constant 0 : index
    %38 = vector.load %arg6[%c0_36, %c0_37, %c0_38] : memref<4x64x128xf32, #tpu.memory_space<vmem>>, vector<1x64x128xf32>
    %39 = vector.shape_cast %38 : vector<1x64x128xf32> to vector<64x128xf32>
    %cst_39 = arith.constant dense<0.000000e+00> : vector<8x128xf32>
    %40 = tpu.matmul %37, %39, %cst_39 {dimension_numbers = #tpu.dot_dimension_numbers<[1], [0], [0], [1], [0, 0, 1, 1], [], []>} : vector<8x64xf32>, vector<64x128xf32>, vector<8x128xf32> -> vector<8x128xf32>
    %c2_40 = arith.constant 2 : index
    %c0_41 = arith.constant 0 : index
    %41 = tpu.strided_load %arg12[%c2_40, %c0_41] {strides = array<i32: 8, 1>} : memref<64x64xf32, #tpu.memory_space<vmem>>, vector<8x64xf32>
    %c3_42 = arith.constant 3 : index
    %c0_43 = arith.constant 0 : index
    %42 = tpu.strided_load %arg12[%c3_42, %c0_43] {strides = array<i32: 8, 1>} : memref<64x64xf32, #tpu.memory_space<vmem>>, vector<8x64xf32>
    %43 = arith.maximumf %41, %42 : vector<8x64xf32>
    %c1_44 = arith.constant 1 : index
    %c0_45 = arith.constant 0 : index
    %c0_46 = arith.constant 0 : index
    %44 = vector.load %arg6[%c1_44, %c0_45, %c0_46] : memref<4x64x128xf32, #tpu.memory_space<vmem>>, vector<1x64x128xf32>
    %45 = vector.shape_cast %44 : vector<1x64x128xf32> to vector<64x128xf32>
    %cst_47 = arith.constant dense<0.000000e+00> : vector<8x128xf32>
    %46 = tpu.matmul %43, %45, %cst_47 {dimension_numbers = #tpu.dot_dimension_numbers<[1], [0], [0], [1], [0, 0, 1, 1], [], []>} : vector<8x64xf32>, vector<64x128xf32>, vector<8x128xf32> -> vector<8x128xf32>
    %47 = arith.addf %40, %46 : vector<8x128xf32>
    %c4_48 = arith.constant 4 : index
    %c0_49 = arith.constant 0 : index
    %48 = tpu.strided_load %arg12[%c4_48, %c0_49] {strides = array<i32: 8, 1>} : memref<64x64xf32, #tpu.memory_space<vmem>>, vector<8x64xf32>
    %c5_50 = arith.constant 5 : index
    %c0_51 = arith.constant 0 : index
    %49 = tpu.strided_load %arg12[%c5_50, %c0_51] {strides = array<i32: 8, 1>} : memref<64x64xf32, #tpu.memory_space<vmem>>, vector<8x64xf32>
    %50 = arith.maximumf %48, %49 : vector<8x64xf32>
    %c2_52 = arith.constant 2 : index
    %c0_53 = arith.constant 0 : index
    %c0_54 = arith.constant 0 : index
    %51 = vector.load %arg6[%c2_52, %c0_53, %c0_54] : memref<4x64x128xf32, #tpu.memory_space<vmem>>, vector<1x64x128xf32>
    %52 = vector.shape_cast %51 : vector<1x64x128xf32> to vector<64x128xf32>
    %cst_55 = arith.constant dense<0.000000e+00> : vector<8x128xf32>
    %53 = tpu.matmul %50, %52, %cst_55 {dimension_numbers = #tpu.dot_dimension_numbers<[1], [0], [0], [1], [0, 0, 1, 1], [], []>} : vector<8x64xf32>, vector<64x128xf32>, vector<8x128xf32> -> vector<8x128xf32>
    %54 = arith.addf %47, %53 : vector<8x128xf32>
    %c6 = arith.constant 6 : index
    %c0_56 = arith.constant 0 : index
    %55 = tpu.strided_load %arg12[%c6, %c0_56] {strides = array<i32: 8, 1>} : memref<64x64xf32, #tpu.memory_space<vmem>>, vector<8x64xf32>
    %c7 = arith.constant 7 : index
    %c0_57 = arith.constant 0 : index
    %56 = tpu.strided_load %arg12[%c7, %c0_57] {strides = array<i32: 8, 1>} : memref<64x64xf32, #tpu.memory_space<vmem>>, vector<8x64xf32>
    %57 = arith.maximumf %55, %56 : vector<8x64xf32>
    %c3_58 = arith.constant 3 : index
    %c0_59 = arith.constant 0 : index
    %c0_60 = arith.constant 0 : index
    %58 = vector.load %arg6[%c3_58, %c0_59, %c0_60] : memref<4x64x128xf32, #tpu.memory_space<vmem>>, vector<1x64x128xf32>
    %59 = vector.shape_cast %58 : vector<1x64x128xf32> to vector<64x128xf32>
    %cst_61 = arith.constant dense<0.000000e+00> : vector<8x128xf32>
    %60 = tpu.matmul %57, %59, %cst_61 {dimension_numbers = #tpu.dot_dimension_numbers<[1], [0], [0], [1], [0, 0, 1, 1], [], []>} : vector<8x64xf32>, vector<64x128xf32>, vector<8x128xf32> -> vector<8x128xf32>
    %61 = arith.addf %54, %60 : vector<8x128xf32>
    %c0_62 = arith.constant 0 : index
    %c0_63 = arith.constant 0 : index
    %62 = vector.load %arg7[%c0_62, %c0_63] : memref<1x128xf32, #tpu.memory_space<vmem>>, vector<1x128xf32>
    %63 = vector.broadcast %62 : vector<1x128xf32> to vector<8x128xf32>
    %64 = arith.addf %61, %63 : vector<8x128xf32>
    %cst_64 = arith.constant 0.000000e+00 : f32
    %65 = vector.broadcast %cst_64 : f32 to vector<8x128xf32>
    %66 = arith.maximumf %64, %65 : vector<8x128xf32>
    %c0_65 = arith.constant 0 : index
    %c0_66 = arith.constant 0 : index
    %67 = vector.load %arg8[%c0_65, %c0_66] : memref<128x128xf32, #tpu.memory_space<vmem>>, vector<128x128xf32>
    %cst_67 = arith.constant dense<0.000000e+00> : vector<8x128xf32>
    %68 = tpu.matmul %66, %67, %cst_67 {dimension_numbers = #tpu.dot_dimension_numbers<[1], [0], [0], [1], [0, 0, 1, 1], [], []>} : vector<8x128xf32>, vector<128x128xf32>, vector<8x128xf32> -> vector<8x128xf32>
    %c0_68 = arith.constant 0 : index
    %c0_69 = arith.constant 0 : index
    %69 = vector.load %arg9[%c0_68, %c0_69] : memref<1x128xf32, #tpu.memory_space<vmem>>, vector<1x128xf32>
    %70 = vector.broadcast %69 : vector<1x128xf32> to vector<8x128xf32>
    %71 = arith.addf %68, %70 : vector<8x128xf32>
    %c0_70 = arith.constant 0 : index
    %c0_71 = arith.constant 0 : index
    %c0_72 = arith.constant 0 : index
    %72 = vector.load %arg10[%c0_70, %c0_71, %c0_72] : memref<1x8x128xf32, #tpu.memory_space<vmem>>, vector<1x8x128xf32>
    %73 = vector.shape_cast %72 : vector<1x8x128xf32> to vector<8x128xf32>
    %74 = vector.shape_cast %71 : vector<8x128xf32> to vector<1x8x128xf32>
    tpu.vector_store %arg10[%c0_70, %c0_71, %c0_72], %74 {strides = array<i32>} : memref<1x8x128xf32, #tpu.memory_space<vmem>>, vector<1x8x128xf32>,
    return
  }
  func.func @transform_0(%arg0: i32) -> (i32, i32) {
    %c0_i32 = arith.constant 0 : i32
    %c0_i32_0 = arith.constant 0 : i32
    return %arg0, %c0_i32 : i32, i32
  }
  func.func @transform_1(%arg0: i32) -> (i32, i32) {
    %c0_i32 = arith.constant 0 : i32
    %c0_i32_0 = arith.constant 0 : i32
    %c0_i32_1 = arith.constant 0 : i32
    return %c0_i32, %c0_i32_0 : i32, i32
  }
  func.func @transform_2(%arg0: i32) -> (i32, i32) {
    %c0_i32 = arith.constant 0 : i32
    %c0_i32_0 = arith.constant 0 : i32
    %c0_i32_1 = arith.constant 0 : i32
    return %c0_i32, %c0_i32_0 : i32, i32
  }
  func.func @transform_3(%arg0: i32) -> (i32, i32, i32) {
    %c0_i32 = arith.constant 0 : i32
    %c0_i32_0 = arith.constant 0 : i32
    %c0_i32_1 = arith.constant 0 : i32
    %c0_i32_2 = arith.constant 0 : i32
    return %c0_i32, %c0_i32_0, %c0_i32_1 : i32, i32, i32
  }
  func.func @transform_4(%arg0: i32) -> (i32, i32) {
    %c0_i32 = arith.constant 0 : i32
    %c0_i32_0 = arith.constant 0 : i32
    %c0_i32_1 = arith.constant 0 : i32
    return %c0_i32, %c0_i32_0 : i32, i32
  }
  func.func @transform_5(%arg0: i32) -> (i32, i32, i32) {
    %c0_i32 = arith.constant 0 : i32
    %c0_i32_0 = arith.constant 0 : i32
    %c0_i32_1 = arith.constant 0 : i32
    %c0_i32_2 = arith.constant 0 : i32
    return %c0_i32, %c0_i32_0, %c0_i32_1 : i32, i32, i32
  }
  func.func @transform_6(%arg0: i32) -> (i32, i32) {
    %c0_i32 = arith.constant 0 : i32
    %c0_i32_0 = arith.constant 0 : i32
    %c0_i32_1 = arith.constant 0 : i32
    return %c0_i32, %c0_i32_0 : i32, i32
  }
  func.func @transform_7(%arg0: i32) -> (i32, i32) {
    %c0_i32 = arith.constant 0 : i32
    %c0_i32_0 = arith.constant 0 : i32
    %c0_i32_1 = arith.constant 0 : i32
    return %c0_i32, %c0_i32_0 : i32, i32
  }
  func.func @transform_8(%arg0: i32) -> (i32, i32) {
    %c0_i32 = arith.constant 0 : i32
    %c0_i32_0 = arith.constant 0 : i32
    %c0_i32_1 = arith.constant 0 : i32
    return %c0_i32, %c0_i32_0 : i32, i32
  }
  func.func @transform_9(%arg0: i32) -> (i32, i32, i32) {
    %c0_i32 = arith.constant 0 : i32
    %c0_i32_0 = arith.constant 0 : i32
    %c0_i32_1 = arith.constant 0 : i32
    return %arg0, %c0_i32, %c0_i32_0 : i32, i32, i32
  }
}

</mosaic_0001>

<llo_original>
// kernel: cnn_forward.1
$region0: #{cnn_forward.1}
  #allocation0 [shape = 'u32[]', space=smem, size = 0x4, offset = 0x4, fixed_abs, tag = 'smem constant byte address 0x4 - core index']
  #allocation1 [shape = 'u32[72,128]{1,0:T(1,128)}', space=vmem, size = 0x9000, scoped, tag = 'internal scratch']
  #allocation2 [shape = 'f32[384,64]{1,0:T(8,128)}', space=vmem, size = 0x30000, scoped, tag = 'scratch operand']
  #allocation3 [shape = 'f32[64,64]{1,0:T(8,128)}', space=vmem, size = 0x8000, scoped, tag = 'scratch operand']
  %s0 = inlined_call_operand.vmem [shape: f32[384,1200], index: 0, kind: input, shape index: {}]
  %s1 = inlined_call_operand.vmem [shape: f32[1200,64], index: 1, kind: input, shape index: {}]
  %s2 = inlined_call_operand.vmem [shape: f32[1,64], index: 2, kind: input, shape index: {}]
  %s3 = inlined_call_operand.vmem [shape: f32[3,64,64], index: 3, kind: input, shape index: {}]
  %s4 = inlined_call_operand.vmem [shape: f32[1,64], index: 4, kind: input, shape index: {}]
  %s5 = inlined_call_operand.vmem [shape: f32[4,64,128], index: 5, kind: input, shape index: {}]
  %s6 = inlined_call_operand.vmem [shape: f32[1,128], index: 6, kind: input, shape index: {}]
  %s7 = inlined_call_operand.vmem [shape: f32[128,128], index: 7, kind: input, shape index: {}]
  %s8 = inlined_call_operand.vmem [shape: f32[1,128], index: 8, kind: input, shape index: {}]
  %s9 = inlined_call_operand.vmem [shape: f32[1,8,128], index: 9, kind: output, shape index: {}]
  %s10 = sld [smem:[#allocation0]]
  $region46: #{cnn_forward.1} parent=0
    _
  %s12 = ssub.s32 1, %s10
  %s13 = scalar_select 0, %s12, %s10
  // Predicated region
  $region2: #{cnn_forward.1} parent=0 // pred_check
    _
  $region3: #{cnn_forward.1} parent=0 // pred_check_branch
    %15 = sbr.rel (0) target = $region5
  $region4: #{cnn_forward.1} parent=0 // pred_region
    _
  $region5: #{cnn_forward.1} parent=0 // pred_fallthru
    _
  // Predicated region
  $region6: #{cnn_forward.1} parent=0 // pred_check
    _
  $region7: #{cnn_forward.1} parent=0 // pred_check_branch
    %17 = sbr.rel (0) target = $region9
  $region8: #{cnn_forward.1} parent=0 // pred_region
    _
  $region9: #{cnn_forward.1} parent=0 // pred_fallthru
    _
  // Predicated region
  $region10: #{cnn_forward.1} parent=0 // pred_check
    _
  $region11: #{cnn_forward.1} parent=0 // pred_check_branch
    %19 = sbr.rel (0) target = $region13
  $region12: #{cnn_forward.1} parent=0 // pred_region
    _
  $region13: #{cnn_forward.1} parent=0 // pred_fallthru
    _
  // Predicated region
  $region14: #{cnn_forward.1} parent=0 // pred_check
    _
  $region15: #{cnn_forward.1} parent=0 // pred_check_branch
    %21 = sbr.rel (0) target = $region17
  $region16: #{cnn_forward.1} parent=0 // pred_region
    _
  $region17: #{cnn_forward.1} parent=0 // pred_fallthru
    _
  // Predicated region
  $region18: #{cnn_forward.1} parent=0 // pred_check
    _
  $region19: #{cnn_forward.1} parent=0 // pred_check_branch
    %23 = sbr.rel (0) target = $region21
  $region20: #{cnn_forward.1} parent=0 // pred_region
    _
  $region21: #{cnn_forward.1} parent=0 // pred_fallthru
    _
  // Predicated region
  $region22: #{cnn_forward.1} parent=0 // pred_check
    _
  $region23: #{cnn_forward.1} parent=0 // pred_check_branch
    %25 = sbr.rel (0) target = $region25
  $region24: #{cnn_forward.1} parent=0 // pred_region
    _
  $region25: #{cnn_forward.1} parent=0 // pred_fallthru
    _
  // Predicated region
  $region26: #{cnn_forward.1} parent=0 // pred_check
    _
  $region27: #{cnn_forward.1} parent=0 // pred_check_branch
    %27 = sbr.rel (0) target = $region29
  $region28: #{cnn_forward.1} parent=0 // pred_region
    _
  $region29: #{cnn_forward.1} parent=0 // pred_fallthru
    _
  // Predicated region
  $region30: #{cnn_forward.1} parent=0 // pred_check
    _
  $region31: #{cnn_forward.1} parent=0 // pred_check_branch
    %29 = sbr.rel (0) target = $region33
  $region32: #{cnn_forward.1} parent=0 // pred_region
    _
  $region33: #{cnn_forward.1} parent=0 // pred_fallthru
    _
  // Predicated region
  $region34: #{cnn_forward.1} parent=0 // pred_check
    _
  $region35: #{cnn_forward.1} parent=0 // pred_check_branch
    %31 = sbr.rel (0) target = $region37
  $region36: #{cnn_forward.1} parent=0 // pred_region
    _
  $region37: #{cnn_forward.1} parent=0 // pred_fallthru
    _
  %v32 = vld [vmem:[%s0] sm:$0xff]
  %v33 = vld [vmem:[%s0 + $0x8] sm:$0xff]
  %v34 = vld [vmem:[%s0 + $0x10] sm:$0xff]
  %v35 = vld [vmem:[%s0 + $0x18] sm:$0xff]
  %v36 = vld [vmem:[%s0 + $0x20] sm:$0xff]
  %v37 = vld [vmem:[%s0 + $0x28] sm:$0xff]
  %v38 = vld [vmem:[%s0 + $0x30] sm:$0xff]
  %v39 = vld [vmem:[%s0 + $0x38] sm:$0xff]
  %v40 = vld [vmem:[%s0 + $0x40] sm:$0xff]
  %v41 = vld [vmem:[%s0 + $0x48] sm:$0xff]
  %v42 = vld [vmem:[%s0 + $0x50] sm:$0xff]
  %v43 = vld [vmem:[%s0 + $0x58] sm:$0xff]
  %v44 = vld [vmem:[%s0 + $0x60] sm:$0xff]
  %v45 = vld [vmem:[%s0 + $0x68] sm:$0xff]
  %v46 = vld [vmem:[%s0 + $0x70] sm:$0xff]
  %v47 = vld [vmem:[%s0 + $0x78] sm:$0xff]
  %v48 = vld [vmem:[%s0 + $0x80] sm:$0xff]
  %v49 = vld [vmem:[%s0 + $0x88] sm:$0xff]
  %v50 = vld [vmem:[%s0 + $0x90] sm:$0xff]
  %v51 = vld [vmem:[%s0 + $0x98] sm:$0xff]
  %v52 = vld [vmem:[%s0 + $0xa0] sm:$0xff]
  %v53 = vld [vmem:[%s0 + $0xa8] sm:$0xff]
  %v54 = vld [vmem:[%s0 + $0xb0] sm:$0xff]
  %v55 = vld [vmem:[%s0 + $0xb8] sm:$0xff]
  %v56 = vld [vmem:[%s0 + $0xc0] sm:$0xff]
  %v57 = vld [vmem:[%s0 + $0xc8] sm:$0xff]
  %v58 = vld [vmem:[%s0 + $0xd0] sm:$0xff]
  %v59 = vld [vmem:[%s0 + $0xd8] sm:$0xff]
  %v60 = vld [vmem:[%s0 + $0xe0] sm:$0xff]
  %v61 = vld [vmem:[%s0 + $0xe8] sm:$0xff]
  %v62 = vld [vmem:[%s0 + $0xf0] sm:$0xff]
  %v63 = vld [vmem:[%s0 + $0xf8] sm:$0xff]
  %v64 = vld [vmem:[%s0 + $0x100] sm:$0xff]
  %v65 = vld [vmem:[%s0 + $0x108] sm:$0xff]
  %v66 = vld [vmem:[%s0 + $0x110] sm:$0xff]
  %v67 = vld [vmem:[%s0 + $0x118] sm:$0xff]
  %v68 = vld [vmem:[%s0 + $0x120] sm:$0xff]
  %v69 = vld [vmem:[%s0 + $0x128] sm:$0xff]
  %v70 = vld [vmem:[%s0 + $0x130] sm:$0xff]
  %v71 = vld [vmem:[%s0 + $0x138] sm:$0xff]
  %v72 = vld [vmem:[%s0 + $0x140] sm:$0xff]
  %v73 = vld [vmem:[%s0 + $0x148] sm:$0xff]
  %v74 = vld [vmem:[%s0 + $0x150] sm:$0xff]
  %v75 = vld [vmem:[%s0 + $0x158] sm:$0xff]
  %v76 = vld [vmem:[%s0 + $0x160] sm:$0xff]
  %v77 = vld [vmem:[%s0 + $0x168] sm:$0xff]
  %v78 = vld [vmem:[%s0 + $0x170] sm:$0xff]
  %v79 = vld [vmem:[%s0 + $0x178] sm:$0xff]
  %v80 = vld [vmem:[%s0 + $0x180] sm:$0xff]
  %v81 = vld [vmem:[%s0 + $0x188] sm:$0xff]
  %v82 = vld [vmem:[%s0 + $0x190] sm:$0xff]
  %v83 = vld [vmem:[%s0 + $0x198] sm:$0xff]
  %v84 = vld [vmem:[%s0 + $0x1a0] sm:$0xff]
  %v85 = vld [vmem:[%s0 + $0x1a8] sm:$0xff]
  %v86 = vld [vmem:[%s0 + $0x1b0] sm:$0xff]
  %v87 = vld [vmem:[%s0 + $0x1b8] sm:$0xff]
  %v88 = vld [vmem:[%s0 + $0x1c0] sm:$0xff]
  %v89 = vld [vmem:[%s0 + $0x1c8] sm:$0xff]
  %v90 = vld [vmem:[%s0 + $0x1d0] sm:$0xff]
  %v91 = vld [vmem:[%s0 + $0x1d8] sm:$0xff]
  %v92 = vld [vmem:[%s0 + $0x1e0] sm:$0xff]
  %v93 = vld [vmem:[%s0 + $0x1e8] sm:$0xff]
  %v94 = vld [vmem:[%s0 + $0x1f0] sm:$0xff]
  %v95 = vld [vmem:[%s0 + $0x1f8] sm:$0xff]
  %v96 = vld [vmem:[%s0 + $0x200] sm:$0xff]
  %v97 = vld [vmem:[%s0 + $0x208] sm:$0xff]
  %v98 = vld [vmem:[%s0 + $0x210] sm:$0xff]
  %v99 = vld [vmem:[%s0 + $0x218] sm:$0xff]
  %v100 = vld [vmem:[%s0 + $0x220] sm:$0xff]
  %v101 = vld [vmem:[%s0 + $0x228] sm:$0xff]
  %v102 = vld [vmem:[%s0 + $0x230] sm:$0xff]
  %v103 = vld [vmem:[%s0 + $0x238] sm:$0xff]
  %v104 = vld [vmem:[%s0 + $0x240] sm:$0xff]
  %v105 = vld [vmem:[%s0 + $0x248] sm:$0xff]
  %v106 = vld [vmem:[%s0 + $0x250] sm:$0xff]
  %v107 = vld [vmem:[%s0 + $0x258] sm:$0xff]
  %v108 = vld [vmem:[%s0 + $0x260] sm:$0xff]
  %v109 = vld [vmem:[%s0 + $0x268] sm:$0xff]
  %v110 = vld [vmem:[%s0 + $0x270] sm:$0xff]
  %v111 = vld [vmem:[%s0 + $0x278] sm:$0xff]
  %v112 = vld [vmem:[%s0 + $0x280] sm:$0xff]
  %v113 = vld [vmem:[%s0 + $0x288] sm:$0xff]
  %v114 = vld [vmem:[%s0 + $0x290] sm:$0xff]
  %v115 = vld [vmem:[%s0 + $0x298] sm:$0xff]
  %v116 = vld [vmem:[%s0 + $0x2a0] sm:$0xff]
  %v117 = vld [vmem:[%s0 + $0x2a8] sm:$0xff]
  %v118 = vld [vmem:[%s0 + $0x2b0] sm:$0xff]
  %v119 = vld [vmem:[%s0 + $0x2b8] sm:$0xff]
  %v120 = vld [vmem:[%s0 + $0x2c0] sm:$0xff]
  %v121 = vld [vmem:[%s0 + $0x2c8] sm:$0xff]
  %v122 = vld [vmem:[%s0 + $0x2d0] sm:$0xff]
  %v123 = vld [vmem:[%s0 + $0x2d8] sm:$0xff]
  %v124 = vld [vmem:[%s0 + $0x2e0] sm:$0xff]
  %v125 = vld [vmem:[%s0 + $0x2e8] sm:$0xff]
  %v126 = vld [vmem:[%s0 + $0x2f0] sm:$0xff]
  %v127 = vld [vmem:[%s0 + $0x2f8] sm:$0xff]
  %v128 = vld [vmem:[%s0 + $0x300] sm:$0xff]
  %v129 = vld [vmem:[%s0 + $0x308] sm:$0xff]
  %v130 = vld [vmem:[%s0 + $0x310] sm:$0xff]
  %v131 = vld [vmem:[%s0 + $0x318] sm:$0xff]
  %v132 = vld [vmem:[%s0 + $0x320] sm:$0xff]
  %v133 = vld [vmem:[%s0 + $0x328] sm:$0xff]
  %v134 = vld [vmem:[%s0 + $0x330] sm:$0xff]
  %v135 = vld [vmem:[%s0 + $0x338] sm:$0xff]
  %v136 = vld [vmem:[%s0 + $0x340] sm:$0xff]
  %v137 = vld [vmem:[%s0 + $0x348] sm:$0xff]
  %v138 = vld [vmem:[%s0 + $0x350] sm:$0xff]
  %v139 = vld [vmem:[%s0 + $0x358] sm:$0xff]
  %v140 = vld [vmem:[%s0 + $0x360] sm:$0xff]
  %v141 = vld [vmem:[%s0 + $0x368] sm:$0xff]
  %v142 = vld [vmem:[%s0 + $0x370] sm:$0xff]
  %v143 = vld [vmem:[%s0 + $0x378] sm:$0xff]
  %v144 = vld [vmem:[%s0 + $0x380] sm:$0xff]
  %v145 = vld [vmem:[%s0 + $0x388] sm:$0xff]
  %v146 = vld [vmem:[%s0 + $0x390] sm:$0xff]
  %v147 = vld [vmem:[%s0 + $0x398] sm:$0xff]
  %v148 = vld [vmem:[%s0 + $0x3a0] sm:$0xff]
  %v149 = vld [vmem:[%s0 + $0x3a8] sm:$0xff]
  %v150 = vld [vmem:[%s0 + $0x3b0] sm:$0xff]
  %v151 = vld [vmem:[%s0 + $0x3b8] sm:$0xff]
  %v152 = vld [vmem:[%s0 + $0x3c0] sm:$0xff]
  %v153 = vld [vmem:[%s0 + $0x3c8] sm:$0xff]
  %v154 = vld [vmem:[%s0 + $0x3d0] sm:$0xff]
  %v155 = vld [vmem:[%s0 + $0x3d8] sm:$0xff]
  %v156 = vld [vmem:[%s0 + $0x3e0] sm:$0xff]
  %v157 = vld [vmem:[%s0 + $0x3e8] sm:$0xff]
  %v158 = vld [vmem:[%s0 + $0x3f0] sm:$0xff]
  %v159 = vld [vmem:[%s0 + $0x3f8] sm:$0xff]
  %v160 = vld [vmem:[%s0 + $0x400] sm:$0xff]
  %v161 = vld [vmem:[%s0 + $0x408] sm:$0xff]
  %v162 = vld [vmem:[%s0 + $0x410] sm:$0xff]
  %v163 = vld [vmem:[%s0 + $0x418] sm:$0xff]
  %v164 = vld [vmem:[%s0 + $0x420] sm:$0xff]
  %v165 = vld [vmem:[%s0 + $0x428] sm:$0xff]
  %v166 = vld [vmem:[%s0 + $0x430] sm:$0xff]
  %v167 = vld [vmem:[%s0 + $0x438] sm:$0xff]
  %v168 = vld [vmem:[%s0 + $0x440] sm:$0xff]
  %v169 = vld [vmem:[%s0 + $0x448] sm:$0xff]
  %v170 = vld [vmem:[%s0 + $0x450] sm:$0xff]
  %v171 = vld [vmem:[%s0 + $0x458] sm:$0xff]
  %v172 = vld [vmem:[%s0 + $0x460] sm:$0xff]
  %v173 = vld [vmem:[%s0 + $0x468] sm:$0xff]
  %v174 = vld [vmem:[%s0 + $0x470] sm:$0xff]
  %v175 = vld [vmem:[%s0 + $0x478] sm:$0xff]
  %v176 = vld [vmem:[%s0 + $0x480] sm:$0xff]
  %v177 = vld [vmem:[%s0 + $0x488] sm:$0xff]
  %v178 = vld [vmem:[%s0 + $0x490] sm:$0xff]
  %v179 = vld [vmem:[%s0 + $0x498] sm:$0xff]
  %v180 = vld [vmem:[%s0 + $0x4a0] sm:$0xff]
  %v181 = vld [vmem:[%s0 + $0x4a8] sm:$0xff]
  %v182 = vld [vmem:[%s0 + $0x4b0] sm:$0xff]
  %v183 = vld [vmem:[%s0 + $0x4b8] sm:$0xff]
  %v184 = vld [vmem:[%s0 + $0x4c0] sm:$0xff]
  %v185 = vld [vmem:[%s0 + $0x4c8] sm:$0xff]
  %v186 = vld [vmem:[%s0 + $0x4d0] sm:$0xff]
  %v187 = vld [vmem:[%s0 + $0x4d8] sm:$0xff]
  %v188 = vld [vmem:[%s0 + $0x4e0] sm:$0xff]
  %v189 = vld [vmem:[%s0 + $0x4e8] sm:$0xff]
  %v190 = vld [vmem:[%s0 + $0x4f0] sm:$0xff]
  %v191 = vld [vmem:[%s0 + $0x4f8] sm:$0xff]
  %v192 = vld [vmem:[%s0 + $0x500] sm:$0xff]
  %v193 = vld [vmem:[%s0 + $0x508] sm:$0xff]
  %v194 = vld [vmem:[%s0 + $0x510] sm:$0xff]
  %v195 = vld [vmem:[%s0 + $0x518] sm:$0xff]
  %v196 = vld [vmem:[%s0 + $0x520] sm:$0xff]
  %v197 = vld [vmem:[%s0 + $0x528] sm:$0xff]
  %v198 = vld [vmem:[%s0 + $0x530] sm:$0xff]
  %v199 = vld [vmem:[%s0 + $0x538] sm:$0xff]
  %v200 = vld [vmem:[%s0 + $0x540] sm:$0xff]
  %v201 = vld [vmem:[%s0 + $0x548] sm:$0xff]
  %v202 = vld [vmem:[%s0 + $0x550] sm:$0xff]
  %v203 = vld [vmem:[%s0 + $0x558] sm:$0xff]
  %v204 = vld [vmem:[%s0 + $0x560] sm:$0xff]
  %v205 = vld [vmem:[%s0 + $0x568] sm:$0xff]
  %v206 = vld [vmem:[%s0 + $0x570] sm:$0xff]
  %v207 = vld [vmem:[%s0 + $0x578] sm:$0xff]
  %v208 = vld [vmem:[%s0 + $0x580] sm:$0xff]
  %v209 = vld [vmem:[%s0 + $0x588] sm:$0xff]
  %v210 = vld [vmem:[%s0 + $0x590] sm:$0xff]
  %v211 = vld [vmem:[%s0 + $0x598] sm:$0xff]
  %v212 = vld [vmem:[%s0 + $0x5a0] sm:$0xff]
  %v213 = vld [vmem:[%s0 + $0x5a8] sm:$0xff]
  %v214 = vld [vmem:[%s0 + $0x5b0] sm:$0xff]
  %v215 = vld [vmem:[%s0 + $0x5b8] sm:$0xff]
  %v216 = vld [vmem:[%s0 + $0x5c0] sm:$0xff]
  %v217 = vld [vmem:[%s0 + $0x5c8] sm:$0xff]
  %v218 = vld [vmem:[%s0 + $0x5d0] sm:$0xff]
  %v219 = vld [vmem:[%s0 + $0x5d8] sm:$0xff]
  %v220 = vld [vmem:[%s0 + $0x5e0] sm:$0xff]
  %v221 = vld [vmem:[%s0 + $0x5e8] sm:$0xff]
  %v222 = vld [vmem:[%s0 + $0x5f0] sm:$0xff]
  %v223 = vld [vmem:[%s0 + $0x5f8] sm:$0xff]
  %v224 = vld [vmem:[%s0 + $0x600] sm:$0xff]
  %v225 = vld [vmem:[%s0 + $0x608] sm:$0xff]
  %v226 = vld [vmem:[%s0 + $0x610] sm:$0xff]
  %v227 = vld [vmem:[%s0 + $0x618] sm:$0xff]
  %v228 = vld [vmem:[%s0 + $0x620] sm:$0xff]
  %v229 = vld [vmem:[%s0 + $0x628] sm:$0xff]
  %v230 = vld [vmem:[%s0 + $0x630] sm:$0xff]
  %v231 = vld [vmem:[%s0 + $0x638] sm:$0xff]
  %v232 = vld [vmem:[%s0 + $0x640] sm:$0xff]
  %v233 = vld [vmem:[%s0 + $0x648] sm:$0xff]
  %v234 = vld [vmem:[%s0 + $0x650] sm:$0xff]
  %v235 = vld [vmem:[%s0 + $0x658] sm:$0xff]
  %v236 = vld [vmem:[%s0 + $0x660] sm:$0xff]
  %v237 = vld [vmem:[%s0 + $0x668] sm:$0xff]
  %v238 = vld [vmem:[%s0 + $0x670] sm:$0xff]
  %v239 = vld [vmem:[%s0 + $0x678] sm:$0xff]
  %v240 = vld [vmem:[%s0 + $0x680] sm:$0xff]
  %v241 = vld [vmem:[%s0 + $0x688] sm:$0xff]
  %v242 = vld [vmem:[%s0 + $0x690] sm:$0xff]
  %v243 = vld [vmem:[%s0 + $0x698] sm:$0xff]
  %v244 = vld [vmem:[%s0 + $0x6a0] sm:$0xff]
  %v245 = vld [vmem:[%s0 + $0x6a8] sm:$0xff]
  %v246 = vld [vmem:[%s0 + $0x6b0] sm:$0xff]
  %v247 = vld [vmem:[%s0 + $0x6b8] sm:$0xff]
  %v248 = vld [vmem:[%s0 + $0x6c0] sm:$0xff]
  %v249 = vld [vmem:[%s0 + $0x6c8] sm:$0xff]
  %v250 = vld [vmem:[%s0 + $0x6d0] sm:$0xff]
  %v251 = vld [vmem:[%s0 + $0x6d8] sm:$0xff]
  %v252 = vld [vmem:[%s0 + $0x6e0] sm:$0xff]
  %v253 = vld [vmem:[%s0 + $0x6e8] sm:$0xff]
  %v254 = vld [vmem:[%s0 + $0x6f0] sm:$0xff]
  %v255 = vld [vmem:[%s0 + $0x6f8] sm:$0xff]
  %v256 = vld [vmem:[%s0 + $0x700] sm:$0xff]
  %v257 = vld [vmem:[%s0 + $0x708] sm:$0xff]
  %v258 = vld [vmem:[%s0 + $0x710] sm:$0xff]
  %v259 = vld [vmem:[%s0 + $0x718] sm:$0xff]
  %v260 = vld [vmem:[%s0 + $0x720] sm:$0xff]
  %v261 = vld [vmem:[%s0 + $0x728] sm:$0xff]
  %v262 = vld [vmem:[%s0 + $0x730] sm:$0xff]
  %v263 = vld [vmem:[%s0 + $0x738] sm:$0xff]
  %v264 = vld [vmem:[%s0 + $0x740] sm:$0xff]
  %v265 = vld [vmem:[%s0 + $0x748] sm:$0xff]
  %v266 = vld [vmem:[%s0 + $0x750] sm:$0xff]
  %v267 = vld [vmem:[%s0 + $0x758] sm:$0xff]
  %v268 = vld [vmem:[%s0 + $0x760] sm:$0xff]
  %v269 = vld [vmem:[%s0 + $0x768] sm:$0xff]
  %v270 = vld [vmem:[%s0 + $0x770] sm:$0xff]
  %v271 = vld [vmem:[%s0 + $0x778] sm:$0xff]
  %v272 = vld [vmem:[%s0 + $0x780] sm:$0xff]
  %v273 = vld [vmem:[%s0 + $0x788] sm:$0xff]
  %v274 = vld [vmem:[%s0 + $0x790] sm:$0xff]
  %v275 = vld [vmem:[%s0 + $0x798] sm:$0xff]
  %v276 = vld [vmem:[%s0 + $0x7a0] sm:$0xff]
  %v277 = vld [vmem:[%s0 + $0x7a8] sm:$0xff]
  %v278 = vld [vmem:[%s0 + $0x7b0] sm:$0xff]
  %v279 = vld [vmem:[%s0 + $0x7b8] sm:$0xff]
  %v280 = vld [vmem:[%s0 + $0x7c0] sm:$0xff]
  %v281 = vld [vmem:[%s0 + $0x7c8] sm:$0xff]
  %v282 = vld [vmem:[%s0 + $0x7d0] sm:$0xff]
  %v283 = vld [vmem:[%s0 + $0x7d8] sm:$0xff]
  %v284 = vld [vmem:[%s0 + $0x7e0] sm:$0xff]
  %v285 = vld [vmem:[%s0 + $0x7e8] sm:$0xff]
  %v286 = vld [vmem:[%s0 + $0x7f0] sm:$0xff]
  %v287 = vld [vmem:[%s0 + $0x7f8] sm:$0xff]
  %v288 = vld [vmem:[%s0 + $0x800] sm:$0xff]
  %v289 = vld [vmem:[%s0 + $0x808] sm:$0xff]
  %v290 = vld [vmem:[%s0 + $0x810] sm:$0xff]
  %v291 = vld [vmem:[%s0 + $0x818] sm:$0xff]
  %v292 = vld [vmem:[%s0 + $0x820] sm:$0xff]
  %v293 = vld [vmem:[%s0 + $0x828] sm:$0xff]
  %v294 = vld [vmem:[%s0 + $0x830] sm:$0xff]
  %v295 = vld [vmem:[%s0 + $0x838] sm:$0xff]
  %v296 = vld [vmem:[%s0 + $0x840] sm:$0xff]
  %v297 = vld [vmem:[%s0 + $0x848] sm:$0xff]
  %v298 = vld [vmem:[%s0 + $0x850] sm:$0xff]
  %v299 = vld [vmem:[%s0 + $0x858] sm:$0xff]
  %v300 = vld [vmem:[%s0 + $0x860] sm:$0xff]
  %v301 = vld [vmem:[%s0 + $0x868] sm:$0xff]
  %v302 = vld [vmem:[%s0 + $0x870] sm:$0xff]
  %v303 = vld [vmem:[%s0 + $0x878] sm:$0xff]
  %v304 = vld [vmem:[%s0 + $0x880] sm:$0xff]
  %v305 = vld [vmem:[%s0 + $0x888] sm:$0xff]
  %v306 = vld [vmem:[%s0 + $0x890] sm:$0xff]
  %v307 = vld [vmem:[%s0 + $0x898] sm:$0xff]
  %v308 = vld [vmem:[%s0 + $0x8a0] sm:$0xff]
  %v309 = vld [vmem:[%s0 + $0x8a8] sm:$0xff]
  %v310 = vld [vmem:[%s0 + $0x8b0] sm:$0xff]
  %v311 = vld [vmem:[%s0 + $0x8b8] sm:$0xff]
  %v312 = vld [vmem:[%s0 + $0x8c0] sm:$0xff]
  %v313 = vld [vmem:[%s0 + $0x8c8] sm:$0xff]
  %v314 = vld [vmem:[%s0 + $0x8d0] sm:$0xff]
  %v315 = vld [vmem:[%s0 + $0x8d8] sm:$0xff]
  %v316 = vld [vmem:[%s0 + $0x8e0] sm:$0xff]
  %v317 = vld [vmem:[%s0 + $0x8e8] sm:$0xff]
  %v318 = vld [vmem:[%s0 + $0x8f0] sm:$0xff]
  %v319 = vld [vmem:[%s0 + $0x8f8] sm:$0xff]
  %v320 = vld [vmem:[%s0 + $0x900] sm:$0xff]
  %v321 = vld [vmem:[%s0 + $0x908] sm:$0xff]
  %v322 = vld [vmem:[%s0 + $0x910] sm:$0xff]
  %v323 = vld [vmem:[%s0 + $0x918] sm:$0xff]
  %v324 = vld [vmem:[%s0 + $0x920] sm:$0xff]
  %v325 = vld [vmem:[%s0 + $0x928] sm:$0xff]
  %v326 = vld [vmem:[%s0 + $0x930] sm:$0xff]
  %v327 = vld [vmem:[%s0 + $0x938] sm:$0xff]
  %v328 = vld [vmem:[%s0 + $0x940] sm:$0xff]
  %v329 = vld [vmem:[%s0 + $0x948] sm:$0xff]
  %v330 = vld [vmem:[%s0 + $0x950] sm:$0xff]
  %v331 = vld [vmem:[%s0 + $0x958] sm:$0xff]
  %v332 = vld [vmem:[%s0 + $0x960] sm:$0xff]
  %v333 = vld [vmem:[%s0 + $0x968] sm:$0xff]
  %v334 = vld [vmem:[%s0 + $0x970] sm:$0xff]
  %v335 = vld [vmem:[%s0 + $0x978] sm:$0xff]
  %v336 = vld [vmem:[%s0 + $0x980] sm:$0xff]
  %v337 = vld [vmem:[%s0 + $0x988] sm:$0xff]
  %v338 = vld [vmem:[%s0 + $0x990] sm:$0xff]
  %v339 = vld [vmem:[%s0 + $0x998] sm:$0xff]
  %v340 = vld [vmem:[%s0 + $0x9a0] sm:$0xff]
  %v341 = vld [vmem:[%s0 + $0x9a8] sm:$0xff]
  %v342 = vld [vmem:[%s0 + $0x9b0] sm:$0xff]
  %v343 = vld [vmem:[%s0 + $0x9b8] sm:$0xff]
  %v344 = vld [vmem:[%s0 + $0x9c0] sm:$0xff]
  %v345 = vld [vmem:[%s0 + $0x9c8] sm:$0xff]
  %v346 = vld [vmem:[%s0 + $0x9d0] sm:$0xff]
  %v347 = vld [vmem:[%s0 + $0x9d8] sm:$0xff]
  %v348 = vld [vmem:[%s0 + $0x9e0] sm:$0xff]
  %v349 = vld [vmem:[%s0 + $0x9e8] sm:$0xff]
  %v350 = vld [vmem:[%s0 + $0x9f0] sm:$0xff]
  %v351 = vld [vmem:[%s0 + $0x9f8] sm:$0xff]
  %v352 = vld [vmem:[%s0 + $0xa00] sm:$0xff]
  %v353 = vld [vmem:[%s0 + $0xa08] sm:$0xff]
  %v354 = vld [vmem:[%s0 + $0xa10] sm:$0xff]
  %v355 = vld [vmem:[%s0 + $0xa18] sm:$0xff]
  %v356 = vld [vmem:[%s0 + $0xa20] sm:$0xff]
  %v357 = vld [vmem:[%s0 + $0xa28] sm:$0xff]
  %v358 = vld [vmem:[%s0 + $0xa30] sm:$0xff]
  %v359 = vld [vmem:[%s0 + $0xa38] sm:$0xff]
  %v360 = vld [vmem:[%s0 + $0xa40] sm:$0xff]
  %v361 = vld [vmem:[%s0 + $0xa48] sm:$0xff]
  %v362 = vld [vmem:[%s0 + $0xa50] sm:$0xff]
  %v363 = vld [vmem:[%s0 + $0xa58] sm:$0xff]
  %v364 = vld [vmem:[%s0 + $0xa60] sm:$0xff]
  %v365 = vld [vmem:[%s0 + $0xa68] sm:$0xff]
  %v366 = vld [vmem:[%s0 + $0xa70] sm:$0xff]
  %v367 = vld [vmem:[%s0 + $0xa78] sm:$0xff]
  %v368 = vld [vmem:[%s0 + $0xa80] sm:$0xff]
  %v369 = vld [vmem:[%s0 + $0xa88] sm:$0xff]
  %v370 = vld [vmem:[%s0 + $0xa90] sm:$0xff]
  %v371 = vld [vmem:[%s0 + $0xa98] sm:$0xff]
  %v372 = vld [vmem:[%s0 + $0xaa0] sm:$0xff]
  %v373 = vld [vmem:[%s0 + $0xaa8] sm:$0xff]
  %v374 = vld [vmem:[%s0 + $0xab0] sm:$0xff]
  %v375 = vld [vmem:[%s0 + $0xab8] sm:$0xff]
  %v376 = vld [vmem:[%s0 + $0xac0] sm:$0xff]
  %v377 = vld [vmem:[%s0 + $0xac8] sm:$0xff]
  %v378 = vld [vmem:[%s0 + $0xad0] sm:$0xff]
  %v379 = vld [vmem:[%s0 + $0xad8] sm:$0xff]
  %v380 = vld [vmem:[%s0 + $0xae0] sm:$0xff]
  %v381 = vld [vmem:[%s0 + $0xae8] sm:$0xff]
  %v382 = vld [vmem:[%s0 + $0xaf0] sm:$0xff]
  %v383 = vld [vmem:[%s0 + $0xaf8] sm:$0xff]
  %v384 = vld [vmem:[%s0 + $0xb00] sm:$0xff]
  %v385 = vld [vmem:[%s0 + $0xb08] sm:$0xff]
  %v386 = vld [vmem:[%s0 + $0xb10] sm:$0xff]
  %v387 = vld [vmem:[%s0 + $0xb18] sm:$0xff]
  %v388 = vld [vmem:[%s0 + $0xb20] sm:$0xff]
  %v389 = vld [vmem:[%s0 + $0xb28] sm:$0xff]
  %v390 = vld [vmem:[%s0 + $0xb30] sm:$0xff]
  %v391 = vld [vmem:[%s0 + $0xb38] sm:$0xff]
  %v392 = vld [vmem:[%s0 + $0xb40] sm:$0xff]
  %v393 = vld [vmem:[%s0 + $0xb48] sm:$0xff]
  %v394 = vld [vmem:[%s0 + $0xb50] sm:$0xff]
  %v395 = vld [vmem:[%s0 + $0xb58] sm:$0xff]
  %v396 = vld [vmem:[%s0 + $0xb60] sm:$0xff]
  %v397 = vld [vmem:[%s0 + $0xb68] sm:$0xff]
  %v398 = vld [vmem:[%s0 + $0xb70] sm:$0xff]
  %v399 = vld [vmem:[%s0 + $0xb78] sm:$0xff]
  %v400 = vld [vmem:[%s0 + $0xb80] sm:$0xff]
  %v401 = vld [vmem:[%s0 + $0xb88] sm:$0xff]
  %v402 = vld [vmem:[%s0 + $0xb90] sm:$0xff]
  %v403 = vld [vmem:[%s0 + $0xb98] sm:$0xff]
  %v404 = vld [vmem:[%s0 + $0xba0] sm:$0xff]
  %v405 = vld [vmem:[%s0 + $0xba8] sm:$0xff]
  %v406 = vld [vmem:[%s0 + $0xbb0] sm:$0xff]
  %v407 = vld [vmem:[%s0 + $0xbb8] sm:$0xff]
  %v408 = vld [vmem:[%s0 + $0xbc0] sm:$0xff]
  %v409 = vld [vmem:[%s0 + $0xbc8] sm:$0xff]
  %v410 = vld [vmem:[%s0 + $0xbd0] sm:$0xff]
  %v411 = vld [vmem:[%s0 + $0xbd8] sm:$0xff]
  %v412 = vld [vmem:[%s0 + $0xbe0] sm:$0xff]
  %v413 = vld [vmem:[%s0 + $0xbe8] sm:$0xff]
  %v414 = vld [vmem:[%s0 + $0xbf0] sm:$0xff]
  %v415 = vld [vmem:[%s0 + $0xbf8] sm:$0xff]
  %v416 = vld [vmem:[%s0 + $0xc00] sm:$0xff]
  %v417 = vld [vmem:[%s0 + $0xc08] sm:$0xff]
  %v418 = vld [vmem:[%s0 + $0xc10] sm:$0xff]
  %v419 = vld [vmem:[%s0 + $0xc18] sm:$0xff]
  %v420 = vld [vmem:[%s0 + $0xc20] sm:$0xff]
  %v421 = vld [vmem:[%s0 + $0xc28] sm:$0xff]
  %v422 = vld [vmem:[%s0 + $0xc30] sm:$0xff]
  %v423 = vld [vmem:[%s0 + $0xc38] sm:$0xff]
  %v424 = vld [vmem:[%s0 + $0xc40] sm:$0xff]
  %v425 = vld [vmem:[%s0 + $0xc48] sm:$0xff]
  %v426 = vld [vmem:[%s0 + $0xc50] sm:$0xff]
  %v427 = vld [vmem:[%s0 + $0xc58] sm:$0xff]
  %v428 = vld [vmem:[%s0 + $0xc60] sm:$0xff]
  %v429 = vld [vmem:[%s0 + $0xc68] sm:$0xff]
  %v430 = vld [vmem:[%s0 + $0xc70] sm:$0xff]
  %v431 = vld [vmem:[%s0 + $0xc78] sm:$0xff]
  %v432 = vld [vmem:[%s0 + $0xc80] sm:$0xff]
  %v433 = vld [vmem:[%s0 + $0xc88] sm:$0xff]
  %v434 = vld [vmem:[%s0 + $0xc90] sm:$0xff]
  %v435 = vld [vmem:[%s0 + $0xc98] sm:$0xff]
  %v436 = vld [vmem:[%s0 + $0xca0] sm:$0xff]
  %v437 = vld [vmem:[%s0 + $0xca8] sm:$0xff]
  %v438 = vld [vmem:[%s0 + $0xcb0] sm:$0xff]
  %v439 = vld [vmem:[%s0 + $0xcb8] sm:$0xff]
  %v440 = vld [vmem:[%s0 + $0xcc0] sm:$0xff]
  %v441 = vld [vmem:[%s0 + $0xcc8] sm:$0xff]
  %v442 = vld [vmem:[%s0 + $0xcd0] sm:$0xff]
  %v443 = vld [vmem:[%s0 + $0xcd8] sm:$0xff]
  %v444 = vld [vmem:[%s0 + $0xce0] sm:$0xff]
  %v445 = vld [vmem:[%s0 + $0xce8] sm:$0xff]
  %v446 = vld [vmem:[%s0 + $0xcf0] sm:$0xff]
  %v447 = vld [vmem:[%s0 + $0xcf8] sm:$0xff]
  %v448 = vld [vmem:[%s0 + $0xd00] sm:$0xff]
  %v449 = vld [vmem:[%s0 + $0xd08] sm:$0xff]
  %v450 = vld [vmem:[%s0 + $0xd10] sm:$0xff]
  %v451 = vld [vmem:[%s0 + $0xd18] sm:$0xff]
  %v452 = vld [vmem:[%s0 + $0xd20] sm:$0xff]
  %v453 = vld [vmem:[%s0 + $0xd28] sm:$0xff]
  %v454 = vld [vmem:[%s0 + $0xd30] sm:$0xff]
  %v455 = vld [vmem:[%s0 + $0xd38] sm:$0xff]
  %v456 = vld [vmem:[%s0 + $0xd40] sm:$0xff]
  %v457 = vld [vmem:[%s0 + $0xd48] sm:$0xff]
  %v458 = vld [vmem:[%s0 + $0xd50] sm:$0xff]
  %v459 = vld [vmem:[%s0 + $0xd58] sm:$0xff]
  %v460 = vld [vmem:[%s0 + $0xd60] sm:$0xff]
  %v461 = vld [vmem:[%s0 + $0xd68] sm:$0xff]
  %v462 = vld [vmem:[%s0 + $0xd70] sm:$0xff]
  %v463 = vld [vmem:[%s0 + $0xd78] sm:$0xff]
  %v464 = vld [vmem:[%s0 + $0xd80] sm:$0xff]
  %v465 = vld [vmem:[%s0 + $0xd88] sm:$0xff]
  %v466 = vld [vmem:[%s0 + $0xd90] sm:$0xff]
  %v467 = vld [vmem:[%s0 + $0xd98] sm:$0xff]
  %v468 = vld [vmem:[%s0 + $0xda0] sm:$0xff]
  %v469 = vld [vmem:[%s0 + $0xda8] sm:$0xff]
  %v470 = vld [vmem:[%s0 + $0xdb0] sm:$0xff]
  %v471 = vld [vmem:[%s0 + $0xdb8] sm:$0xff]
  %v472 = vld [vmem:[%s0 + $0xdc0] sm:$0xff]
  %v473 = vld [vmem:[%s0 + $0xdc8] sm:$0xff]
  %v474 = vld [vmem:[%s0 + $0xdd0] sm:$0xff]
  %v475 = vld [vmem:[%s0 + $0xdd8] sm:$0xff]
  %v476 = vld [vmem:[%s0 + $0xde0] sm:$0xff]
  %v477 = vld [vmem:[%s0 + $0xde8] sm:$0xff]
  %v478 = vld [vmem:[%s0 + $0xdf0] sm:$0xff]
  %v479 = vld [vmem:[%s0 + $0xdf8] sm:$0xff]
  %v480 = vld [vmem:[%s0 + $0xe00] sm:$0xff]
  %v481 = vld [vmem:[%s0 + $0xe08] sm:$0xff]
  %v482 = vld [vmem:[%s0 + $0xe10] sm:$0xff]
  %v483 = vld [vmem:[%s0 + $0xe18] sm:$0xff]
  %v484 = vld [vmem:[%s0 + $0xe20] sm:$0xff]
  %v485 = vld [vmem:[%s0 + $0xe28] sm:$0xff]
  %v486 = vld [vmem:[%s0 + $0xe30] sm:$0xff]
  %v487 = vld [vmem:[%s0 + $0xe38] sm:$0xff]
  %v488 = vld [vmem:[%s0 + $0xe40] sm:$0xff]
  %v489 = vld [vmem:[%s0 + $0xe48] sm:$0xff]
  %v490 = vld [vmem:[%s0 + $0xe50] sm:$0xff]
  %v491 = vld [vmem:[%s0 + $0xe58] sm:$0xff]
  %v492 = vld [vmem:[%s0 + $0xe60] sm:$0xff]
  %v493 = vld [vmem:[%s0 + $0xe68] sm:$0xff]
  %v494 = vld [vmem:[%s0 + $0xe70] sm:$0xff]
  %v495 = vld [vmem:[%s0 + $0xe78] sm:$0xff]
  %v496 = vld [vmem:[%s0 + $0xe80] sm:$0xff]
  %v497 = vld [vmem:[%s0 + $0xe88] sm:$0xff]
  %v498 = vld [vmem:[%s0 + $0xe90] sm:$0xff]
  %v499 = vld [vmem:[%s0 + $0xe98] sm:$0xff]
  %v500 = vld [vmem:[%s0 + $0xea0] sm:$0xff]
  %v501 = vld [vmem:[%s0 + $0xea8] sm:$0xff]
  %v502 = vld [vmem:[%s0 + $0xeb0] sm:$0xff]
  %v503 = vld [vmem:[%s0 + $0xeb8] sm:$0xff]
  %v504 = vld [vmem:[%s0 + $0xec0] sm:$0xff]
  %v505 = vld [vmem:[%s0 + $0xec8] sm:$0xff]
  %v506 = vld [vmem:[%s0 + $0xed0] sm:$0xff]
  %v507 = vld [vmem:[%s0 + $0xed8] sm:$0xff]
  %v508 = vld [vmem:[%s0 + $0xee0] sm:$0xff]
  %v509 = vld [vmem:[%s0 + $0xee8] sm:$0xff]
  %v510 = vld [vmem:[%s0 + $0xef0] sm:$0xff]
  %v511 = vld [vmem:[%s0 + $0xef8] sm:$0xff]
  %v512 = vld [vmem:[%s1] sm:$0xff]
  %v513 = vld [vmem:[%s1 + $0x8] sm:$0xff]
  %v514 = vld [vmem:[%s1 + $0x10] sm:$0xff]
  %v515 = vld [vmem:[%s1 + $0x18] sm:$0xff]
  %v516 = vld [vmem:[%s1 + $0x20] sm:$0xff]
  %v517 = vld [vmem:[%s1 + $0x28] sm:$0xff]
  %v518 = vld [vmem:[%s1 + $0x30] sm:$0xff]
  %v519 = vld [vmem:[%s1 + $0x38] sm:$0xff]
  %v520 = vld [vmem:[%s1 + $0x40] sm:$0xff]
  %v521 = vld [vmem:[%s1 + $0x48] sm:$0xff]
  %v522 = vld [vmem:[%s1 + $0x50] sm:$0xff]
  %v523 = vld [vmem:[%s1 + $0x58] sm:$0xff]
  %v524 = vld [vmem:[%s1 + $0x60] sm:$0xff]
  %v525 = vld [vmem:[%s1 + $0x68] sm:$0xff]
  %v526 = vld [vmem:[%s1 + $0x70] sm:$0xff]
  %v527 = vld [vmem:[%s1 + $0x78] sm:$0xff]
  %v528 = vld [vmem:[%s1 + $0x80] sm:$0xff]
  %v529 = vld [vmem:[%s1 + $0x88] sm:$0xff]
  %v530 = vld [vmem:[%s1 + $0x90] sm:$0xff]
  %v531 = vld [vmem:[%s1 + $0x98] sm:$0xff]
  %v532 = vld [vmem:[%s1 + $0xa0] sm:$0xff]
  %v533 = vld [vmem:[%s1 + $0xa8] sm:$0xff]
  %v534 = vld [vmem:[%s1 + $0xb0] sm:$0xff]
  %v535 = vld [vmem:[%s1 + $0xb8] sm:$0xff]
  %v536 = vld [vmem:[%s1 + $0xc0] sm:$0xff]
  %v537 = vld [vmem:[%s1 + $0xc8] sm:$0xff]
  %v538 = vld [vmem:[%s1 + $0xd0] sm:$0xff]
  %v539 = vld [vmem:[%s1 + $0xd8] sm:$0xff]
  %v540 = vld [vmem:[%s1 + $0xe0] sm:$0xff]
  %v541 = vld [vmem:[%s1 + $0xe8] sm:$0xff]
  %v542 = vld [vmem:[%s1 + $0xf0] sm:$0xff]
  %v543 = vld [vmem:[%s1 + $0xf8] sm:$0xff]
  %v544 = vld [vmem:[%s1 + $0x100] sm:$0xff]
  %v545 = vld [vmem:[%s1 + $0x108] sm:$0xff]
  %v546 = vld [vmem:[%s1 + $0x110] sm:$0xff]
  %v547 = vld [vmem:[%s1 + $0x118] sm:$0xff]
  %v548 = vld [vmem:[%s1 + $0x120] sm:$0xff]
  %v549 = vld [vmem:[%s1 + $0x128] sm:$0xff]
  %v550 = vld [vmem:[%s1 + $0x130] sm:$0xff]
  %v551 = vld [vmem:[%s1 + $0x138] sm:$0xff]
  %v552 = vld [vmem:[%s1 + $0x140] sm:$0xff]
  %v553 = vld [vmem:[%s1 + $0x148] sm:$0xff]
  %v554 = vld [vmem:[%s1 + $0x150] sm:$0xff]
  %v555 = vld [vmem:[%s1 + $0x158] sm:$0xff]
  %v556 = vld [vmem:[%s1 + $0x160] sm:$0xff]
  %v557 = vld [vmem:[%s1 + $0x168] sm:$0xff]
  %v558 = vld [vmem:[%s1 + $0x170] sm:$0xff]
  %v559 = vld [vmem:[%s1 + $0x178] sm:$0xff]
  %v560 = vld [vmem:[%s1 + $0x180] sm:$0xff]
  %v561 = vld [vmem:[%s1 + $0x188] sm:$0xff]
  %v562 = vld [vmem:[%s1 + $0x190] sm:$0xff]
  %v563 = vld [vmem:[%s1 + $0x198] sm:$0xff]
  %v564 = vld [vmem:[%s1 + $0x1a0] sm:$0xff]
  %v565 = vld [vmem:[%s1 + $0x1a8] sm:$0xff]
  %v566 = vld [vmem:[%s1 + $0x1b0] sm:$0xff]
  %v567 = vld [vmem:[%s1 + $0x1b8] sm:$0xff]
  %v568 = vld [vmem:[%s1 + $0x1c0] sm:$0xff]
  %v569 = vld [vmem:[%s1 + $0x1c8] sm:$0xff]
  %v570 = vld [vmem:[%s1 + $0x1d0] sm:$0xff]
  %v571 = vld [vmem:[%s1 + $0x1d8] sm:$0xff]
  %v572 = vld [vmem:[%s1 + $0x1e0] sm:$0xff]
  %v573 = vld [vmem:[%s1 + $0x1e8] sm:$0xff]
  %v574 = vld [vmem:[%s1 + $0x1f0] sm:$0xff]
  %v575 = vld [vmem:[%s1 + $0x1f8] sm:$0xff]
  %v576 = vld [vmem:[%s1 + $0x200] sm:$0xff]
  %v577 = vld [vmem:[%s1 + $0x208] sm:$0xff]
  %v578 = vld [vmem:[%s1 + $0x210] sm:$0xff]
  %v579 = vld [vmem:[%s1 + $0x218] sm:$0xff]
  %v580 = vld [vmem:[%s1 + $0x220] sm:$0xff]
  %v581 = vld [vmem:[%s1 + $0x228] sm:$0xff]
  %v582 = vld [vmem:[%s1 + $0x230] sm:$0xff]
  %v583 = vld [vmem:[%s1 + $0x238] sm:$0xff]
  %v584 = vld [vmem:[%s1 + $0x240] sm:$0xff]
  %v585 = vld [vmem:[%s1 + $0x248] sm:$0xff]
  %v586 = vld [vmem:[%s1 + $0x250] sm:$0xff]
  %v587 = vld [vmem:[%s1 + $0x258] sm:$0xff]
  %v588 = vld [vmem:[%s1 + $0x260] sm:$0xff]
  %v589 = vld [vmem:[%s1 + $0x268] sm:$0xff]
  %v590 = vld [vmem:[%s1 + $0x270] sm:$0xff]
  %v591 = vld [vmem:[%s1 + $0x278] sm:$0xff]
  %v592 = vld [vmem:[%s1 + $0x280] sm:$0xff]
  %v593 = vld [vmem:[%s1 + $0x288] sm:$0xff]
  %v594 = vld [vmem:[%s1 + $0x290] sm:$0xff]
  %v595 = vld [vmem:[%s1 + $0x298] sm:$0xff]
  %v596 = vld [vmem:[%s1 + $0x2a0] sm:$0xff]
  %v597 = vld [vmem:[%s1 + $0x2a8] sm:$0xff]
  %v598 = vld [vmem:[%s1 + $0x2b0] sm:$0xff]
  %v599 = vld [vmem:[%s1 + $0x2b8] sm:$0xff]
  %v600 = vld [vmem:[%s1 + $0x2c0] sm:$0xff]
  %v601 = vld [vmem:[%s1 + $0x2c8] sm:$0xff]
  %v602 = vld [vmem:[%s1 + $0x2d0] sm:$0xff]
  %v603 = vld [vmem:[%s1 + $0x2d8] sm:$0xff]
  %v604 = vld [vmem:[%s1 + $0x2e0] sm:$0xff]
  %v605 = vld [vmem:[%s1 + $0x2e8] sm:$0xff]
  %v606 = vld [vmem:[%s1 + $0x2f0] sm:$0xff]
  %v607 = vld [vmem:[%s1 + $0x2f8] sm:$0xff]
  %v608 = vld [vmem:[%s1 + $0x300] sm:$0xff]
  %v609 = vld [vmem:[%s1 + $0x308] sm:$0xff]
  %v610 = vld [vmem:[%s1 + $0x310] sm:$0xff]
  %v611 = vld [vmem:[%s1 + $0x318] sm:$0xff]
  %v612 = vld [vmem:[%s1 + $0x320] sm:$0xff]
  %v613 = vld [vmem:[%s1 + $0x328] sm:$0xff]
  %v614 = vld [vmem:[%s1 + $0x330] sm:$0xff]
  %v615 = vld [vmem:[%s1 + $0x338] sm:$0xff]
  %v616 = vld [vmem:[%s1 + $0x340] sm:$0xff]
  %v617 = vld [vmem:[%s1 + $0x348] sm:$0xff]
  %v618 = vld [vmem:[%s1 + $0x350] sm:$0xff]
  %v619 = vld [vmem:[%s1 + $0x358] sm:$0xff]
  %v620 = vld [vmem:[%s1 + $0x360] sm:$0xff]
  %v621 = vld [vmem:[%s1 + $0x368] sm:$0xff]
  %v622 = vld [vmem:[%s1 + $0x370] sm:$0xff]
  %v623 = vld [vmem:[%s1 + $0x378] sm:$0xff]
  %v624 = vld [vmem:[%s1 + $0x380] sm:$0xff]
  %v625 = vld [vmem:[%s1 + $0x388] sm:$0xff]
  %v626 = vld [vmem:[%s1 + $0x390] sm:$0xff]
  %v627 = vld [vmem:[%s1 + $0x398] sm:$0xff]
  %v628 = vld [vmem:[%s1 + $0x3a0] sm:$0xff]
  %v629 = vld [vmem:[%s1 + $0x3a8] sm:$0xff]
  %v630 = vld [vmem:[%s1 + $0x3b0] sm:$0xff]
  %v631 = vld [vmem:[%s1 + $0x3b8] sm:$0xff]
  %v632 = vld [vmem:[%s1 + $0x3c0] sm:$0xff]
  %v633 = vld [vmem:[%s1 + $0x3c8] sm:$0xff]
  %v634 = vld [vmem:[%s1 + $0x3d0] sm:$0xff]
  %v635 = vld [vmem:[%s1 + $0x3d8] sm:$0xff]
  %v636 = vld [vmem:[%s1 + $0x3e0] sm:$0xff]
  %v637 = vld [vmem:[%s1 + $0x3e8] sm:$0xff]
  %v638 = vld [vmem:[%s1 + $0x3f0] sm:$0xff]
  %v639 = vld [vmem:[%s1 + $0x3f8] sm:$0xff]
  %v640 = vld [vmem:[%s1 + $0x400] sm:$0xff]
  %v641 = vld [vmem:[%s1 + $0x408] sm:$0xff]
  %v642 = vld [vmem:[%s1 + $0x410] sm:$0xff]
  %v643 = vld [vmem:[%s1 + $0x418] sm:$0xff]
  %v644 = vld [vmem:[%s1 + $0x420] sm:$0xff]
  %v645 = vld [vmem:[%s1 + $0x428] sm:$0xff]
  %v646 = vld [vmem:[%s1 + $0x430] sm:$0xff]
  %v647 = vld [vmem:[%s1 + $0x438] sm:$0xff]
  %v648 = vld [vmem:[%s1 + $0x440] sm:$0xff]
  %v649 = vld [vmem:[%s1 + $0x448] sm:$0xff]
  %v650 = vld [vmem:[%s1 + $0x450] sm:$0xff]
  %v651 = vld [vmem:[%s1 + $0x458] sm:$0xff]
  %v652 = vld [vmem:[%s1 + $0x460] sm:$0xff]
  %v653 = vld [vmem:[%s1 + $0x468] sm:$0xff]
  %v654 = vld [vmem:[%s1 + $0x470] sm:$0xff]
  %v655 = vld [vmem:[%s1 + $0x478] sm:$0xff]
  %v656 = vld [vmem:[%s1 + $0x480] sm:$0xff]
  %v657 = vld [vmem:[%s1 + $0x488] sm:$0xff]
  %v658 = vld [vmem:[%s1 + $0x490] sm:$0xff]
  %v659 = vld [vmem:[%s1 + $0x498] sm:$0xff]
  %v660 = vld [vmem:[%s1 + $0x4a0] sm:$0xff]
  %v661 = vld [vmem:[%s1 + $0x4a8] sm:$0xff]
  %v662 = vld [vmem:[%s2] sm:$0x1]
  %v664 = vperm.slane %v662, 0
  %vm666 = vcmask 392192
  %v668 = vsel %vm666, %v41, 0
  %v671 = vsel %vm666, %v51, 0
  %v674 = vsel %vm666, %v61, 0
  %v677 = vsel %vm666, %v71, 0
  %v680 = vsel %vm666, %v81, 0
  %v683 = vsel %vm666, %v91, 0
  %v686 = vsel %vm666, %v101, 0
  %v689 = vsel %vm666, %v111, 0
  %v692 = vsel %vm666, %v121, 0
  %v695 = vsel %vm666, %v131, 0
  %v698 = vsel %vm666, %v141, 0
  %v701 = vsel %vm666, %v151, 0
  %v704 = vsel %vm666, %v161, 0
  %v707 = vsel %vm666, %v171, 0
  %v710 = vsel %vm666, %v181, 0
  %v713 = vsel %vm666, %v191, 0
  %v716 = vsel %vm666, %v201, 0
  %v719 = vsel %vm666, %v211, 0
  %v722 = vsel %vm666, %v221, 0
  %v725 = vsel %vm666, %v231, 0
  %v728 = vsel %vm666, %v241, 0
  %v731 = vsel %vm666, %v251, 0
  %v734 = vsel %vm666, %v261, 0
  %v737 = vsel %vm666, %v271, 0
  %v740 = vsel %vm666, %v281, 0
  %v743 = vsel %vm666, %v291, 0
  %v746 = vsel %vm666, %v301, 0
  %v749 = vsel %vm666, %v311, 0
  %v752 = vsel %vm666, %v321, 0
  %v755 = vsel %vm666, %v331, 0
  %v758 = vsel %vm666, %v341, 0
  %v761 = vsel %vm666, %v351, 0
  %v764 = vsel %vm666, %v361, 0
  %v767 = vsel %vm666, %v371, 0
  %v770 = vsel %vm666, %v381, 0
  %v773 = vsel %vm666, %v391, 0
  %v776 = vsel %vm666, %v401, 0
  %v779 = vsel %vm666, %v411, 0
  %v782 = vsel %vm666, %v421, 0
  %v785 = vsel %vm666, %v431, 0
  %v788 = vsel %vm666, %v441, 0
  %v791 = vsel %vm666, %v451, 0
  %v794 = vsel %vm666, %v461, 0
  %v797 = vsel %vm666, %v471, 0
  %v800 = vsel %vm666, %v481, 0
  %v803 = vsel %vm666, %v491, 0
  %v806 = vsel %vm666, %v501, 0
  %v809 = vsel %vm666, %v511, 0
  %811 = vmatpush.msra.mxu0 %v527
  %812 = vmatpush.msra.mxu0 %v526
  %813 = vmatpush.msra.mxu0 %v525
  %814 = vmatpush.msra.mxu0 %v524
  %815 = vmatpush.msra.mxu0 %v523
  %816 = vmatpush.msra.mxu0 %v522
  %817 = vmatpush.msra.mxu0 %v521
  %818 = vmatpush.msra.mxu0 %v520
  %819 = vmatpush.msra.mxu0 %v519
  %820 = vmatpush.msra.mxu0 %v518
  %821 = vmatpush.msra.mxu0 %v517
  %822 = vmatpush.msra.mxu0 %v516
  %823 = vmatpush.msra.mxu0 %v515
  %824 = vmatpush.msra.mxu0 %v514
  %825 = vmatpush.msra.mxu0 %v513
  %826 = vmatpush.msra.mxu0 %v512
  %827 = vmatmul.f32.gmra.mxu0 %v32
  %v828 = vpop.f32.mrf.mxu0
  %v829 = vadd.f32 %v664, %v828
  %830 = vmatmul.f32.gmra.mxu0 %v42
  %v831 = vpop.f32.mrf.mxu0
  %v832 = vadd.f32 %v664, %v831
  %833 = vmatmul.f32.gmra.mxu0 %v52
  %v834 = vpop.f32.mrf.mxu0
  %v835 = vadd.f32 %v664, %v834
  %836 = vmatmul.f32.gmra.mxu0 %v62
  %v837 = vpop.f32.mrf.mxu0
  %v838 = vadd.f32 %v664, %v837
  %839 = vmatmul.f32.gmra.mxu0 %v72
  %v840 = vpop.f32.mrf.mxu0
  %v841 = vadd.f32 %v664, %v840
  %842 = vmatmul.f32.gmra.mxu0 %v82
  %v843 = vpop.f32.mrf.mxu0
  %v844 = vadd.f32 %v664, %v843
  %845 = vmatmul.f32.gmra.mxu0 %v92
  %v846 = vpop.f32.mrf.mxu0
  %v847 = vadd.f32 %v664, %v846
  %848 = vmatmul.f32.gmra.mxu0 %v102
  %v849 = vpop.f32.mrf.mxu0
  %v850 = vadd.f32 %v664, %v849
  %851 = vmatmul.f32.gmra.mxu0 %v112
  %v852 = vpop.f32.mrf.mxu0
  %v853 = vadd.f32 %v664, %v852
  %854 = vmatmul.f32.gmra.mxu0 %v122
  %v855 = vpop.f32.mrf.mxu0
  %v856 = vadd.f32 %v664, %v855
  %857 = vmatmul.f32.gmra.mxu0 %v132
  %v858 = vpop.f32.mrf.mxu0
  %v859 = vadd.f32 %v664, %v858
  %860 = vmatmul.f32.gmra.mxu0 %v142
  %v861 = vpop.f32.mrf.mxu0
  %v862 = vadd.f32 %v664, %v861
  %863 = vmatmul.f32.gmra.mxu0 %v152
  %v864 = vpop.f32.mrf.mxu0
  %v865 = vadd.f32 %v664, %v864
  %866 = vmatmul.f32.gmra.mxu0 %v162
  %v867 = vpop.f32.mrf.mxu0
  %v868 = vadd.f32 %v664, %v867
  %869 = vmatmul.f32.gmra.mxu0 %v172
  %v870 = vpop.f32.mrf.mxu0
  %v871 = vadd.f32 %v664, %v870
  %872 = vmatmul.f32.gmra.mxu0 %v182
  %v873 = vpop.f32.mrf.mxu0
  %v874 = vadd.f32 %v664, %v873
  %875 = vmatmul.f32.gmra.mxu0 %v192
  %v876 = vpop.f32.mrf.mxu0
  %v877 = vadd.f32 %v664, %v876
  %878 = vmatmul.f32.gmra.mxu0 %v202
  %v879 = vpop.f32.mrf.mxu0
  %v880 = vadd.f32 %v664, %v879
  %881 = vmatmul.f32.gmra.mxu0 %v212
  %v882 = vpop.f32.mrf.mxu0
  %v883 = vadd.f32 %v664, %v882
  %884 = vmatmul.f32.gmra.mxu0 %v222
  %v885 = vpop.f32.mrf.mxu0
  %v886 = vadd.f32 %v664, %v885
  %887 = vmatmul.f32.gmra.mxu0 %v232
  %v888 = vpop.f32.mrf.mxu0
  %v889 = vadd.f32 %v664, %v888
  %890 = vmatmul.f32.gmra.mxu0 %v242
  %v891 = vpop.f32.mrf.mxu0
  %v892 = vadd.f32 %v664, %v891
  %893 = vmatmul.f32.gmra.mxu0 %v252
  %v894 = vpop.f32.mrf.mxu0
  %v895 = vadd.f32 %v664, %v894
  %896 = vmatmul.f32.gmra.mxu0 %v262
  %v897 = vpop.f32.mrf.mxu0
  %v898 = vadd.f32 %v664, %v897
  %899 = vmatmul.f32.gmra.mxu0 %v272
  %v900 = vpop.f32.mrf.mxu0
  %v901 = vadd.f32 %v664, %v900
  %902 = vmatmul.f32.gmra.mxu0 %v282
  %v903 = vpop.f32.mrf.mxu0
  %v904 = vadd.f32 %v664, %v903
  %905 = vmatmul.f32.gmra.mxu0 %v292
  %v906 = vpop.f32.mrf.mxu0
  %v907 = vadd.f32 %v664, %v906
  %908 = vmatmul.f32.gmra.mxu0 %v302
  %v909 = vpop.f32.mrf.mxu0
  %v910 = vadd.f32 %v664, %v909
  %911 = vmatmul.f32.gmra.mxu0 %v312
  %v912 = vpop.f32.mrf.mxu0
  %v913 = vadd.f32 %v664, %v912
  %914 = vmatmul.f32.gmra.mxu0 %v322
  %v915 = vpop.f32.mrf.mxu0
  %v916 = vadd.f32 %v664, %v915
  %917 = vmatmul.f32.gmra.mxu0 %v332
  %v918 = vpop.f32.mrf.mxu0
  %v919 = vadd.f32 %v664, %v918
  %920 = vmatmul.f32.gmra.mxu0 %v342
  %v921 = vpop.f32.mrf.mxu0
  %v922 = vadd.f32 %v664, %v921
  %923 = vmatmul.f32.gmra.mxu0 %v352
  %v924 = vpop.f32.mrf.mxu0
  %v925 = vadd.f32 %v664, %v924
  %926 = vmatmul.f32.gmra.mxu0 %v362
  %v927 = vpop.f32.mrf.mxu0
  %v928 = vadd.f32 %v664, %v927
  %929 = vmatmul.f32.gmra.mxu0 %v372
  %v930 = vpop.f32.mrf.mxu0
  %v931 = vadd.f32 %v664, %v930
  %932 = vmatmul.f32.gmra.mxu0 %v382
  %v933 = vpop.f32.mrf.mxu0
  %v934 = vadd.f32 %v664, %v933
  %935 = vmatmul.f32.gmra.mxu0 %v392
  %v936 = vpop.f32.mrf.mxu0
  %v937 = vadd.f32 %v664, %v936
  %938 = vmatmul.f32.gmra.mxu0 %v402
  %v939 = vpop.f32.mrf.mxu0
  %v940 = vadd.f32 %v664, %v939
  %941 = vmatmul.f32.gmra.mxu0 %v412
  %v942 = vpop.f32.mrf.mxu0
  %v943 = vadd.f32 %v664, %v942
  %944 = vmatmul.f32.gmra.mxu0 %v422
  %v945 = vpop.f32.mrf.mxu0
  %v946 = vadd.f32 %v664, %v945
  %947 = vmatmul.f32.gmra.mxu0 %v432
  %v948 = vpop.f32.mrf.mxu0
  %v949 = vadd.f32 %v664, %v948
  %950 = vmatmul.f32.gmra.mxu0 %v442
  %v951 = vpop.f32.mrf.mxu0
  %v952 = vadd.f32 %v664, %v951
  %953 = vmatmul.f32.gmra.mxu0 %v452
  %v954 = vpop.f32.mrf.mxu0
  %v955 = vadd.f32 %v664, %v954
  %956 = vmatmul.f32.gmra.mxu0 %v462
  %v957 = vpop.f32.mrf.mxu0
  %v958 = vadd.f32 %v664, %v957
  %959 = vmatmul.f32.gmra.mxu0 %v472
  %v960 = vpop.f32.mrf.mxu0
  %v961 = vadd.f32 %v664, %v960
  %962 = vmatmul.f32.gmra.mxu0 %v482
  %v963 = vpop.f32.mrf.mxu0
  %v964 = vadd.f32 %v664, %v963
  %965 = vmatmul.f32.gmra.mxu0 %v492
  %v966 = vpop.f32.mrf.mxu0
  %v967 = vadd.f32 %v664, %v966
  %968 = vmatmul.f32.gmra.mxu0 %v502
  %v969 = vpop.f32.mrf.mxu0
  %v970 = vadd.f32 %v664, %v969
  %971 = vdwg.mxu0
  %972 = vmatpush.msra.mxu0 %v543
  %973 = vmatpush.msra.mxu0 %v542
  %974 = vmatpush.msra.mxu0 %v541
  %975 = vmatpush.msra.mxu0 %v540
  %976 = vmatpush.msra.mxu0 %v539
  %977 = vmatpush.msra.mxu0 %v538
  %978 = vmatpush.msra.mxu0 %v537
  %979 = vmatpush.msra.mxu0 %v536
  %980 = vmatpush.msra.mxu0 %v535
  %981 = vmatpush.msra.mxu0 %v534
  %982 = vmatpush.msra.mxu0 %v533
  %983 = vmatpush.msra.mxu0 %v532
  %984 = vmatpush.msra.mxu0 %v531
  %985 = vmatpush.msra.mxu0 %v530
  %986 = vmatpush.msra.mxu0 %v529
  %987 = vmatpush.msra.mxu0 %v528
  %988 = vmatmul.f32.gmra.mxu0 %v33
  %v989 = vpop.f32.mrf.mxu0
  %v990 = vadd.f32 %v829, %v989
  %991 = vmatmul.f32.gmra.mxu0 %v43
  %v992 = vpop.f32.mrf.mxu0
  %v993 = vadd.f32 %v832, %v992
  %994 = vmatmul.f32.gmra.mxu0 %v53
  %v995 = vpop.f32.mrf.mxu0
  %v996 = vadd.f32 %v835, %v995
  %997 = vmatmul.f32.gmra.mxu0 %v63
  %v998 = vpop.f32.mrf.mxu0
  %v999 = vadd.f32 %v838, %v998
  %1000 = vmatmul.f32.gmra.mxu0 %v73
  %v1001 = vpop.f32.mrf.mxu0
  %v1002 = vadd.f32 %v841, %v1001
  %1003 = vmatmul.f32.gmra.mxu0 %v83
  %v1004 = vpop.f32.mrf.mxu0
  %v1005 = vadd.f32 %v844, %v1004
  %1006 = vmatmul.f32.gmra.mxu0 %v93
  %v1007 = vpop.f32.mrf.mxu0
  %v1008 = vadd.f32 %v847, %v1007
  %1009 = vmatmul.f32.gmra.mxu0 %v103
  %v1010 = vpop.f32.mrf.mxu0
  %v1011 = vadd.f32 %v850, %v1010
  %1012 = vmatmul.f32.gmra.mxu0 %v113
  %v1013 = vpop.f32.mrf.mxu0
  %v1014 = vadd.f32 %v853, %v1013
  %1015 = vmatmul.f32.gmra.mxu0 %v123
  %v1016 = vpop.f32.mrf.mxu0
  %v1017 = vadd.f32 %v856, %v1016
  %1018 = vmatmul.f32.gmra.mxu0 %v133
  %v1019 = vpop.f32.mrf.mxu0
  %v1020 = vadd.f32 %v859, %v1019
  %1021 = vmatmul.f32.gmra.mxu0 %v143
  %v1022 = vpop.f32.mrf.mxu0
  %v1023 = vadd.f32 %v862, %v1022
  %1024 = vmatmul.f32.gmra.mxu0 %v153
  %v1025 = vpop.f32.mrf.mxu0
  %v1026 = vadd.f32 %v865, %v1025
  %1027 = vmatmul.f32.gmra.mxu0 %v163
  %v1028 = vpop.f32.mrf.mxu0
  %v1029 = vadd.f32 %v868, %v1028
  %1030 = vmatmul.f32.gmra.mxu0 %v173
  %v1031 = vpop.f32.mrf.mxu0
  %v1032 = vadd.f32 %v871, %v1031
  %1033 = vmatmul.f32.gmra.mxu0 %v183
  %v1034 = vpop.f32.mrf.mxu0
  %v1035 = vadd.f32 %v874, %v1034
  %1036 = vmatmul.f32.gmra.mxu0 %v193
  %v1037 = vpop.f32.mrf.mxu0
  %v1038 = vadd.f32 %v877, %v1037
  %1039 = vmatmul.f32.gmra.mxu0 %v203
  %v1040 = vpop.f32.mrf.mxu0
  %v1041 = vadd.f32 %v880, %v1040
  %1042 = vmatmul.f32.gmra.mxu0 %v213
  %v1043 = vpop.f32.mrf.mxu0
  %v1044 = vadd.f32 %v883, %v1043
  %1045 = vmatmul.f32.gmra.mxu0 %v223
  %v1046 = vpop.f32.mrf.mxu0
  %v1047 = vadd.f32 %v886, %v1046
  %1048 = vmatmul.f32.gmra.mxu0 %v233
  %v1049 = vpop.f32.mrf.mxu0
  %v1050 = vadd.f32 %v889, %v1049
  %1051 = vmatmul.f32.gmra.mxu0 %v243
  %v1052 = vpop.f32.mrf.mxu0
  %v1053 = vadd.f32 %v892, %v1052
  %1054 = vmatmul.f32.gmra.mxu0 %v253
  %v1055 = vpop.f32.mrf.mxu0
  %v1056 = vadd.f32 %v895, %v1055
  %1057 = vmatmul.f32.gmra.mxu0 %v263
  %v1058 = vpop.f32.mrf.mxu0
  %v1059 = vadd.f32 %v898, %v1058
  %1060 = vmatmul.f32.gmra.mxu0 %v273
  %v1061 = vpop.f32.mrf.mxu0
  %v1062 = vadd.f32 %v901, %v1061
  %1063 = vmatmul.f32.gmra.mxu0 %v283
  %v1064 = vpop.f32.mrf.mxu0
  %v1065 = vadd.f32 %v904, %v1064
  %1066 = vmatmul.f32.gmra.mxu0 %v293
  %v1067 = vpop.f32.mrf.mxu0
  %v1068 = vadd.f32 %v907, %v1067
  %1069 = vmatmul.f32.gmra.mxu0 %v303
  %v1070 = vpop.f32.mrf.mxu0
  %v1071 = vadd.f32 %v910, %v1070
  %1072 = vmatmul.f32.gmra.mxu0 %v313
  %v1073 = vpop.f32.mrf.mxu0
  %v1074 = vadd.f32 %v913, %v1073
  %1075 = vmatmul.f32.gmra.mxu0 %v323
  %v1076 = vpop.f32.mrf.mxu0
  %v1077 = vadd.f32 %v916, %v1076
  %1078 = vmatmul.f32.gmra.mxu0 %v333
  %v1079 = vpop.f32.mrf.mxu0
  %v1080 = vadd.f32 %v919, %v1079
  %1081 = vmatmul.f32.gmra.mxu0 %v343
  %v1082 = vpop.f32.mrf.mxu0
  %v1083 = vadd.f32 %v922, %v1082
  %1084 = vmatmul.f32.gmra.mxu0 %v353
  %v1085 = vpop.f32.mrf.mxu0
  %v1086 = vadd.f32 %v925, %v1085
  %1087 = vmatmul.f32.gmra.mxu0 %v363
  %v1088 = vpop.f32.mrf.mxu0
  %v1089 = vadd.f32 %v928, %v1088
  %1090 = vmatmul.f32.gmra.mxu0 %v373
  %v1091 = vpop.f32.mrf.mxu0
  %v1092 = vadd.f32 %v931, %v1091
  %1093 = vmatmul.f32.gmra.mxu0 %v383
  %v1094 = vpop.f32.mrf.mxu0
  %v1095 = vadd.f32 %v934, %v1094
  %1096 = vmatmul.f32.gmra.mxu0 %v393
  %v1097 = vpop.f32.mrf.mxu0
  %v1098 = vadd.f32 %v937, %v1097
  %1099 = vmatmul.f32.gmra.mxu0 %v403
  %v1100 = vpop.f32.mrf.mxu0
  %v1101 = vadd.f32 %v940, %v1100
  %1102 = vmatmul.f32.gmra.mxu0 %v413
  %v1103 = vpop.f32.mrf.mxu0
  %v1104 = vadd.f32 %v943, %v1103
  %1105 = vmatmul.f32.gmra.mxu0 %v423
  %v1106 = vpop.f32.mrf.mxu0
  %v1107 = vadd.f32 %v946, %v1106
  %1108 = vmatmul.f32.gmra.mxu0 %v433
  %v1109 = vpop.f32.mrf.mxu0
  %v1110 = vadd.f32 %v949, %v1109
  %1111 = vmatmul.f32.gmra.mxu0 %v443
  %v1112 = vpop.f32.mrf.mxu0
  %v1113 = vadd.f32 %v952, %v1112
  %1114 = vmatmul.f32.gmra.mxu0 %v453
  %v1115 = vpop.f32.mrf.mxu0
  %v1116 = vadd.f32 %v955, %v1115
  %1117 = vmatmul.f32.gmra.mxu0 %v463
  %v1118 = vpop.f32.mrf.mxu0
  %v1119 = vadd.f32 %v958, %v1118
  %1120 = vmatmul.f32.gmra.mxu0 %v473
  %v1121 = vpop.f32.mrf.mxu0
  %v1122 = vadd.f32 %v961, %v1121
  %1123 = vmatmul.f32.gmra.mxu0 %v483
  %v1124 = vpop.f32.mrf.mxu0
  %v1125 = vadd.f32 %v964, %v1124
  %1126 = vmatmul.f32.gmra.mxu0 %v493
  %v1127 = vpop.f32.mrf.mxu0
  %v1128 = vadd.f32 %v967, %v1127
  %1129 = vmatmul.f32.gmra.mxu0 %v503
  %v1130 = vpop.f32.mrf.mxu0
  %v1131 = vadd.f32 %v970, %v1130
  %1132 = vdwg.mxu0
  %1133 = vmatpush.msra.mxu0 %v559
  %1134 = vmatpush.msra.mxu0 %v558
  %1135 = vmatpush.msra.mxu0 %v557
  %1136 = vmatpush.msra.mxu0 %v556
  %1137 = vmatpush.msra.mxu0 %v555
  %1138 = vmatpush.msra.mxu0 %v554
  %1139 = vmatpush.msra.mxu0 %v553
  %1140 = vmatpush.msra.mxu0 %v552
  %1141 = vmatpush.msra.mxu0 %v551
  %1142 = vmatpush.msra.mxu0 %v550
  %1143 = vmatpush.msra.mxu0 %v549
  %1144 = vmatpush.msra.mxu0 %v548
  %1145 = vmatpush.msra.mxu0 %v547
  %1146 = vmatpush.msra.mxu0 %v546
  %1147 = vmatpush.msra.mxu0 %v545
  %1148 = vmatpush.msra.mxu0 %v544
  %1149 = vmatmul.f32.gmra.mxu0 %v34
  %v1150 = vpop.f32.mrf.mxu0
  %v1151 = vadd.f32 %v990, %v1150
  %1152 = vmatmul.f32.gmra.mxu0 %v44
  %v1153 = vpop.f32.mrf.mxu0
  %v1154 = vadd.f32 %v993, %v1153
  %1155 = vmatmul.f32.gmra.mxu0 %v54
  %v1156 = vpop.f32.mrf.mxu0
  %v1157 = vadd.f32 %v996, %v1156
  %1158 = vmatmul.f32.gmra.mxu0 %v64
  %v1159 = vpop.f32.mrf.mxu0
  %v1160 = vadd.f32 %v999, %v1159
  %1161 = vmatmul.f32.gmra.mxu0 %v74
  %v1162 = vpop.f32.mrf.mxu0
  %v1163 = vadd.f32 %v1002, %v1162
  %1164 = vmatmul.f32.gmra.mxu0 %v84
  %v1165 = vpop.f32.mrf.mxu0
  %v1166 = vadd.f32 %v1005, %v1165
  %1167 = vmatmul.f32.gmra.mxu0 %v94
  %v1168 = vpop.f32.mrf.mxu0
  %v1169 = vadd.f32 %v1008, %v1168
  %1170 = vmatmul.f32.gmra.mxu0 %v104
  %v1171 = vpop.f32.mrf.mxu0
  %v1172 = vadd.f32 %v1011, %v1171
  %1173 = vmatmul.f32.gmra.mxu0 %v114
  %v1174 = vpop.f32.mrf.mxu0
  %v1175 = vadd.f32 %v1014, %v1174
  %1176 = vmatmul.f32.gmra.mxu0 %v124
  %v1177 = vpop.f32.mrf.mxu0
  %v1178 = vadd.f32 %v1017, %v1177
  %1179 = vmatmul.f32.gmra.mxu0 %v134
  %v1180 = vpop.f32.mrf.mxu0
  %v1181 = vadd.f32 %v1020, %v1180
  %1182 = vmatmul.f32.gmra.mxu0 %v144
  %v1183 = vpop.f32.mrf.mxu0
  %v1184 = vadd.f32 %v1023, %v1183
  %1185 = vmatmul.f32.gmra.mxu0 %v154
  %v1186 = vpop.f32.mrf.mxu0
  %v1187 = vadd.f32 %v1026, %v1186
  %1188 = vmatmul.f32.gmra.mxu0 %v164
  %v1189 = vpop.f32.mrf.mxu0
  %v1190 = vadd.f32 %v1029, %v1189
  %1191 = vmatmul.f32.gmra.mxu0 %v174
  %v1192 = vpop.f32.mrf.mxu0
  %v1193 = vadd.f32 %v1032, %v1192
  %1194 = vmatmul.f32.gmra.mxu0 %v184
  %v1195 = vpop.f32.mrf.mxu0
  %v1196 = vadd.f32 %v1035, %v1195
  %1197 = vmatmul.f32.gmra.mxu0 %v194
  %v1198 = vpop.f32.mrf.mxu0
  %v1199 = vadd.f32 %v1038, %v1198
  %1200 = vmatmul.f32.gmra.mxu0 %v204
  %v1201 = vpop.f32.mrf.mxu0
  %v1202 = vadd.f32 %v1041, %v1201
  %1203 = vmatmul.f32.gmra.mxu0 %v214
  %v1204 = vpop.f32.mrf.mxu0
  %v1205 = vadd.f32 %v1044, %v1204
  %1206 = vmatmul.f32.gmra.mxu0 %v224
  %v1207 = vpop.f32.mrf.mxu0
  %v1208 = vadd.f32 %v1047, %v1207
  %1209 = vmatmul.f32.gmra.mxu0 %v234
  %v1210 = vpop.f32.mrf.mxu0
  %v1211 = vadd.f32 %v1050, %v1210
  %1212 = vmatmul.f32.gmra.mxu0 %v244
  %v1213 = vpop.f32.mrf.mxu0
  %v1214 = vadd.f32 %v1053, %v1213
  %1215 = vmatmul.f32.gmra.mxu0 %v254
  %v1216 = vpop.f32.mrf.mxu0
  %v1217 = vadd.f32 %v1056, %v1216
  %1218 = vmatmul.f32.gmra.mxu0 %v264
  %v1219 = vpop.f32.mrf.mxu0
  %v1220 = vadd.f32 %v1059, %v1219
  %1221 = vmatmul.f32.gmra.mxu0 %v274
  %v1222 = vpop.f32.mrf.mxu0
  %v1223 = vadd.f32 %v1062, %v1222
  %1224 = vmatmul.f32.gmra.mxu0 %v284
  %v1225 = vpop.f32.mrf.mxu0
  %v1226 = vadd.f32 %v1065, %v1225
  %1227 = vmatmul.f32.gmra.mxu0 %v294
  %v1228 = vpop.f32.mrf.mxu0
  %v1229 = vadd.f32 %v1068, %v1228
  %1230 = vmatmul.f32.gmra.mxu0 %v304
  %v1231 = vpop.f32.mrf.mxu0
  %v1232 = vadd.f32 %v1071, %v1231
  %1233 = vmatmul.f32.gmra.mxu0 %v314
  %v1234 = vpop.f32.mrf.mxu0
  %v1235 = vadd.f32 %v1074, %v1234
  %1236 = vmatmul.f32.gmra.mxu0 %v324
  %v1237 = vpop.f32.mrf.mxu0
  %v1238 = vadd.f32 %v1077, %v1237
  %1239 = vmatmul.f32.gmra.mxu0 %v334
  %v1240 = vpop.f32.mrf.mxu0
  %v1241 = vadd.f32 %v1080, %v1240
  %1242 = vmatmul.f32.gmra.mxu0 %v344
  %v1243 = vpop.f32.mrf.mxu0
  %v1244 = vadd.f32 %v1083, %v1243
  %1245 = vmatmul.f32.gmra.mxu0 %v354
  %v1246 = vpop.f32.mrf.mxu0
  %v1247 = vadd.f32 %v1086, %v1246
  %1248 = vmatmul.f32.gmra.mxu0 %v364
  %v1249 = vpop.f32.mrf.mxu0
  %v1250 = vadd.f32 %v1089, %v1249
  %1251 = vmatmul.f32.gmra.mxu0 %v374
  %v1252 = vpop.f32.mrf.mxu0
  %v1253 = vadd.f32 %v1092, %v1252
  %1254 = vmatmul.f32.gmra.mxu0 %v384
  %v1255 = vpop.f32.mrf.mxu0
  %v1256 = vadd.f32 %v1095, %v1255
  %1257 = vmatmul.f32.gmra.mxu0 %v394
  %v1258 = vpop.f32.mrf.mxu0
  %v1259 = vadd.f32 %v1098, %v1258
  %1260 = vmatmul.f32.gmra.mxu0 %v404
  %v1261 = vpop.f32.mrf.mxu0
  %v1262 = vadd.f32 %v1101, %v1261
  %1263 = vmatmul.f32.gmra.mxu0 %v414
  %v1264 = vpop.f32.mrf.mxu0
  %v1265 = vadd.f32 %v1104, %v1264
  %1266 = vmatmul.f32.gmra.mxu0 %v424
  %v1267 = vpop.f32.mrf.mxu0
  %v1268 = vadd.f32 %v1107, %v1267
  %1269 = vmatmul.f32.gmra.mxu0 %v434
  %v1270 = vpop.f32.mrf.mxu0
  %v1271 = vadd.f32 %v1110, %v1270
  %1272 = vmatmul.f32.gmra.mxu0 %v444
  %v1273 = vpop.f32.mrf.mxu0
  %v1274 = vadd.f32 %v1113, %v1273
  %1275 = vmatmul.f32.gmra.mxu0 %v454
  %v1276 = vpop.f32.mrf.mxu0
  %v1277 = vadd.f32 %v1116, %v1276
  %1278 = vmatmul.f32.gmra.mxu0 %v464
  %v1279 = vpop.f32.mrf.mxu0
  %v1280 = vadd.f32 %v1119, %v1279
  %1281 = vmatmul.f32.gmra.mxu0 %v474
  %v1282 = vpop.f32.mrf.mxu0
  %v1283 = vadd.f32 %v1122, %v1282
  %1284 = vmatmul.f32.gmra.mxu0 %v484
  %v1285 = vpop.f32.mrf.mxu0
  %v1286 = vadd.f32 %v1125, %v1285
  %1287 = vmatmul.f32.gmra.mxu0 %v494
  %v1288 = vpop.f32.mrf.mxu0
  %v1289 = vadd.f32 %v1128, %v1288
  %1290 = vmatmul.f32.gmra.mxu0 %v504
  %v1291 = vpop.f32.mrf.mxu0
  %v1292 = vadd.f32 %v1131, %v1291
  %1293 = vdwg.mxu0
  %1294 = vmatpush.msra.mxu0 %v575
  %1295 = vmatpush.msra.mxu0 %v574
  %1296 = vmatpush.msra.mxu0 %v573
  %1297 = vmatpush.msra.mxu0 %v572
  %1298 = vmatpush.msra.mxu0 %v571
  %1299 = vmatpush.msra.mxu0 %v570
  %1300 = vmatpush.msra.mxu0 %v569
  %1301 = vmatpush.msra.mxu0 %v568
  %1302 = vmatpush.msra.mxu0 %v567
  %1303 = vmatpush.msra.mxu0 %v566
  %1304 = vmatpush.msra.mxu0 %v565
  %1305 = vmatpush.msra.mxu0 %v564
  %1306 = vmatpush.msra.mxu0 %v563
  %1307 = vmatpush.msra.mxu0 %v562
  %1308 = vmatpush.msra.mxu0 %v561
  %1309 = vmatpush.msra.mxu0 %v560
  %1310 = vmatmul.f32.gmra.mxu0 %v35
  %v1311 = vpop.f32.mrf.mxu0
  %v1312 = vadd.f32 %v1151, %v1311
  %1313 = vmatmul.f32.gmra.mxu0 %v45
  %v1314 = vpop.f32.mrf.mxu0
  %v1315 = vadd.f32 %v1154, %v1314
  %1316 = vmatmul.f32.gmra.mxu0 %v55
  %v1317 = vpop.f32.mrf.mxu0
  %v1318 = vadd.f32 %v1157, %v1317
  %1319 = vmatmul.f32.gmra.mxu0 %v65
  %v1320 = vpop.f32.mrf.mxu0
  %v1321 = vadd.f32 %v1160, %v1320
  %1322 = vmatmul.f32.gmra.mxu0 %v75
  %v1323 = vpop.f32.mrf.mxu0
  %v1324 = vadd.f32 %v1163, %v1323
  %1325 = vmatmul.f32.gmra.mxu0 %v85
  %v1326 = vpop.f32.mrf.mxu0
  %v1327 = vadd.f32 %v1166, %v1326
  %1328 = vmatmul.f32.gmra.mxu0 %v95
  %v1329 = vpop.f32.mrf.mxu0
  %v1330 = vadd.f32 %v1169, %v1329
  %1331 = vmatmul.f32.gmra.mxu0 %v105
  %v1332 = vpop.f32.mrf.mxu0
  %v1333 = vadd.f32 %v1172, %v1332
  %1334 = vmatmul.f32.gmra.mxu0 %v115
  %v1335 = vpop.f32.mrf.mxu0
  %v1336 = vadd.f32 %v1175, %v1335
  %1337 = vmatmul.f32.gmra.mxu0 %v125
  %v1338 = vpop.f32.mrf.mxu0
  %v1339 = vadd.f32 %v1178, %v1338
  %1340 = vmatmul.f32.gmra.mxu0 %v135
  %v1341 = vpop.f32.mrf.mxu0
  %v1342 = vadd.f32 %v1181, %v1341
  %1343 = vmatmul.f32.gmra.mxu0 %v145
  %v1344 = vpop.f32.mrf.mxu0
  %v1345 = vadd.f32 %v1184, %v1344
  %1346 = vmatmul.f32.gmra.mxu0 %v155
  %v1347 = vpop.f32.mrf.mxu0
  %v1348 = vadd.f32 %v1187, %v1347
  %1349 = vmatmul.f32.gmra.mxu0 %v165
  %v1350 = vpop.f32.mrf.mxu0
  %v1351 = vadd.f32 %v1190, %v1350
  %1352 = vmatmul.f32.gmra.mxu0 %v175
  %v1353 = vpop.f32.mrf.mxu0
  %v1354 = vadd.f32 %v1193, %v1353
  %1355 = vmatmul.f32.gmra.mxu0 %v185
  %v1356 = vpop.f32.mrf.mxu0
  %v1357 = vadd.f32 %v1196, %v1356
  %1358 = vmatmul.f32.gmra.mxu0 %v195
  %v1359 = vpop.f32.mrf.mxu0
  %v1360 = vadd.f32 %v1199, %v1359
  %1361 = vmatmul.f32.gmra.mxu0 %v205
  %v1362 = vpop.f32.mrf.mxu0
  %v1363 = vadd.f32 %v1202, %v1362
  %1364 = vmatmul.f32.gmra.mxu0 %v215
  %v1365 = vpop.f32.mrf.mxu0
  %v1366 = vadd.f32 %v1205, %v1365
  %1367 = vmatmul.f32.gmra.mxu0 %v225
  %v1368 = vpop.f32.mrf.mxu0
  %v1369 = vadd.f32 %v1208, %v1368
  %1370 = vmatmul.f32.gmra.mxu0 %v235
  %v1371 = vpop.f32.mrf.mxu0
  %v1372 = vadd.f32 %v1211, %v1371
  %1373 = vmatmul.f32.gmra.mxu0 %v245
  %v1374 = vpop.f32.mrf.mxu0
  %v1375 = vadd.f32 %v1214, %v1374
  %1376 = vmatmul.f32.gmra.mxu0 %v255
  %v1377 = vpop.f32.mrf.mxu0
  %v1378 = vadd.f32 %v1217, %v1377
  %1379 = vmatmul.f32.gmra.mxu0 %v265
  %v1380 = vpop.f32.mrf.mxu0
  %v1381 = vadd.f32 %v1220, %v1380
  %1382 = vmatmul.f32.gmra.mxu0 %v275
  %v1383 = vpop.f32.mrf.mxu0
  %v1384 = vadd.f32 %v1223, %v1383
  %1385 = vmatmul.f32.gmra.mxu0 %v285
  %v1386 = vpop.f32.mrf.mxu0
  %v1387 = vadd.f32 %v1226, %v1386
  %1388 = vmatmul.f32.gmra.mxu0 %v295
  %v1389 = vpop.f32.mrf.mxu0
  %v1390 = vadd.f32 %v1229, %v1389
  %1391 = vmatmul.f32.gmra.mxu0 %v305
  %v1392 = vpop.f32.mrf.mxu0
  %v1393 = vadd.f32 %v1232, %v1392
  %1394 = vmatmul.f32.gmra.mxu0 %v315
  %v1395 = vpop.f32.mrf.mxu0
  %v1396 = vadd.f32 %v1235, %v1395
  %1397 = vmatmul.f32.gmra.mxu0 %v325
  %v1398 = vpop.f32.mrf.mxu0
  %v1399 = vadd.f32 %v1238, %v1398
  %1400 = vmatmul.f32.gmra.mxu0 %v335
  %v1401 = vpop.f32.mrf.mxu0
  %v1402 = vadd.f32 %v1241, %v1401
  %1403 = vmatmul.f32.gmra.mxu0 %v345
  %v1404 = vpop.f32.mrf.mxu0
  %v1405 = vadd.f32 %v1244, %v1404
  %1406 = vmatmul.f32.gmra.mxu0 %v355
  %v1407 = vpop.f32.mrf.mxu0
  %v1408 = vadd.f32 %v1247, %v1407
  %1409 = vmatmul.f32.gmra.mxu0 %v365
  %v1410 = vpop.f32.mrf.mxu0
  %v1411 = vadd.f32 %v1250, %v1410
  %1412 = vmatmul.f32.gmra.mxu0 %v375
  %v1413 = vpop.f32.mrf.mxu0
  %v1414 = vadd.f32 %v1253, %v1413
  %1415 = vmatmul.f32.gmra.mxu0 %v385
  %v1416 = vpop.f32.mrf.mxu0
  %v1417 = vadd.f32 %v1256, %v1416
  %1418 = vmatmul.f32.gmra.mxu0 %v395
  %v1419 = vpop.f32.mrf.mxu0
  %v1420 = vadd.f32 %v1259, %v1419
  %1421 = vmatmul.f32.gmra.mxu0 %v405
  %v1422 = vpop.f32.mrf.mxu0
  %v1423 = vadd.f32 %v1262, %v1422
  %1424 = vmatmul.f32.gmra.mxu0 %v415
  %v1425 = vpop.f32.mrf.mxu0
  %v1426 = vadd.f32 %v1265, %v1425
  %1427 = vmatmul.f32.gmra.mxu0 %v425
  %v1428 = vpop.f32.mrf.mxu0
  %v1429 = vadd.f32 %v1268, %v1428
  %1430 = vmatmul.f32.gmra.mxu0 %v435
  %v1431 = vpop.f32.mrf.mxu0
  %v1432 = vadd.f32 %v1271, %v1431
  %1433 = vmatmul.f32.gmra.mxu0 %v445
  %v1434 = vpop.f32.mrf.mxu0
  %v1435 = vadd.f32 %v1274, %v1434
  %1436 = vmatmul.f32.gmra.mxu0 %v455
  %v1437 = vpop.f32.mrf.mxu0
  %v1438 = vadd.f32 %v1277, %v1437
  %1439 = vmatmul.f32.gmra.mxu0 %v465
  %v1440 = vpop.f32.mrf.mxu0
  %v1441 = vadd.f32 %v1280, %v1440
  %1442 = vmatmul.f32.gmra.mxu0 %v475
  %v1443 = vpop.f32.mrf.mxu0
  %v1444 = vadd.f32 %v1283, %v1443
  %1445 = vmatmul.f32.gmra.mxu0 %v485
  %v1446 = vpop.f32.mrf.mxu0
  %v1447 = vadd.f32 %v1286, %v1446
  %1448 = vmatmul.f32.gmra.mxu0 %v495
  %v1449 = vpop.f32.mrf.mxu0
  %v1450 = vadd.f32 %v1289, %v1449
  %1451 = vmatmul.f32.gmra.mxu0 %v505
  %v1452 = vpop.f32.mrf.mxu0
  %v1453 = vadd.f32 %v1292, %v1452
  %1454 = vdwg.mxu0
  %1455 = vmatpush.msra.mxu0 %v591
  %1456 = vmatpush.msra.mxu0 %v590
  %1457 = vmatpush.msra.mxu0 %v589
  %1458 = vmatpush.msra.mxu0 %v588
  %1459 = vmatpush.msra.mxu0 %v587
  %1460 = vmatpush.msra.mxu0 %v586
  %1461 = vmatpush.msra.mxu0 %v585
  %1462 = vmatpush.msra.mxu0 %v584
  %1463 = vmatpush.msra.mxu0 %v583
  %1464 = vmatpush.msra.mxu0 %v582
  %1465 = vmatpush.msra.mxu0 %v581
  %1466 = vmatpush.msra.mxu0 %v580
  %1467 = vmatpush.msra.mxu0 %v579
  %1468 = vmatpush.msra.mxu0 %v578
  %1469 = vmatpush.msra.mxu0 %v577
  %1470 = vmatpush.msra.mxu0 %v576
  %1471 = vmatmul.f32.gmra.mxu0 %v36
  %v1472 = vpop.f32.mrf.mxu0
  %v1473 = vadd.f32 %v1312, %v1472
  %1474 = vmatmul.f32.gmra.mxu0 %v46
  %v1475 = vpop.f32.mrf.mxu0
  %v1476 = vadd.f32 %v1315, %v1475
  %1477 = vmatmul.f32.gmra.mxu0 %v56
  %v1478 = vpop.f32.mrf.mxu0
  %v1479 = vadd.f32 %v1318, %v1478
  %1480 = vmatmul.f32.gmra.mxu0 %v66
  %v1481 = vpop.f32.mrf.mxu0
  %v1482 = vadd.f32 %v1321, %v1481
  %1483 = vmatmul.f32.gmra.mxu0 %v76
  %v1484 = vpop.f32.mrf.mxu0
  %v1485 = vadd.f32 %v1324, %v1484
  %1486 = vmatmul.f32.gmra.mxu0 %v86
  %v1487 = vpop.f32.mrf.mxu0
  %v1488 = vadd.f32 %v1327, %v1487
  %1489 = vmatmul.f32.gmra.mxu0 %v96
  %v1490 = vpop.f32.mrf.mxu0
  %v1491 = vadd.f32 %v1330, %v1490
  %1492 = vmatmul.f32.gmra.mxu0 %v106
  %v1493 = vpop.f32.mrf.mxu0
  %v1494 = vadd.f32 %v1333, %v1493
  %1495 = vmatmul.f32.gmra.mxu0 %v116
  %v1496 = vpop.f32.mrf.mxu0
  %v1497 = vadd.f32 %v1336, %v1496
  %1498 = vmatmul.f32.gmra.mxu0 %v126
  %v1499 = vpop.f32.mrf.mxu0
  %v1500 = vadd.f32 %v1339, %v1499
  %1501 = vmatmul.f32.gmra.mxu0 %v136
  %v1502 = vpop.f32.mrf.mxu0
  %v1503 = vadd.f32 %v1342, %v1502
  %1504 = vmatmul.f32.gmra.mxu0 %v146
  %v1505 = vpop.f32.mrf.mxu0
  %v1506 = vadd.f32 %v1345, %v1505
  %1507 = vmatmul.f32.gmra.mxu0 %v156
  %v1508 = vpop.f32.mrf.mxu0
  %v1509 = vadd.f32 %v1348, %v1508
  %1510 = vmatmul.f32.gmra.mxu0 %v166
  %v1511 = vpop.f32.mrf.mxu0
  %v1512 = vadd.f32 %v1351, %v1511
  %1513 = vmatmul.f32.gmra.mxu0 %v176
  %v1514 = vpop.f32.mrf.mxu0
  %v1515 = vadd.f32 %v1354, %v1514
  %1516 = vmatmul.f32.gmra.mxu0 %v186
  %v1517 = vpop.f32.mrf.mxu0
  %v1518 = vadd.f32 %v1357, %v1517
  %1519 = vmatmul.f32.gmra.mxu0 %v196
  %v1520 = vpop.f32.mrf.mxu0
  %v1521 = vadd.f32 %v1360, %v1520
  %1522 = vmatmul.f32.gmra.mxu0 %v206
  %v1523 = vpop.f32.mrf.mxu0
  %v1524 = vadd.f32 %v1363, %v1523
  %1525 = vmatmul.f32.gmra.mxu0 %v216
  %v1526 = vpop.f32.mrf.mxu0
  %v1527 = vadd.f32 %v1366, %v1526
  %1528 = vmatmul.f32.gmra.mxu0 %v226
  %v1529 = vpop.f32.mrf.mxu0
  %v1530 = vadd.f32 %v1369, %v1529
  %1531 = vmatmul.f32.gmra.mxu0 %v236
  %v1532 = vpop.f32.mrf.mxu0
  %v1533 = vadd.f32 %v1372, %v1532
  %1534 = vmatmul.f32.gmra.mxu0 %v246
  %v1535 = vpop.f32.mrf.mxu0
  %v1536 = vadd.f32 %v1375, %v1535
  %1537 = vmatmul.f32.gmra.mxu0 %v256
  %v1538 = vpop.f32.mrf.mxu0
  %v1539 = vadd.f32 %v1378, %v1538
  %1540 = vmatmul.f32.gmra.mxu0 %v266
  %v1541 = vpop.f32.mrf.mxu0
  %v1542 = vadd.f32 %v1381, %v1541
  %1543 = vmatmul.f32.gmra.mxu0 %v276
  %v1544 = vpop.f32.mrf.mxu0
  %v1545 = vadd.f32 %v1384, %v1544
  %1546 = vmatmul.f32.gmra.mxu0 %v286
  %v1547 = vpop.f32.mrf.mxu0
  %v1548 = vadd.f32 %v1387, %v1547
  %1549 = vmatmul.f32.gmra.mxu0 %v296
  %v1550 = vpop.f32.mrf.mxu0
  %v1551 = vadd.f32 %v1390, %v1550
  %1552 = vmatmul.f32.gmra.mxu0 %v306
  %v1553 = vpop.f32.mrf.mxu0
  %v1554 = vadd.f32 %v1393, %v1553
  %1555 = vmatmul.f32.gmra.mxu0 %v316
  %v1556 = vpop.f32.mrf.mxu0
  %v1557 = vadd.f32 %v1396, %v1556
  %1558 = vmatmul.f32.gmra.mxu0 %v326
  %v1559 = vpop.f32.mrf.mxu0
  %v1560 = vadd.f32 %v1399, %v1559
  %1561 = vmatmul.f32.gmra.mxu0 %v336
  %v1562 = vpop.f32.mrf.mxu0
  %v1563 = vadd.f32 %v1402, %v1562
  %1564 = vmatmul.f32.gmra.mxu0 %v346
  %v1565 = vpop.f32.mrf.mxu0
  %v1566 = vadd.f32 %v1405, %v1565
  %1567 = vmatmul.f32.gmra.mxu0 %v356
  %v1568 = vpop.f32.mrf.mxu0
  %v1569 = vadd.f32 %v1408, %v1568
  %1570 = vmatmul.f32.gmra.mxu0 %v366
  %v1571 = vpop.f32.mrf.mxu0
  %v1572 = vadd.f32 %v1411, %v1571
  %1573 = vmatmul.f32.gmra.mxu0 %v376
  %v1574 = vpop.f32.mrf.mxu0
  %v1575 = vadd.f32 %v1414, %v1574
  %1576 = vmatmul.f32.gmra.mxu0 %v386
  %v1577 = vpop.f32.mrf.mxu0
  %v1578 = vadd.f32 %v1417, %v1577
  %1579 = vmatmul.f32.gmra.mxu0 %v396
  %v1580 = vpop.f32.mrf.mxu0
  %v1581 = vadd.f32 %v1420, %v1580
  %1582 = vmatmul.f32.gmra.mxu0 %v406
  %v1583 = vpop.f32.mrf.mxu0
  %v1584 = vadd.f32 %v1423, %v1583
  %1585 = vmatmul.f32.gmra.mxu0 %v416
  %v1586 = vpop.f32.mrf.mxu0
  %v1587 = vadd.f32 %v1426, %v1586
  %1588 = vmatmul.f32.gmra.mxu0 %v426
  %v1589 = vpop.f32.mrf.mxu0
  %v1590 = vadd.f32 %v1429, %v1589
  %1591 = vmatmul.f32.gmra.mxu0 %v436
  %v1592 = vpop.f32.mrf.mxu0
  %v1593 = vadd.f32 %v1432, %v1592
  %1594 = vmatmul.f32.gmra.mxu0 %v446
  %v1595 = vpop.f32.mrf.mxu0
  %v1596 = vadd.f32 %v1435, %v1595
  %1597 = vmatmul.f32.gmra.mxu0 %v456
  %v1598 = vpop.f32.mrf.mxu0
  %v1599 = vadd.f32 %v1438, %v1598
  %1600 = vmatmul.f32.gmra.mxu0 %v466
  %v1601 = vpop.f32.mrf.mxu0
  %v1602 = vadd.f32 %v1441, %v1601
  %1603 = vmatmul.f32.gmra.mxu0 %v476
  %v1604 = vpop.f32.mrf.mxu0
  %v1605 = vadd.f32 %v1444, %v1604
  %1606 = vmatmul.f32.gmra.mxu0 %v486
  %v1607 = vpop.f32.mrf.mxu0
  %v1608 = vadd.f32 %v1447, %v1607
  %1609 = vmatmul.f32.gmra.mxu0 %v496
  %v1610 = vpop.f32.mrf.mxu0
  %v1611 = vadd.f32 %v1450, %v1610
  %1612 = vmatmul.f32.gmra.mxu0 %v506
  %v1613 = vpop.f32.mrf.mxu0
  %v1614 = vadd.f32 %v1453, %v1613
  %1615 = vdwg.mxu0
  %1616 = vmatpush.msra.mxu0 %v607
  %1617 = vmatpush.msra.mxu0 %v606
  %1618 = vmatpush.msra.mxu0 %v605
  %1619 = vmatpush.msra.mxu0 %v604
  %1620 = vmatpush.msra.mxu0 %v603
  %1621 = vmatpush.msra.mxu0 %v602
  %1622 = vmatpush.msra.mxu0 %v601
  %1623 = vmatpush.msra.mxu0 %v600
  %1624 = vmatpush.msra.mxu0 %v599
  %1625 = vmatpush.msra.mxu0 %v598
  %1626 = vmatpush.msra.mxu0 %v597
  %1627 = vmatpush.msra.mxu0 %v596
  %1628 = vmatpush.msra.mxu0 %v595
  %1629 = vmatpush.msra.mxu0 %v594
  %1630 = vmatpush.msra.mxu0 %v593
  %1631 = vmatpush.msra.mxu0 %v592
  %1632 = vmatmul.f32.gmra.mxu0 %v37
  %v1633 = vpop.f32.mrf.mxu0
  %v1634 = vadd.f32 %v1473, %v1633
  %1635 = vmatmul.f32.gmra.mxu0 %v47
  %v1636 = vpop.f32.mrf.mxu0
  %v1637 = vadd.f32 %v1476, %v1636
  %1638 = vmatmul.f32.gmra.mxu0 %v57
  %v1639 = vpop.f32.mrf.mxu0
  %v1640 = vadd.f32 %v1479, %v1639
  %1641 = vmatmul.f32.gmra.mxu0 %v67
  %v1642 = vpop.f32.mrf.mxu0
  %v1643 = vadd.f32 %v1482, %v1642
  %1644 = vmatmul.f32.gmra.mxu0 %v77
  %v1645 = vpop.f32.mrf.mxu0
  %v1646 = vadd.f32 %v1485, %v1645
  %1647 = vmatmul.f32.gmra.mxu0 %v87
  %v1648 = vpop.f32.mrf.mxu0
  %v1649 = vadd.f32 %v1488, %v1648
  %1650 = vmatmul.f32.gmra.mxu0 %v97
  %v1651 = vpop.f32.mrf.mxu0
  %v1652 = vadd.f32 %v1491, %v1651
  %1653 = vmatmul.f32.gmra.mxu0 %v107
  %v1654 = vpop.f32.mrf.mxu0
  %v1655 = vadd.f32 %v1494, %v1654
  %1656 = vmatmul.f32.gmra.mxu0 %v117
  %v1657 = vpop.f32.mrf.mxu0
  %v1658 = vadd.f32 %v1497, %v1657
  %1659 = vmatmul.f32.gmra.mxu0 %v127
  %v1660 = vpop.f32.mrf.mxu0
  %v1661 = vadd.f32 %v1500, %v1660
  %1662 = vmatmul.f32.gmra.mxu0 %v137
  %v1663 = vpop.f32.mrf.mxu0
  %v1664 = vadd.f32 %v1503, %v1663
  %1665 = vmatmul.f32.gmra.mxu0 %v147
  %v1666 = vpop.f32.mrf.mxu0
  %v1667 = vadd.f32 %v1506, %v1666
  %1668 = vmatmul.f32.gmra.mxu0 %v157
  %v1669 = vpop.f32.mrf.mxu0
  %v1670 = vadd.f32 %v1509, %v1669
  %1671 = vmatmul.f32.gmra.mxu0 %v167
  %v1672 = vpop.f32.mrf.mxu0
  %v1673 = vadd.f32 %v1512, %v1672
  %1674 = vmatmul.f32.gmra.mxu0 %v177
  %v1675 = vpop.f32.mrf.mxu0
  %v1676 = vadd.f32 %v1515, %v1675
  %1677 = vmatmul.f32.gmra.mxu0 %v187
  %v1678 = vpop.f32.mrf.mxu0
  %v1679 = vadd.f32 %v1518, %v1678
  %1680 = vmatmul.f32.gmra.mxu0 %v197
  %v1681 = vpop.f32.mrf.mxu0
  %v1682 = vadd.f32 %v1521, %v1681
  %1683 = vmatmul.f32.gmra.mxu0 %v207
  %v1684 = vpop.f32.mrf.mxu0
  %v1685 = vadd.f32 %v1524, %v1684
  %1686 = vmatmul.f32.gmra.mxu0 %v217
  %v1687 = vpop.f32.mrf.mxu0
  %v1688 = vadd.f32 %v1527, %v1687
  %1689 = vmatmul.f32.gmra.mxu0 %v227
  %v1690 = vpop.f32.mrf.mxu0
  %v1691 = vadd.f32 %v1530, %v1690
  %1692 = vmatmul.f32.gmra.mxu0 %v237
  %v1693 = vpop.f32.mrf.mxu0
  %v1694 = vadd.f32 %v1533, %v1693
  %1695 = vmatmul.f32.gmra.mxu0 %v247
  %v1696 = vpop.f32.mrf.mxu0
  %v1697 = vadd.f32 %v1536, %v1696
  %1698 = vmatmul.f32.gmra.mxu0 %v257
  %v1699 = vpop.f32.mrf.mxu0
  %v1700 = vadd.f32 %v1539, %v1699
  %1701 = vmatmul.f32.gmra.mxu0 %v267
  %v1702 = vpop.f32.mrf.mxu0
  %v1703 = vadd.f32 %v1542, %v1702
  %1704 = vmatmul.f32.gmra.mxu0 %v277
  %v1705 = vpop.f32.mrf.mxu0
  %v1706 = vadd.f32 %v1545, %v1705
  %1707 = vmatmul.f32.gmra.mxu0 %v287
  %v1708 = vpop.f32.mrf.mxu0
  %v1709 = vadd.f32 %v1548, %v1708
  %1710 = vmatmul.f32.gmra.mxu0 %v297
  %v1711 = vpop.f32.mrf.mxu0
  %v1712 = vadd.f32 %v1551, %v1711
  %1713 = vmatmul.f32.gmra.mxu0 %v307
  %v1714 = vpop.f32.mrf.mxu0
  %v1715 = vadd.f32 %v1554, %v1714
  %1716 = vmatmul.f32.gmra.mxu0 %v317
  %v1717 = vpop.f32.mrf.mxu0
  %v1718 = vadd.f32 %v1557, %v1717
  %1719 = vmatmul.f32.gmra.mxu0 %v327
  %v1720 = vpop.f32.mrf.mxu0
  %v1721 = vadd.f32 %v1560, %v1720
  %1722 = vmatmul.f32.gmra.mxu0 %v337
  %v1723 = vpop.f32.mrf.mxu0
  %v1724 = vadd.f32 %v1563, %v1723
  %1725 = vmatmul.f32.gmra.mxu0 %v347
  %v1726 = vpop.f32.mrf.mxu0
  %v1727 = vadd.f32 %v1566, %v1726
  %1728 = vmatmul.f32.gmra.mxu0 %v357
  %v1729 = vpop.f32.mrf.mxu0
  %v1730 = vadd.f32 %v1569, %v1729
  %1731 = vmatmul.f32.gmra.mxu0 %v367
  %v1732 = vpop.f32.mrf.mxu0
  %v1733 = vadd.f32 %v1572, %v1732
  %1734 = vmatmul.f32.gmra.mxu0 %v377
  %v1735 = vpop.f32.mrf.mxu0
  %v1736 = vadd.f32 %v1575, %v1735
  %1737 = vmatmul.f32.gmra.mxu0 %v387
  %v1738 = vpop.f32.mrf.mxu0
  %v1739 = vadd.f32 %v1578, %v1738
  %1740 = vmatmul.f32.gmra.mxu0 %v397
  %v1741 = vpop.f32.mrf.mxu0
  %v1742 = vadd.f32 %v1581, %v1741
  %1743 = vmatmul.f32.gmra.mxu0 %v407
  %v1744 = vpop.f32.mrf.mxu0
  %v1745 = vadd.f32 %v1584, %v1744
  %1746 = vmatmul.f32.gmra.mxu0 %v417
  %v1747 = vpop.f32.mrf.mxu0
  %v1748 = vadd.f32 %v1587, %v1747
  %1749 = vmatmul.f32.gmra.mxu0 %v427
  %v1750 = vpop.f32.mrf.mxu0
  %v1751 = vadd.f32 %v1590, %v1750
  %1752 = vmatmul.f32.gmra.mxu0 %v437
  %v1753 = vpop.f32.mrf.mxu0
  %v1754 = vadd.f32 %v1593, %v1753
  %1755 = vmatmul.f32.gmra.mxu0 %v447
  %v1756 = vpop.f32.mrf.mxu0
  %v1757 = vadd.f32 %v1596, %v1756
  %1758 = vmatmul.f32.gmra.mxu0 %v457
  %v1759 = vpop.f32.mrf.mxu0
  %v1760 = vadd.f32 %v1599, %v1759
  %1761 = vmatmul.f32.gmra.mxu0 %v467
  %v1762 = vpop.f32.mrf.mxu0
  %v1763 = vadd.f32 %v1602, %v1762
  %1764 = vmatmul.f32.gmra.mxu0 %v477
  %v1765 = vpop.f32.mrf.mxu0
  %v1766 = vadd.f32 %v1605, %v1765
  %1767 = vmatmul.f32.gmra.mxu0 %v487
  %v1768 = vpop.f32.mrf.mxu0
  %v1769 = vadd.f32 %v1608, %v1768
  %1770 = vmatmul.f32.gmra.mxu0 %v497
  %v1771 = vpop.f32.mrf.mxu0
  %v1772 = vadd.f32 %v1611, %v1771
  %1773 = vmatmul.f32.gmra.mxu0 %v507
  %v1774 = vpop.f32.mrf.mxu0
  %v1775 = vadd.f32 %v1614, %v1774
  %1776 = vdwg.mxu0
  %1777 = vmatpush.msra.mxu0 %v623
  %1778 = vmatpush.msra.mxu0 %v622
  %1779 = vmatpush.msra.mxu0 %v621
  %1780 = vmatpush.msra.mxu0 %v620
  %1781 = vmatpush.msra.mxu0 %v619
  %1782 = vmatpush.msra.mxu0 %v618
  %1783 = vmatpush.msra.mxu0 %v617
  %1784 = vmatpush.msra.mxu0 %v616
  %1785 = vmatpush.msra.mxu0 %v615
  %1786 = vmatpush.msra.mxu0 %v614
  %1787 = vmatpush.msra.mxu0 %v613
  %1788 = vmatpush.msra.mxu0 %v612
  %1789 = vmatpush.msra.mxu0 %v611
  %1790 = vmatpush.msra.mxu0 %v610
  %1791 = vmatpush.msra.mxu0 %v609
  %1792 = vmatpush.msra.mxu0 %v608
  %1793 = vmatmul.f32.gmra.mxu0 %v38
  %v1794 = vpop.f32.mrf.mxu0
  %v1795 = vadd.f32 %v1634, %v1794
  %1796 = vmatmul.f32.gmra.mxu0 %v48
  %v1797 = vpop.f32.mrf.mxu0
  %v1798 = vadd.f32 %v1637, %v1797
  %1799 = vmatmul.f32.gmra.mxu0 %v58
  %v1800 = vpop.f32.mrf.mxu0
  %v1801 = vadd.f32 %v1640, %v1800
  %1802 = vmatmul.f32.gmra.mxu0 %v68
  %v1803 = vpop.f32.mrf.mxu0
  %v1804 = vadd.f32 %v1643, %v1803
  %1805 = vmatmul.f32.gmra.mxu0 %v78
  %v1806 = vpop.f32.mrf.mxu0
  %v1807 = vadd.f32 %v1646, %v1806
  %1808 = vmatmul.f32.gmra.mxu0 %v88
  %v1809 = vpop.f32.mrf.mxu0
  %v1810 = vadd.f32 %v1649, %v1809
  %1811 = vmatmul.f32.gmra.mxu0 %v98
  %v1812 = vpop.f32.mrf.mxu0
  %v1813 = vadd.f32 %v1652, %v1812
  %1814 = vmatmul.f32.gmra.mxu0 %v108
  %v1815 = vpop.f32.mrf.mxu0
  %v1816 = vadd.f32 %v1655, %v1815
  %1817 = vmatmul.f32.gmra.mxu0 %v118
  %v1818 = vpop.f32.mrf.mxu0
  %v1819 = vadd.f32 %v1658, %v1818
  %1820 = vmatmul.f32.gmra.mxu0 %v128
  %v1821 = vpop.f32.mrf.mxu0
  %v1822 = vadd.f32 %v1661, %v1821
  %1823 = vmatmul.f32.gmra.mxu0 %v138
  %v1824 = vpop.f32.mrf.mxu0
  %v1825 = vadd.f32 %v1664, %v1824
  %1826 = vmatmul.f32.gmra.mxu0 %v148
  %v1827 = vpop.f32.mrf.mxu0
  %v1828 = vadd.f32 %v1667, %v1827
  %1829 = vmatmul.f32.gmra.mxu0 %v158
  %v1830 = vpop.f32.mrf.mxu0
  %v1831 = vadd.f32 %v1670, %v1830
  %1832 = vmatmul.f32.gmra.mxu0 %v168
  %v1833 = vpop.f32.mrf.mxu0
  %v1834 = vadd.f32 %v1673, %v1833
  %1835 = vmatmul.f32.gmra.mxu0 %v178
  %v1836 = vpop.f32.mrf.mxu0
  %v1837 = vadd.f32 %v1676, %v1836
  %1838 = vmatmul.f32.gmra.mxu0 %v188
  %v1839 = vpop.f32.mrf.mxu0
  %v1840 = vadd.f32 %v1679, %v1839
  %1841 = vmatmul.f32.gmra.mxu0 %v198
  %v1842 = vpop.f32.mrf.mxu0
  %v1843 = vadd.f32 %v1682, %v1842
  %1844 = vmatmul.f32.gmra.mxu0 %v208
  %v1845 = vpop.f32.mrf.mxu0
  %v1846 = vadd.f32 %v1685, %v1845
  %1847 = vmatmul.f32.gmra.mxu0 %v218
  %v1848 = vpop.f32.mrf.mxu0
  %v1849 = vadd.f32 %v1688, %v1848
  %1850 = vmatmul.f32.gmra.mxu0 %v228
  %v1851 = vpop.f32.mrf.mxu0
  %v1852 = vadd.f32 %v1691, %v1851
  %1853 = vmatmul.f32.gmra.mxu0 %v238
  %v1854 = vpop.f32.mrf.mxu0
  %v1855 = vadd.f32 %v1694, %v1854
  %1856 = vmatmul.f32.gmra.mxu0 %v248
  %v1857 = vpop.f32.mrf.mxu0
  %v1858 = vadd.f32 %v1697, %v1857
  %1859 = vmatmul.f32.gmra.mxu0 %v258
  %v1860 = vpop.f32.mrf.mxu0
  %v1861 = vadd.f32 %v1700, %v1860
  %1862 = vmatmul.f32.gmra.mxu0 %v268
  %v1863 = vpop.f32.mrf.mxu0
  %v1864 = vadd.f32 %v1703, %v1863
  %1865 = vmatmul.f32.gmra.mxu0 %v278
  %v1866 = vpop.f32.mrf.mxu0
  %v1867 = vadd.f32 %v1706, %v1866
  %1868 = vmatmul.f32.gmra.mxu0 %v288
  %v1869 = vpop.f32.mrf.mxu0
  %v1870 = vadd.f32 %v1709, %v1869
  %1871 = vmatmul.f32.gmra.mxu0 %v298
  %v1872 = vpop.f32.mrf.mxu0
  %v1873 = vadd.f32 %v1712, %v1872
  %1874 = vmatmul.f32.gmra.mxu0 %v308
  %v1875 = vpop.f32.mrf.mxu0
  %v1876 = vadd.f32 %v1715, %v1875
  %1877 = vmatmul.f32.gmra.mxu0 %v318
  %v1878 = vpop.f32.mrf.mxu0
  %v1879 = vadd.f32 %v1718, %v1878
  %1880 = vmatmul.f32.gmra.mxu0 %v328
  %v1881 = vpop.f32.mrf.mxu0
  %v1882 = vadd.f32 %v1721, %v1881
  %1883 = vmatmul.f32.gmra.mxu0 %v338
  %v1884 = vpop.f32.mrf.mxu0
  %v1885 = vadd.f32 %v1724, %v1884
  %1886 = vmatmul.f32.gmra.mxu0 %v348
  %v1887 = vpop.f32.mrf.mxu0
  %v1888 = vadd.f32 %v1727, %v1887
  %1889 = vmatmul.f32.gmra.mxu0 %v358
  %v1890 = vpop.f32.mrf.mxu0
  %v1891 = vadd.f32 %v1730, %v1890
  %1892 = vmatmul.f32.gmra.mxu0 %v368
  %v1893 = vpop.f32.mrf.mxu0
  %v1894 = vadd.f32 %v1733, %v1893
  %1895 = vmatmul.f32.gmra.mxu0 %v378
  %v1896 = vpop.f32.mrf.mxu0
  %v1897 = vadd.f32 %v1736, %v1896
  %1898 = vmatmul.f32.gmra.mxu0 %v388
  %v1899 = vpop.f32.mrf.mxu0
  %v1900 = vadd.f32 %v1739, %v1899
  %1901 = vmatmul.f32.gmra.mxu0 %v398
  %v1902 = vpop.f32.mrf.mxu0
  %v1903 = vadd.f32 %v1742, %v1902
  %1904 = vmatmul.f32.gmra.mxu0 %v408
  %v1905 = vpop.f32.mrf.mxu0
  %v1906 = vadd.f32 %v1745, %v1905
  %1907 = vmatmul.f32.gmra.mxu0 %v418
  %v1908 = vpop.f32.mrf.mxu0
  %v1909 = vadd.f32 %v1748, %v1908
  %1910 = vmatmul.f32.gmra.mxu0 %v428
  %v1911 = vpop.f32.mrf.mxu0
  %v1912 = vadd.f32 %v1751, %v1911
  %1913 = vmatmul.f32.gmra.mxu0 %v438
  %v1914 = vpop.f32.mrf.mxu0
  %v1915 = vadd.f32 %v1754, %v1914
  %1916 = vmatmul.f32.gmra.mxu0 %v448
  %v1917 = vpop.f32.mrf.mxu0
  %v1918 = vadd.f32 %v1757, %v1917
  %1919 = vmatmul.f32.gmra.mxu0 %v458
  %v1920 = vpop.f32.mrf.mxu0
  %v1921 = vadd.f32 %v1760, %v1920
  %1922 = vmatmul.f32.gmra.mxu0 %v468
  %v1923 = vpop.f32.mrf.mxu0
  %v1924 = vadd.f32 %v1763, %v1923
  %1925 = vmatmul.f32.gmra.mxu0 %v478
  %v1926 = vpop.f32.mrf.mxu0
  %v1927 = vadd.f32 %v1766, %v1926
  %1928 = vmatmul.f32.gmra.mxu0 %v488
  %v1929 = vpop.f32.mrf.mxu0
  %v1930 = vadd.f32 %v1769, %v1929
  %1931 = vmatmul.f32.gmra.mxu0 %v498
  %v1932 = vpop.f32.mrf.mxu0
  %v1933 = vadd.f32 %v1772, %v1932
  %1934 = vmatmul.f32.gmra.mxu0 %v508
  %v1935 = vpop.f32.mrf.mxu0
  %v1936 = vadd.f32 %v1775, %v1935
  %1937 = vdwg.mxu0
  %1938 = vmatpush.msra.mxu0 %v639
  %1939 = vmatpush.msra.mxu0 %v638
  %1940 = vmatpush.msra.mxu0 %v637
  %1941 = vmatpush.msra.mxu0 %v636
  %1942 = vmatpush.msra.mxu0 %v635
  %1943 = vmatpush.msra.mxu0 %v634
  %1944 = vmatpush.msra.mxu0 %v633
  %1945 = vmatpush.msra.mxu0 %v632
  %1946 = vmatpush.msra.mxu0 %v631
  %1947 = vmatpush.msra.mxu0 %v630
  %1948 = vmatpush.msra.mxu0 %v629
  %1949 = vmatpush.msra.mxu0 %v628
  %1950 = vmatpush.msra.mxu0 %v627
  %1951 = vmatpush.msra.mxu0 %v626
  %1952 = vmatpush.msra.mxu0 %v625
  %1953 = vmatpush.msra.mxu0 %v624
  %1954 = vmatmul.f32.gmra.mxu0 %v39
  %v1955 = vpop.f32.mrf.mxu0
  %v1956 = vadd.f32 %v1795, %v1955
  %1957 = vmatmul.f32.gmra.mxu0 %v49
  %v1958 = vpop.f32.mrf.mxu0
  %v1959 = vadd.f32 %v1798, %v1958
  %1960 = vmatmul.f32.gmra.mxu0 %v59
  %v1961 = vpop.f32.mrf.mxu0
  %v1962 = vadd.f32 %v1801, %v1961
  %1963 = vmatmul.f32.gmra.mxu0 %v69
  %v1964 = vpop.f32.mrf.mxu0
  %v1965 = vadd.f32 %v1804, %v1964
  %1966 = vmatmul.f32.gmra.mxu0 %v79
  %v1967 = vpop.f32.mrf.mxu0
  %v1968 = vadd.f32 %v1807, %v1967
  %1969 = vmatmul.f32.gmra.mxu0 %v89
  %v1970 = vpop.f32.mrf.mxu0
  %v1971 = vadd.f32 %v1810, %v1970
  %1972 = vmatmul.f32.gmra.mxu0 %v99
  %v1973 = vpop.f32.mrf.mxu0
  %v1974 = vadd.f32 %v1813, %v1973
  %1975 = vmatmul.f32.gmra.mxu0 %v109
  %v1976 = vpop.f32.mrf.mxu0
  %v1977 = vadd.f32 %v1816, %v1976
  %1978 = vmatmul.f32.gmra.mxu0 %v119
  %v1979 = vpop.f32.mrf.mxu0
  %v1980 = vadd.f32 %v1819, %v1979
  %1981 = vmatmul.f32.gmra.mxu0 %v129
  %v1982 = vpop.f32.mrf.mxu0
  %v1983 = vadd.f32 %v1822, %v1982
  %1984 = vmatmul.f32.gmra.mxu0 %v139
  %v1985 = vpop.f32.mrf.mxu0
  %v1986 = vadd.f32 %v1825, %v1985
  %1987 = vmatmul.f32.gmra.mxu0 %v149
  %v1988 = vpop.f32.mrf.mxu0
  %v1989 = vadd.f32 %v1828, %v1988
  %1990 = vmatmul.f32.gmra.mxu0 %v159
  %v1991 = vpop.f32.mrf.mxu0
  %v1992 = vadd.f32 %v1831, %v1991
  %1993 = vmatmul.f32.gmra.mxu0 %v169
  %v1994 = vpop.f32.mrf.mxu0
  %v1995 = vadd.f32 %v1834, %v1994
  %1996 = vmatmul.f32.gmra.mxu0 %v179
  %v1997 = vpop.f32.mrf.mxu0
  %v1998 = vadd.f32 %v1837, %v1997
  %1999 = vmatmul.f32.gmra.mxu0 %v189
  %v2000 = vpop.f32.mrf.mxu0
  %v2001 = vadd.f32 %v1840, %v2000
  %2002 = vmatmul.f32.gmra.mxu0 %v199
  %v2003 = vpop.f32.mrf.mxu0
  %v2004 = vadd.f32 %v1843, %v2003
  %2005 = vmatmul.f32.gmra.mxu0 %v209
  %v2006 = vpop.f32.mrf.mxu0
  %v2007 = vadd.f32 %v1846, %v2006
  %2008 = vmatmul.f32.gmra.mxu0 %v219
  %v2009 = vpop.f32.mrf.mxu0
  %v2010 = vadd.f32 %v1849, %v2009
  %2011 = vmatmul.f32.gmra.mxu0 %v229
  %v2012 = vpop.f32.mrf.mxu0
  %v2013 = vadd.f32 %v1852, %v2012
  %2014 = vmatmul.f32.gmra.mxu0 %v239
  %v2015 = vpop.f32.mrf.mxu0
  %v2016 = vadd.f32 %v1855, %v2015
  %2017 = vmatmul.f32.gmra.mxu0 %v249
  %v2018 = vpop.f32.mrf.mxu0
  %v2019 = vadd.f32 %v1858, %v2018
  %2020 = vmatmul.f32.gmra.mxu0 %v259
  %v2021 = vpop.f32.mrf.mxu0
  %v2022 = vadd.f32 %v1861, %v2021
  %2023 = vmatmul.f32.gmra.mxu0 %v269
  %v2024 = vpop.f32.mrf.mxu0
  %v2025 = vadd.f32 %v1864, %v2024
  %2026 = vmatmul.f32.gmra.mxu0 %v279
  %v2027 = vpop.f32.mrf.mxu0
  %v2028 = vadd.f32 %v1867, %v2027
  %2029 = vmatmul.f32.gmra.mxu0 %v289
  %v2030 = vpop.f32.mrf.mxu0
  %v2031 = vadd.f32 %v1870, %v2030
  %2032 = vmatmul.f32.gmra.mxu0 %v299
  %v2033 = vpop.f32.mrf.mxu0
  %v2034 = vadd.f32 %v1873, %v2033
  %2035 = vmatmul.f32.gmra.mxu0 %v309
  %v2036 = vpop.f32.mrf.mxu0
  %v2037 = vadd.f32 %v1876, %v2036
  %2038 = vmatmul.f32.gmra.mxu0 %v319
  %v2039 = vpop.f32.mrf.mxu0
  %v2040 = vadd.f32 %v1879, %v2039
  %2041 = vmatmul.f32.gmra.mxu0 %v329
  %v2042 = vpop.f32.mrf.mxu0
  %v2043 = vadd.f32 %v1882, %v2042
  %2044 = vmatmul.f32.gmra.mxu0 %v339
  %v2045 = vpop.f32.mrf.mxu0
  %v2046 = vadd.f32 %v1885, %v2045
  %2047 = vmatmul.f32.gmra.mxu0 %v349
  %v2048 = vpop.f32.mrf.mxu0
  %v2049 = vadd.f32 %v1888, %v2048
  %2050 = vmatmul.f32.gmra.mxu0 %v359
  %v2051 = vpop.f32.mrf.mxu0
  %v2052 = vadd.f32 %v1891, %v2051
  %2053 = vmatmul.f32.gmra.mxu0 %v369
  %v2054 = vpop.f32.mrf.mxu0
  %v2055 = vadd.f32 %v1894, %v2054
  %2056 = vmatmul.f32.gmra.mxu0 %v379
  %v2057 = vpop.f32.mrf.mxu0
  %v2058 = vadd.f32 %v1897, %v2057
  %2059 = vmatmul.f32.gmra.mxu0 %v389
  %v2060 = vpop.f32.mrf.mxu0
  %v2061 = vadd.f32 %v1900, %v2060
  %2062 = vmatmul.f32.gmra.mxu0 %v399
  %v2063 = vpop.f32.mrf.mxu0
  %v2064 = vadd.f32 %v1903, %v2063
  %2065 = vmatmul.f32.gmra.mxu0 %v409
  %v2066 = vpop.f32.mrf.mxu0
  %v2067 = vadd.f32 %v1906, %v2066
  %2068 = vmatmul.f32.gmra.mxu0 %v419
  %v2069 = vpop.f32.mrf.mxu0
  %v2070 = vadd.f32 %v1909, %v2069
  %2071 = vmatmul.f32.gmra.mxu0 %v429
  %v2072 = vpop.f32.mrf.mxu0
  %v2073 = vadd.f32 %v1912, %v2072
  %2074 = vmatmul.f32.gmra.mxu0 %v439
  %v2075 = vpop.f32.mrf.mxu0
  %v2076 = vadd.f32 %v1915, %v2075
  %2077 = vmatmul.f32.gmra.mxu0 %v449
  %v2078 = vpop.f32.mrf.mxu0
  %v2079 = vadd.f32 %v1918, %v2078
  %2080 = vmatmul.f32.gmra.mxu0 %v459
  %v2081 = vpop.f32.mrf.mxu0
  %v2082 = vadd.f32 %v1921, %v2081
  %2083 = vmatmul.f32.gmra.mxu0 %v469
  %v2084 = vpop.f32.mrf.mxu0
  %v2085 = vadd.f32 %v1924, %v2084
  %2086 = vmatmul.f32.gmra.mxu0 %v479
  %v2087 = vpop.f32.mrf.mxu0
  %v2088 = vadd.f32 %v1927, %v2087
  %2089 = vmatmul.f32.gmra.mxu0 %v489
  %v2090 = vpop.f32.mrf.mxu0
  %v2091 = vadd.f32 %v1930, %v2090
  %2092 = vmatmul.f32.gmra.mxu0 %v499
  %v2093 = vpop.f32.mrf.mxu0
  %v2094 = vadd.f32 %v1933, %v2093
  %2095 = vmatmul.f32.gmra.mxu0 %v509
  %v2096 = vpop.f32.mrf.mxu0
  %v2097 = vadd.f32 %v1936, %v2096
  %2098 = vdwg.mxu0
  %2099 = vmatpush.msra.mxu0 %v655
  %2100 = vmatpush.msra.mxu0 %v654
  %2101 = vmatpush.msra.mxu0 %v653
  %2102 = vmatpush.msra.mxu0 %v652
  %2103 = vmatpush.msra.mxu0 %v651
  %2104 = vmatpush.msra.mxu0 %v650
  %2105 = vmatpush.msra.mxu0 %v649
  %2106 = vmatpush.msra.mxu0 %v648
  %2107 = vmatpush.msra.mxu0 %v647
  %2108 = vmatpush.msra.mxu0 %v646
  %2109 = vmatpush.msra.mxu0 %v645
  %2110 = vmatpush.msra.mxu0 %v644
  %2111 = vmatpush.msra.mxu0 %v643
  %2112 = vmatpush.msra.mxu0 %v642
  %2113 = vmatpush.msra.mxu0 %v641
  %2114 = vmatpush.msra.mxu0 %v640
  %2115 = vmatmul.f32.gmra.mxu0 %v40
  %v2116 = vpop.f32.mrf.mxu0
  %v2117 = vadd.f32 %v1956, %v2116
  %2118 = vmatmul.f32.gmra.mxu0 %v50
  %v2119 = vpop.f32.mrf.mxu0
  %v2120 = vadd.f32 %v1959, %v2119
  %2121 = vmatmul.f32.gmra.mxu0 %v60
  %v2122 = vpop.f32.mrf.mxu0
  %v2123 = vadd.f32 %v1962, %v2122
  %2124 = vmatmul.f32.gmra.mxu0 %v70
  %v2125 = vpop.f32.mrf.mxu0
  %v2126 = vadd.f32 %v1965, %v2125
  %2127 = vmatmul.f32.gmra.mxu0 %v80
  %v2128 = vpop.f32.mrf.mxu0
  %v2129 = vadd.f32 %v1968, %v2128
  %2130 = vmatmul.f32.gmra.mxu0 %v90
  %v2131 = vpop.f32.mrf.mxu0
  %v2132 = vadd.f32 %v1971, %v2131
  %2133 = vmatmul.f32.gmra.mxu0 %v100
  %v2134 = vpop.f32.mrf.mxu0
  %v2135 = vadd.f32 %v1974, %v2134
  %2136 = vmatmul.f32.gmra.mxu0 %v110
  %v2137 = vpop.f32.mrf.mxu0
  %v2138 = vadd.f32 %v1977, %v2137
  %2139 = vmatmul.f32.gmra.mxu0 %v120
  %v2140 = vpop.f32.mrf.mxu0
  %v2141 = vadd.f32 %v1980, %v2140
  %2142 = vmatmul.f32.gmra.mxu0 %v130
  %v2143 = vpop.f32.mrf.mxu0
  %v2144 = vadd.f32 %v1983, %v2143
  %2145 = vmatmul.f32.gmra.mxu0 %v140
  %v2146 = vpop.f32.mrf.mxu0
  %v2147 = vadd.f32 %v1986, %v2146
  %2148 = vmatmul.f32.gmra.mxu0 %v150
  %v2149 = vpop.f32.mrf.mxu0
  %v2150 = vadd.f32 %v1989, %v2149
  %2151 = vmatmul.f32.gmra.mxu0 %v160
  %v2152 = vpop.f32.mrf.mxu0
  %v2153 = vadd.f32 %v1992, %v2152
  %2154 = vmatmul.f32.gmra.mxu0 %v170
  %v2155 = vpop.f32.mrf.mxu0
  %v2156 = vadd.f32 %v1995, %v2155
  %2157 = vmatmul.f32.gmra.mxu0 %v180
  %v2158 = vpop.f32.mrf.mxu0
  %v2159 = vadd.f32 %v1998, %v2158
  %2160 = vmatmul.f32.gmra.mxu0 %v190
  %v2161 = vpop.f32.mrf.mxu0
  %v2162 = vadd.f32 %v2001, %v2161
  %2163 = vmatmul.f32.gmra.mxu0 %v200
  %v2164 = vpop.f32.mrf.mxu0
  %v2165 = vadd.f32 %v2004, %v2164
  %2166 = vmatmul.f32.gmra.mxu0 %v210
  %v2167 = vpop.f32.mrf.mxu0
  %v2168 = vadd.f32 %v2007, %v2167
  %2169 = vmatmul.f32.gmra.mxu0 %v220
  %v2170 = vpop.f32.mrf.mxu0
  %v2171 = vadd.f32 %v2010, %v2170
  %2172 = vmatmul.f32.gmra.mxu0 %v230
  %v2173 = vpop.f32.mrf.mxu0
  %v2174 = vadd.f32 %v2013, %v2173
  %2175 = vmatmul.f32.gmra.mxu0 %v240
  %v2176 = vpop.f32.mrf.mxu0
  %v2177 = vadd.f32 %v2016, %v2176
  %2178 = vmatmul.f32.gmra.mxu0 %v250
  %v2179 = vpop.f32.mrf.mxu0
  %v2180 = vadd.f32 %v2019, %v2179
  %2181 = vmatmul.f32.gmra.mxu0 %v260
  %v2182 = vpop.f32.mrf.mxu0
  %v2183 = vadd.f32 %v2022, %v2182
  %2184 = vmatmul.f32.gmra.mxu0 %v270
  %v2185 = vpop.f32.mrf.mxu0
  %v2186 = vadd.f32 %v2025, %v2185
  %2187 = vmatmul.f32.gmra.mxu0 %v280
  %v2188 = vpop.f32.mrf.mxu0
  %v2189 = vadd.f32 %v2028, %v2188
  %2190 = vmatmul.f32.gmra.mxu0 %v290
  %v2191 = vpop.f32.mrf.mxu0
  %v2192 = vadd.f32 %v2031, %v2191
  %2193 = vmatmul.f32.gmra.mxu0 %v300
  %v2194 = vpop.f32.mrf.mxu0
  %v2195 = vadd.f32 %v2034, %v2194
  %2196 = vmatmul.f32.gmra.mxu0 %v310
  %v2197 = vpop.f32.mrf.mxu0
  %v2198 = vadd.f32 %v2037, %v2197
  %2199 = vmatmul.f32.gmra.mxu0 %v320
  %v2200 = vpop.f32.mrf.mxu0
  %v2201 = vadd.f32 %v2040, %v2200
  %2202 = vmatmul.f32.gmra.mxu0 %v330
  %v2203 = vpop.f32.mrf.mxu0
  %v2204 = vadd.f32 %v2043, %v2203
  %2205 = vmatmul.f32.gmra.mxu0 %v340
  %v2206 = vpop.f32.mrf.mxu0
  %v2207 = vadd.f32 %v2046, %v2206
  %2208 = vmatmul.f32.gmra.mxu0 %v350
  %v2209 = vpop.f32.mrf.mxu0
  %v2210 = vadd.f32 %v2049, %v2209
  %2211 = vmatmul.f32.gmra.mxu0 %v360
  %v2212 = vpop.f32.mrf.mxu0
  %v2213 = vadd.f32 %v2052, %v2212
  %2214 = vmatmul.f32.gmra.mxu0 %v370
  %v2215 = vpop.f32.mrf.mxu0
  %v2216 = vadd.f32 %v2055, %v2215
  %2217 = vmatmul.f32.gmra.mxu0 %v380
  %v2218 = vpop.f32.mrf.mxu0
  %v2219 = vadd.f32 %v2058, %v2218
  %2220 = vmatmul.f32.gmra.mxu0 %v390
  %v2221 = vpop.f32.mrf.mxu0
  %v2222 = vadd.f32 %v2061, %v2221
  %2223 = vmatmul.f32.gmra.mxu0 %v400
  %v2224 = vpop.f32.mrf.mxu0
  %v2225 = vadd.f32 %v2064, %v2224
  %2226 = vmatmul.f32.gmra.mxu0 %v410
  %v2227 = vpop.f32.mrf.mxu0
  %v2228 = vadd.f32 %v2067, %v2227
  %2229 = vmatmul.f32.gmra.mxu0 %v420
  %v2230 = vpop.f32.mrf.mxu0
  %v2231 = vadd.f32 %v2070, %v2230
  %2232 = vmatmul.f32.gmra.mxu0 %v430
  %v2233 = vpop.f32.mrf.mxu0
  %v2234 = vadd.f32 %v2073, %v2233
  %2235 = vmatmul.f32.gmra.mxu0 %v440
  %v2236 = vpop.f32.mrf.mxu0
  %v2237 = vadd.f32 %v2076, %v2236
  %2238 = vmatmul.f32.gmra.mxu0 %v450
  %v2239 = vpop.f32.mrf.mxu0
  %v2240 = vadd.f32 %v2079, %v2239
  %2241 = vmatmul.f32.gmra.mxu0 %v460
  %v2242 = vpop.f32.mrf.mxu0
  %v2243 = vadd.f32 %v2082, %v2242
  %2244 = vmatmul.f32.gmra.mxu0 %v470
  %v2245 = vpop.f32.mrf.mxu0
  %v2246 = vadd.f32 %v2085, %v2245
  %2247 = vmatmul.f32.gmra.mxu0 %v480
  %v2248 = vpop.f32.mrf.mxu0
  %v2249 = vadd.f32 %v2088, %v2248
  %2250 = vmatmul.f32.gmra.mxu0 %v490
  %v2251 = vpop.f32.mrf.mxu0
  %v2252 = vadd.f32 %v2091, %v2251
  %2253 = vmatmul.f32.gmra.mxu0 %v500
  %v2254 = vpop.f32.mrf.mxu0
  %v2255 = vadd.f32 %v2094, %v2254
  %2256 = vmatmul.f32.gmra.mxu0 %v510
  %v2257 = vpop.f32.mrf.mxu0
  %v2258 = vadd.f32 %v2097, %v2257
  %2259 = vdwg.mxu0
  %2260 = vmatpush.msra.mxu0 0.0
  %2261 = vmatpush.msra.mxu0 0.0
  %2262 = vmatpush.msra.mxu0 0.0
  %2263 = vmatpush.msra.mxu0 0.0
  %2264 = vmatpush.msra.mxu0 0.0
  %2265 = vmatpush.msra.mxu0 0.0
  %2266 = vmatpush.msra.mxu0 0.0
  %2267 = vmatpush.msra.mxu0 0.0
  %2268 = vmatpush.msra.mxu0 0.0
  %2269 = vmatpush.msra.mxu0 0.0
  %2270 = vmatpush.msra.mxu0 %v661
  %2271 = vmatpush.msra.mxu0 %v660
  %2272 = vmatpush.msra.mxu0 %v659
  %2273 = vmatpush.msra.mxu0 %v658
  %2274 = vmatpush.msra.mxu0 %v657
  %2275 = vmatpush.msra.mxu0 %v656
  %2276 = vmatmul.f32.gmra.mxu0 %v668
  %v2277 = vpop.f32.mrf.mxu0
  %v2278 = vadd.f32 %v2117, %v2277
  %2279 = vmatmul.f32.gmra.mxu0 %v671
  %v2280 = vpop.f32.mrf.mxu0
  %v2281 = vadd.f32 %v2120, %v2280
  %2282 = vmatmul.f32.gmra.mxu0 %v674
  %v2283 = vpop.f32.mrf.mxu0
  %v2284 = vadd.f32 %v2123, %v2283
  %2285 = vmatmul.f32.gmra.mxu0 %v677
  %v2286 = vpop.f32.mrf.mxu0
  %v2287 = vadd.f32 %v2126, %v2286
  %2288 = vmatmul.f32.gmra.mxu0 %v680
  %v2289 = vpop.f32.mrf.mxu0
  %v2290 = vadd.f32 %v2129, %v2289
  %2291 = vmatmul.f32.gmra.mxu0 %v683
  %v2292 = vpop.f32.mrf.mxu0
  %v2293 = vadd.f32 %v2132, %v2292
  %2294 = vmatmul.f32.gmra.mxu0 %v686
  %v2295 = vpop.f32.mrf.mxu0
  %v2296 = vadd.f32 %v2135, %v2295
  %2297 = vmatmul.f32.gmra.mxu0 %v689
  %v2298 = vpop.f32.mrf.mxu0
  %v2299 = vadd.f32 %v2138, %v2298
  %2300 = vmatmul.f32.gmra.mxu0 %v692
  %v2301 = vpop.f32.mrf.mxu0
  %v2302 = vadd.f32 %v2141, %v2301
  %2303 = vmatmul.f32.gmra.mxu0 %v695
  %v2304 = vpop.f32.mrf.mxu0
  %v2305 = vadd.f32 %v2144, %v2304
  %2306 = vmatmul.f32.gmra.mxu0 %v698
  %v2307 = vpop.f32.mrf.mxu0
  %v2308 = vadd.f32 %v2147, %v2307
  %2309 = vmatmul.f32.gmra.mxu0 %v701
  %v2310 = vpop.f32.mrf.mxu0
  %v2311 = vadd.f32 %v2150, %v2310
  %2312 = vmatmul.f32.gmra.mxu0 %v704
  %v2313 = vpop.f32.mrf.mxu0
  %v2314 = vadd.f32 %v2153, %v2313
  %2315 = vmatmul.f32.gmra.mxu0 %v707
  %v2316 = vpop.f32.mrf.mxu0
  %v2317 = vadd.f32 %v2156, %v2316
  %2318 = vmatmul.f32.gmra.mxu0 %v710
  %v2319 = vpop.f32.mrf.mxu0
  %v2320 = vadd.f32 %v2159, %v2319
  %2321 = vmatmul.f32.gmra.mxu0 %v713
  %v2322 = vpop.f32.mrf.mxu0
  %v2323 = vadd.f32 %v2162, %v2322
  %2324 = vmatmul.f32.gmra.mxu0 %v716
  %v2325 = vpop.f32.mrf.mxu0
  %v2326 = vadd.f32 %v2165, %v2325
  %2327 = vmatmul.f32.gmra.mxu0 %v719
  %v2328 = vpop.f32.mrf.mxu0
  %v2329 = vadd.f32 %v2168, %v2328
  %2330 = vmatmul.f32.gmra.mxu0 %v722
  %v2331 = vpop.f32.mrf.mxu0
  %v2332 = vadd.f32 %v2171, %v2331
  %2333 = vmatmul.f32.gmra.mxu0 %v725
  %v2334 = vpop.f32.mrf.mxu0
  %v2335 = vadd.f32 %v2174, %v2334
  %2336 = vmatmul.f32.gmra.mxu0 %v728
  %v2337 = vpop.f32.mrf.mxu0
  %v2338 = vadd.f32 %v2177, %v2337
  %2339 = vmatmul.f32.gmra.mxu0 %v731
  %v2340 = vpop.f32.mrf.mxu0
  %v2341 = vadd.f32 %v2180, %v2340
  %2342 = vmatmul.f32.gmra.mxu0 %v734
  %v2343 = vpop.f32.mrf.mxu0
  %v2344 = vadd.f32 %v2183, %v2343
  %2345 = vmatmul.f32.gmra.mxu0 %v737
  %v2346 = vpop.f32.mrf.mxu0
  %v2347 = vadd.f32 %v2186, %v2346
  %2348 = vmatmul.f32.gmra.mxu0 %v740
  %v2349 = vpop.f32.mrf.mxu0
  %v2350 = vadd.f32 %v2189, %v2349
  %2351 = vmatmul.f32.gmra.mxu0 %v743
  %v2352 = vpop.f32.mrf.mxu0
  %v2353 = vadd.f32 %v2192, %v2352
  %2354 = vmatmul.f32.gmra.mxu0 %v746
  %v2355 = vpop.f32.mrf.mxu0
  %v2356 = vadd.f32 %v2195, %v2355
  %2357 = vmatmul.f32.gmra.mxu0 %v749
  %v2358 = vpop.f32.mrf.mxu0
  %v2359 = vadd.f32 %v2198, %v2358
  %2360 = vmatmul.f32.gmra.mxu0 %v752
  %v2361 = vpop.f32.mrf.mxu0
  %v2362 = vadd.f32 %v2201, %v2361
  %2363 = vmatmul.f32.gmra.mxu0 %v755
  %v2364 = vpop.f32.mrf.mxu0
  %v2365 = vadd.f32 %v2204, %v2364
  %2366 = vmatmul.f32.gmra.mxu0 %v758
  %v2367 = vpop.f32.mrf.mxu0
  %v2368 = vadd.f32 %v2207, %v2367
  %2369 = vmatmul.f32.gmra.mxu0 %v761
  %v2370 = vpop.f32.mrf.mxu0
  %v2371 = vadd.f32 %v2210, %v2370
  %2372 = vmatmul.f32.gmra.mxu0 %v764
  %v2373 = vpop.f32.mrf.mxu0
  %v2374 = vadd.f32 %v2213, %v2373
  %2375 = vmatmul.f32.gmra.mxu0 %v767
  %v2376 = vpop.f32.mrf.mxu0
  %v2377 = vadd.f32 %v2216, %v2376
  %2378 = vmatmul.f32.gmra.mxu0 %v770
  %v2379 = vpop.f32.mrf.mxu0
  %v2380 = vadd.f32 %v2219, %v2379
  %2381 = vmatmul.f32.gmra.mxu0 %v773
  %v2382 = vpop.f32.mrf.mxu0
  %v2383 = vadd.f32 %v2222, %v2382
  %2384 = vmatmul.f32.gmra.mxu0 %v776
  %v2385 = vpop.f32.mrf.mxu0
  %v2386 = vadd.f32 %v2225, %v2385
  %2387 = vmatmul.f32.gmra.mxu0 %v779
  %v2388 = vpop.f32.mrf.mxu0
  %v2389 = vadd.f32 %v2228, %v2388
  %2390 = vmatmul.f32.gmra.mxu0 %v782
  %v2391 = vpop.f32.mrf.mxu0
  %v2392 = vadd.f32 %v2231, %v2391
  %2393 = vmatmul.f32.gmra.mxu0 %v785
  %v2394 = vpop.f32.mrf.mxu0
  %v2395 = vadd.f32 %v2234, %v2394
  %2396 = vmatmul.f32.gmra.mxu0 %v788
  %v2397 = vpop.f32.mrf.mxu0
  %v2398 = vadd.f32 %v2237, %v2397
  %2399 = vmatmul.f32.gmra.mxu0 %v791
  %v2400 = vpop.f32.mrf.mxu0
  %v2401 = vadd.f32 %v2240, %v2400
  %2402 = vmatmul.f32.gmra.mxu0 %v794
  %v2403 = vpop.f32.mrf.mxu0
  %v2404 = vadd.f32 %v2243, %v2403
  %2405 = vmatmul.f32.gmra.mxu0 %v797
  %v2406 = vpop.f32.mrf.mxu0
  %v2407 = vadd.f32 %v2246, %v2406
  %2408 = vmatmul.f32.gmra.mxu0 %v800
  %v2409 = vpop.f32.mrf.mxu0
  %v2410 = vadd.f32 %v2249, %v2409
  %2411 = vmatmul.f32.gmra.mxu0 %v803
  %v2412 = vpop.f32.mrf.mxu0
  %v2413 = vadd.f32 %v2252, %v2412
  %2414 = vmatmul.f32.gmra.mxu0 %v806
  %v2415 = vpop.f32.mrf.mxu0
  %v2416 = vadd.f32 %v2255, %v2415
  %2417 = vmatmul.f32.gmra.mxu0 %v809
  %v2418 = vpop.f32.mrf.mxu0
  %v2419 = vadd.f32 %v2258, %v2418
  %2420 = vdwg.mxu0
  %v2421 = vmax.f32 %v2278, 0.0
  %v2422 = vmax.f32 %v2281, 0.0
  %v2423 = vmax.f32 %v2284, 0.0
  %v2424 = vmax.f32 %v2287, 0.0
  %v2425 = vmax.f32 %v2290, 0.0
  %v2426 = vmax.f32 %v2293, 0.0
  %v2427 = vmax.f32 %v2296, 0.0
  %v2428 = vmax.f32 %v2299, 0.0
  %v2429 = vmax.f32 %v2302, 0.0
  %v2430 = vmax.f32 %v2305, 0.0
  %v2431 = vmax.f32 %v2308, 0.0
  %v2432 = vmax.f32 %v2311, 0.0
  %v2433 = vmax.f32 %v2314, 0.0
  %v2434 = vmax.f32 %v2317, 0.0
  %v2435 = vmax.f32 %v2320, 0.0
  %v2436 = vmax.f32 %v2323, 0.0
  %v2437 = vmax.f32 %v2326, 0.0
  %v2438 = vmax.f32 %v2329, 0.0
  %v2439 = vmax.f32 %v2332, 0.0
  %v2440 = vmax.f32 %v2335, 0.0
  %v2441 = vmax.f32 %v2338, 0.0
  %v2442 = vmax.f32 %v2341, 0.0
  %v2443 = vmax.f32 %v2344, 0.0
  %v2444 = vmax.f32 %v2347, 0.0
  %v2445 = vmax.f32 %v2350, 0.0
  %v2446 = vmax.f32 %v2353, 0.0
  %v2447 = vmax.f32 %v2356, 0.0
  %v2448 = vmax.f32 %v2359, 0.0
  %v2449 = vmax.f32 %v2362, 0.0
  %v2450 = vmax.f32 %v2365, 0.0
  %v2451 = vmax.f32 %v2368, 0.0
  %v2452 = vmax.f32 %v2371, 0.0
  %v2453 = vmax.f32 %v2374, 0.0
  %v2454 = vmax.f32 %v2377, 0.0
  %v2455 = vmax.f32 %v2380, 0.0
  %v2456 = vmax.f32 %v2383, 0.0
  %v2457 = vmax.f32 %v2386, 0.0
  %v2458 = vmax.f32 %v2389, 0.0
  %v2459 = vmax.f32 %v2392, 0.0
  %v2460 = vmax.f32 %v2395, 0.0
  %v2461 = vmax.f32 %v2398, 0.0
  %v2462 = vmax.f32 %v2401, 0.0
  %v2463 = vmax.f32 %v2404, 0.0
  %v2464 = vmax.f32 %v2407, 0.0
  %v2465 = vmax.f32 %v2410, 0.0
  %v2466 = vmax.f32 %v2413, 0.0
  %v2467 = vmax.f32 %v2416, 0.0
  %v2468 = vmax.f32 %v2419, 0.0
  %vm2469 = vcmask 523264
  %2470 = vst.msk [vmem:[#allocation2] sm:$0xff] %vm2469, %v2421
  %2471 = vst.msk [vmem:[#allocation2 + $0x8] sm:$0xff] %vm2469, %v2422
  %2472 = vst.msk [vmem:[#allocation2 + $0x10] sm:$0xff] %vm2469, %v2423
  %2473 = vst.msk [vmem:[#allocation2 + $0x18] sm:$0xff] %vm2469, %v2424
  %2474 = vst.msk [vmem:[#allocation2 + $0x20] sm:$0xff] %vm2469, %v2425
  %2475 = vst.msk [vmem:[#allocation2 + $0x28] sm:$0xff] %vm2469, %v2426
  %2476 = vst.msk [vmem:[#allocation2 + $0x30] sm:$0xff] %vm2469, %v2427
  %2477 = vst.msk [vmem:[#allocation2 + $0x38] sm:$0xff] %vm2469, %v2428
  %2478 = vst.msk [vmem:[#allocation2 + $0x40] sm:$0xff] %vm2469, %v2429
  %2479 = vst.msk [vmem:[#allocation2 + $0x48] sm:$0xff] %vm2469, %v2430
  %2480 = vst.msk [vmem:[#allocation2 + $0x50] sm:$0xff] %vm2469, %v2431
  %2481 = vst.msk [vmem:[#allocation2 + $0x58] sm:$0xff] %vm2469, %v2432
  %2482 = vst.msk [vmem:[#allocation2 + $0x60] sm:$0xff] %vm2469, %v2433
  %2483 = vst.msk [vmem:[#allocation2 + $0x68] sm:$0xff] %vm2469, %v2434
  %2484 = vst.msk [vmem:[#allocation2 + $0x70] sm:$0xff] %vm2469, %v2435
  %2485 = vst.msk [vmem:[#allocation2 + $0x78] sm:$0xff] %vm2469, %v2436
  %2486 = vst.msk [vmem:[#allocation2 + $0x80] sm:$0xff] %vm2469, %v2437
  %2487 = vst.msk [vmem:[#allocation2 + $0x88] sm:$0xff] %vm2469, %v2438
  %2488 = vst.msk [vmem:[#allocation2 + $0x90] sm:$0xff] %vm2469, %v2439
  %2489 = vst.msk [vmem:[#allocation2 + $0x98] sm:$0xff] %vm2469, %v2440
  %2490 = vst.msk [vmem:[#allocation2 + $0xa0] sm:$0xff] %vm2469, %v2441
  %2491 = vst.msk [vmem:[#allocation2 + $0xa8] sm:$0xff] %vm2469, %v2442
  %2492 = vst.msk [vmem:[#allocation2 + $0xb0] sm:$0xff] %vm2469, %v2443
  %2493 = vst.msk [vmem:[#allocation2 + $0xb8] sm:$0xff] %vm2469, %v2444
  %2494 = vst.msk [vmem:[#allocation2 + $0xc0] sm:$0xff] %vm2469, %v2445
  %2495 = vst.msk [vmem:[#allocation2 + $0xc8] sm:$0xff] %vm2469, %v2446
  %2496 = vst.msk [vmem:[#allocation2 + $0xd0] sm:$0xff] %vm2469, %v2447
  %2497 = vst.msk [vmem:[#allocation2 + $0xd8] sm:$0xff] %vm2469, %v2448
  %2498 = vst.msk [vmem:[#allocation2 + $0xe0] sm:$0xff] %vm2469, %v2449
  %2499 = vst.msk [vmem:[#allocation2 + $0xe8] sm:$0xff] %vm2469, %v2450
  %2500 = vst.msk [vmem:[#allocation2 + $0xf0] sm:$0xff] %vm2469, %v2451
  %2501 = vst.msk [vmem:[#allocation2 + $0xf8] sm:$0xff] %vm2469, %v2452
  %2502 = vst.msk [vmem:[#allocation2 + $0x100] sm:$0xff] %vm2469, %v2453
  %2503 = vst.msk [vmem:[#allocation2 + $0x108] sm:$0xff] %vm2469, %v2454
  %2504 = vst.msk [vmem:[#allocation2 + $0x110] sm:$0xff] %vm2469, %v2455
  %2505 = vst.msk [vmem:[#allocation2 + $0x118] sm:$0xff] %vm2469, %v2456
  %2506 = vst.msk [vmem:[#allocation2 + $0x120] sm:$0xff] %vm2469, %v2457
  %2507 = vst.msk [vmem:[#allocation2 + $0x128] sm:$0xff] %vm2469, %v2458
  %2508 = vst.msk [vmem:[#allocation2 + $0x130] sm:$0xff] %vm2469, %v2459
  %2509 = vst.msk [vmem:[#allocation2 + $0x138] sm:$0xff] %vm2469, %v2460
  %2510 = vst.msk [vmem:[#allocation2 + $0x140] sm:$0xff] %vm2469, %v2461
  %2511 = vst.msk [vmem:[#allocation2 + $0x148] sm:$0xff] %vm2469, %v2462
  %2512 = vst.msk [vmem:[#allocation2 + $0x150] sm:$0xff] %vm2469, %v2463
  %2513 = vst.msk [vmem:[#allocation2 + $0x158] sm:$0xff] %vm2469, %v2464
  %2514 = vst.msk [vmem:[#allocation2 + $0x160] sm:$0xff] %vm2469, %v2465
  %2515 = vst.msk [vmem:[#allocation2 + $0x168] sm:$0xff] %vm2469, %v2466
  %2516 = vst.msk [vmem:[#allocation2 + $0x170] sm:$0xff] %vm2469, %v2467
  %2517 = vst.msk [vmem:[#allocation2 + $0x178] sm:$0xff] %vm2469, %v2468
  %v2518 = vld [vmem:[#allocation2] ss:$6 sm:$0xff]
  %s2519 = scalar_lea.vmem [#allocation2], 48
  %v2520 = vld [vmem:[%s2519] ss:$6 sm:$0xff]
  %s2521 = scalar_lea.vmem [#allocation2], 96
  %v2522 = vld [vmem:[%s2521] ss:$6 sm:$0xff]
  %s2523 = scalar_lea.vmem [#allocation2], 144
  %v2524 = vld [vmem:[%s2523] ss:$6 sm:$0xff]
  %s2525 = scalar_lea.vmem [#allocation2], 192
  %v2526 = vld [vmem:[%s2525] ss:$6 sm:$0xff]
  %s2527 = scalar_lea.vmem [#allocation2], 240
  %v2528 = vld [vmem:[%s2527] ss:$6 sm:$0xff]
  %s2529 = scalar_lea.vmem [#allocation2], 288
  %v2530 = vld [vmem:[%s2529] ss:$6 sm:$0xff]
  %s2531 = scalar_lea.vmem [#allocation2], 336
  %v2532 = vld [vmem:[%s2531] ss:$6 sm:$0xff]
  %s2533 = scalar_lea.vmem [#allocation2], 1
  %v2534 = vld [vmem:[%s2533] ss:$6 sm:$0xff]
  %s2535 = scalar_lea.vmem [#allocation2], 49
  %v2536 = vld [vmem:[%s2535] ss:$6 sm:$0xff]
  %s2537 = scalar_lea.vmem [#allocation2], 97
  %v2538 = vld [vmem:[%s2537] ss:$6 sm:$0xff]
  %s2539 = scalar_lea.vmem [#allocation2], 145
  %v2540 = vld [vmem:[%s2539] ss:$6 sm:$0xff]
  %s2541 = scalar_lea.vmem [#allocation2], 193
  %v2542 = vld [vmem:[%s2541] ss:$6 sm:$0xff]
  %s2543 = scalar_lea.vmem [#allocation2], 241
  %v2544 = vld [vmem:[%s2543] ss:$6 sm:$0xff]
  %s2545 = scalar_lea.vmem [#allocation2], 289
  %v2546 = vld [vmem:[%s2545] ss:$6 sm:$0xff]
  %s2547 = scalar_lea.vmem [#allocation2], 337
  %v2548 = vld [vmem:[%s2547] ss:$6 sm:$0xff]
  %v2549 = vmax.f32 %v2518, %v2534
  %v2550 = vmax.f32 %v2520, %v2536
  %v2551 = vmax.f32 %v2522, %v2538
  %v2552 = vmax.f32 %v2524, %v2540
  %v2553 = vmax.f32 %v2526, %v2542
  %v2554 = vmax.f32 %v2528, %v2544
  %v2555 = vmax.f32 %v2530, %v2546
  %v2556 = vmax.f32 %v2532, %v2548
  %v2557 = vld [vmem:[%s3] sm:$0xff]
  %v2558 = vld [vmem:[%s3 + $0x8] sm:$0xff]
  %v2559 = vld [vmem:[%s3 + $0x10] sm:$0xff]
  %v2560 = vld [vmem:[%s3 + $0x18] sm:$0xff]
  %v2561 = vld [vmem:[%s3 + $0x20] sm:$0xff]
  %v2562 = vld [vmem:[%s3 + $0x28] sm:$0xff]
  %v2563 = vld [vmem:[%s3 + $0x30] sm:$0xff]
  %v2564 = vld [vmem:[%s3 + $0x38] sm:$0xff]
  %s2565 = scalar_lea.vmem [#allocation2], 2
  %v2566 = vld [vmem:[%s2565] ss:$6 sm:$0xff]
  %s2567 = scalar_lea.vmem [#allocation2], 50
  %v2568 = vld [vmem:[%s2567] ss:$6 sm:$0xff]
  %s2569 = scalar_lea.vmem [#allocation2], 98
  %v2570 = vld [vmem:[%s2569] ss:$6 sm:$0xff]
  %s2571 = scalar_lea.vmem [#allocation2], 146
  %v2572 = vld [vmem:[%s2571] ss:$6 sm:$0xff]
  %s2573 = scalar_lea.vmem [#allocation2], 194
  %v2574 = vld [vmem:[%s2573] ss:$6 sm:$0xff]
  %s2575 = scalar_lea.vmem [#allocation2], 242
  %v2576 = vld [vmem:[%s2575] ss:$6 sm:$0xff]
  %s2577 = scalar_lea.vmem [#allocation2], 290
  %v2578 = vld [vmem:[%s2577] ss:$6 sm:$0xff]
  %s2579 = scalar_lea.vmem [#allocation2], 338
  %v2580 = vld [vmem:[%s2579] ss:$6 sm:$0xff]
  %s2581 = scalar_lea.vmem [#allocation2], 3
  %v2582 = vld [vmem:[%s2581] ss:$6 sm:$0xff]
  %s2583 = scalar_lea.vmem [#allocation2], 51
  %v2584 = vld [vmem:[%s2583] ss:$6 sm:$0xff]
  %s2585 = scalar_lea.vmem [#allocation2], 99
  %v2586 = vld [vmem:[%s2585] ss:$6 sm:$0xff]
  %s2587 = scalar_lea.vmem [#allocation2], 147
  %v2588 = vld [vmem:[%s2587] ss:$6 sm:$0xff]
  %s2589 = scalar_lea.vmem [#allocation2], 195
  %v2590 = vld [vmem:[%s2589] ss:$6 sm:$0xff]
  %s2591 = scalar_lea.vmem [#allocation2], 243
  %v2592 = vld [vmem:[%s2591] ss:$6 sm:$0xff]
  %s2593 = scalar_lea.vmem [#allocation2], 291
  %v2594 = vld [vmem:[%s2593] ss:$6 sm:$0xff]
  %s2595 = scalar_lea.vmem [#allocation2], 339
  %v2596 = vld [vmem:[%s2595] ss:$6 sm:$0xff]
  %v2597 = vmax.f32 %v2566, %v2582
  %v2598 = vmax.f32 %v2568, %v2584
  %v2599 = vmax.f32 %v2570, %v2586
  %v2600 = vmax.f32 %v2572, %v2588
  %v2601 = vmax.f32 %v2574, %v2590
  %v2602 = vmax.f32 %v2576, %v2592
  %v2603 = vmax.f32 %v2578, %v2594
  %v2604 = vmax.f32 %v2580, %v2596
  %s2605 = scalar_lea.vmem %s3, 64
  %v2606 = vld [vmem:[%s2605] sm:$0xff]
  %v2607 = vld [vmem:[%s2605 + $0x8] sm:$0xff]
  %v2608 = vld [vmem:[%s2605 + $0x10] sm:$0xff]
  %v2609 = vld [vmem:[%s2605 + $0x18] sm:$0xff]
  %v2610 = vld [vmem:[%s2605 + $0x20] sm:$0xff]
  %v2611 = vld [vmem:[%s2605 + $0x28] sm:$0xff]
  %v2612 = vld [vmem:[%s2605 + $0x30] sm:$0xff]
  %v2613 = vld [vmem:[%s2605 + $0x38] sm:$0xff]
  %v2615 = vsel %vm2469, %v2597, 0
  %v2618 = vsel %vm2469, %v2598, 0
  %v2621 = vsel %vm2469, %v2599, 0
  %v2624 = vsel %vm2469, %v2600, 0
  %v2627 = vsel %vm2469, %v2601, 0
  %v2630 = vsel %vm2469, %v2602, 0
  %v2633 = vsel %vm2469, %v2603, 0
  %v2636 = vsel %vm2469, %v2604, 0
  %2638 = vmatpush.msra.mxu0 0.0
  %2639 = vmatpush.msra.mxu0 0.0
  %2640 = vmatpush.msra.mxu0 0.0
  %2641 = vmatpush.msra.mxu0 0.0
  %2642 = vmatpush.msra.mxu0 0.0
  %2643 = vmatpush.msra.mxu0 0.0
  %2644 = vmatpush.msra.mxu0 0.0
  %2645 = vmatpush.msra.mxu0 0.0
  %2646 = vmatpush.msra.mxu0 %v2613
  %2647 = vmatpush.msra.mxu0 %v2612
  %2648 = vmatpush.msra.mxu0 %v2611
  %2649 = vmatpush.msra.mxu0 %v2610
  %2650 = vmatpush.msra.mxu0 %v2609
  %2651 = vmatpush.msra.mxu0 %v2608
  %2652 = vmatpush.msra.mxu0 %v2607
  %2653 = vmatpush.msra.mxu0 %v2606
  %2654 = vmatmul.f32.gmra.mxu0 %v2615
  %v2655 = vpop.f32.mrf.mxu0
  %v2656 = vadd.f32 0.0, %v2655
  %2657 = vmatmul.f32.gmra.mxu0 %v2618
  %v2658 = vpop.f32.mrf.mxu0
  %v2659 = vadd.f32 0.0, %v2658
  %2660 = vmatmul.f32.gmra.mxu0 %v2621
  %v2661 = vpop.f32.mrf.mxu0
  %v2662 = vadd.f32 0.0, %v2661
  %2663 = vmatmul.f32.gmra.mxu0 %v2624
  %v2664 = vpop.f32.mrf.mxu0
  %v2665 = vadd.f32 0.0, %v2664
  %2666 = vmatmul.f32.gmra.mxu0 %v2627
  %v2667 = vpop.f32.mrf.mxu0
  %v2668 = vadd.f32 0.0, %v2667
  %2669 = vmatmul.f32.gmra.mxu0 %v2630
  %v2670 = vpop.f32.mrf.mxu0
  %v2671 = vadd.f32 0.0, %v2670
  %2672 = vmatmul.f32.gmra.mxu0 %v2633
  %v2673 = vpop.f32.mrf.mxu0
  %v2674 = vadd.f32 0.0, %v2673
  %2675 = vmatmul.f32.gmra.mxu0 %v2636
  %v2676 = vpop.f32.mrf.mxu0
  %v2677 = vadd.f32 0.0, %v2676
  %2678 = vdwg.mxu0
  %v2680 = vsel %vm2469, %v2549, 0
  %v2683 = vsel %vm2469, %v2550, 0
  %v2686 = vsel %vm2469, %v2551, 0
  %v2689 = vsel %vm2469, %v2552, 0
  %v2692 = vsel %vm2469, %v2553, 0
  %v2695 = vsel %vm2469, %v2554, 0
  %v2698 = vsel %vm2469, %v2555, 0
  %v2701 = vsel %vm2469, %v2556, 0
  %2703 = vmatpush.msra.mxu0 0.0
  %2704 = vmatpush.msra.mxu0 0.0
  %2705 = vmatpush.msra.mxu0 0.0
  %2706 = vmatpush.msra.mxu0 0.0
  %2707 = vmatpush.msra.mxu0 0.0
  %2708 = vmatpush.msra.mxu0 0.0
  %2709 = vmatpush.msra.mxu0 0.0
  %2710 = vmatpush.msra.mxu0 0.0
  %2711 = vmatpush.msra.mxu0 %v2564
  %2712 = vmatpush.msra.mxu0 %v2563
  %2713 = vmatpush.msra.mxu0 %v2562
  %2714 = vmatpush.msra.mxu0 %v2561
  %2715 = vmatpush.msra.mxu0 %v2560
  %2716 = vmatpush.msra.mxu0 %v2559
  %2717 = vmatpush.msra.mxu0 %v2558
  %2718 = vmatpush.msra.mxu0 %v2557
  %2719 = vmatmul.f32.gmra.mxu0 %v2680
  %v2720 = vpop.f32.mrf.mxu0
  %v2721 = vadd.f32 %v2656, %v2720
  %2722 = vmatmul.f32.gmra.mxu0 %v2683
  %v2723 = vpop.f32.mrf.mxu0
  %v2724 = vadd.f32 %v2659, %v2723
  %2725 = vmatmul.f32.gmra.mxu0 %v2686
  %v2726 = vpop.f32.mrf.mxu0
  %v2727 = vadd.f32 %v2662, %v2726
  %2728 = vmatmul.f32.gmra.mxu0 %v2689
  %v2729 = vpop.f32.mrf.mxu0
  %v2730 = vadd.f32 %v2665, %v2729
  %2731 = vmatmul.f32.gmra.mxu0 %v2692
  %v2732 = vpop.f32.mrf.mxu0
  %v2733 = vadd.f32 %v2668, %v2732
  %2734 = vmatmul.f32.gmra.mxu0 %v2695
  %v2735 = vpop.f32.mrf.mxu0
  %v2736 = vadd.f32 %v2671, %v2735
  %2737 = vmatmul.f32.gmra.mxu0 %v2698
  %v2738 = vpop.f32.mrf.mxu0
  %v2739 = vadd.f32 %v2674, %v2738
  %2740 = vmatmul.f32.gmra.mxu0 %v2701
  %v2741 = vpop.f32.mrf.mxu0
  %v2742 = vadd.f32 %v2677, %v2741
  %2743 = vdwg.mxu0
  %s2744 = scalar_lea.vmem [#allocation2], 4
  %v2745 = vld [vmem:[%s2744] ss:$6 sm:$0xff]
  %s2746 = scalar_lea.vmem [#allocation2], 52
  %v2747 = vld [vmem:[%s2746] ss:$6 sm:$0xff]
  %s2748 = scalar_lea.vmem [#allocation2], 100
  %v2749 = vld [vmem:[%s2748] ss:$6 sm:$0xff]
  %s2750 = scalar_lea.vmem [#allocation2], 148
  %v2751 = vld [vmem:[%s2750] ss:$6 sm:$0xff]
  %s2752 = scalar_lea.vmem [#allocation2], 196
  %v2753 = vld [vmem:[%s2752] ss:$6 sm:$0xff]
  %s2754 = scalar_lea.vmem [#allocation2], 244
  %v2755 = vld [vmem:[%s2754] ss:$6 sm:$0xff]
  %s2756 = scalar_lea.vmem [#allocation2], 292
  %v2757 = vld [vmem:[%s2756] ss:$6 sm:$0xff]
  %s2758 = scalar_lea.vmem [#allocation2], 340
  %v2759 = vld [vmem:[%s2758] ss:$6 sm:$0xff]
  %s2760 = scalar_lea.vmem [#allocation2], 5
  %v2761 = vld [vmem:[%s2760] ss:$6 sm:$0xff]
  %s2762 = scalar_lea.vmem [#allocation2], 53
  %v2763 = vld [vmem:[%s2762] ss:$6 sm:$0xff]
  %s2764 = scalar_lea.vmem [#allocation2], 101
  %v2765 = vld [vmem:[%s2764] ss:$6 sm:$0xff]
  %s2766 = scalar_lea.vmem [#allocation2], 149
  %v2767 = vld [vmem:[%s2766] ss:$6 sm:$0xff]
  %s2768 = scalar_lea.vmem [#allocation2], 197
  %v2769 = vld [vmem:[%s2768] ss:$6 sm:$0xff]
  %s2770 = scalar_lea.vmem [#allocation2], 245
  %v2771 = vld [vmem:[%s2770] ss:$6 sm:$0xff]
  %s2772 = scalar_lea.vmem [#allocation2], 293
  %v2773 = vld [vmem:[%s2772] ss:$6 sm:$0xff]
  %s2774 = scalar_lea.vmem [#allocation2], 341
  %v2775 = vld [vmem:[%s2774] ss:$6 sm:$0xff]
  %v2776 = vmax.f32 %v2745, %v2761
  %v2777 = vmax.f32 %v2747, %v2763
  %v2778 = vmax.f32 %v2749, %v2765
  %v2779 = vmax.f32 %v2751, %v2767
  %v2780 = vmax.f32 %v2753, %v2769
  %v2781 = vmax.f32 %v2755, %v2771
  %v2782 = vmax.f32 %v2757, %v2773
  %v2783 = vmax.f32 %v2759, %v2775
  %s2784 = scalar_lea.vmem %s3, 128
  %v2785 = vld [vmem:[%s2784] sm:$0xff]
  %v2786 = vld [vmem:[%s2784 + $0x8] sm:$0xff]
  %v2787 = vld [vmem:[%s2784 + $0x10] sm:$0xff]
  %v2788 = vld [vmem:[%s2784 + $0x18] sm:$0xff]
  %v2789 = vld [vmem:[%s2784 + $0x20] sm:$0xff]
  %v2790 = vld [vmem:[%s2784 + $0x28] sm:$0xff]
  %v2791 = vld [vmem:[%s2784 + $0x30] sm:$0xff]
  %v2792 = vld [vmem:[%s2784 + $0x38] sm:$0xff]
  %v2794 = vsel %vm2469, %v2776, 0
  %v2797 = vsel %vm2469, %v2777, 0
  %v2800 = vsel %vm2469, %v2778, 0
  %v2803 = vsel %vm2469, %v2779, 0
  %v2806 = vsel %vm2469, %v2780, 0
  %v2809 = vsel %vm2469, %v2781, 0
  %v2812 = vsel %vm2469, %v2782, 0
  %v2815 = vsel %vm2469, %v2783, 0
  %2817 = vmatpush.msra.mxu0 0.0
  %2818 = vmatpush.msra.mxu0 0.0
  %2819 = vmatpush.msra.mxu0 0.0
  %2820 = vmatpush.msra.mxu0 0.0
  %2821 = vmatpush.msra.mxu0 0.0
  %2822 = vmatpush.msra.mxu0 0.0
  %2823 = vmatpush.msra.mxu0 0.0
  %2824 = vmatpush.msra.mxu0 0.0
  %2825 = vmatpush.msra.mxu0 %v2792
  %2826 = vmatpush.msra.mxu0 %v2791
  %2827 = vmatpush.msra.mxu0 %v2790
  %2828 = vmatpush.msra.mxu0 %v2789
  %2829 = vmatpush.msra.mxu0 %v2788
  %2830 = vmatpush.msra.mxu0 %v2787
  %2831 = vmatpush.msra.mxu0 %v2786
  %2832 = vmatpush.msra.mxu0 %v2785
  %2833 = vmatmul.f32.gmra.mxu0 %v2794
  %v2834 = vpop.f32.mrf.mxu0
  %v2835 = vadd.f32 0.0, %v2834
  %2836 = vmatmul.f32.gmra.mxu0 %v2797
  %v2837 = vpop.f32.mrf.mxu0
  %v2838 = vadd.f32 0.0, %v2837
  %2839 = vmatmul.f32.gmra.mxu0 %v2800
  %v2840 = vpop.f32.mrf.mxu0
  %v2841 = vadd.f32 0.0, %v2840
  %2842 = vmatmul.f32.gmra.mxu0 %v2803
  %v2843 = vpop.f32.mrf.mxu0
  %v2844 = vadd.f32 0.0, %v2843
  %2845 = vmatmul.f32.gmra.mxu0 %v2806
  %v2846 = vpop.f32.mrf.mxu0
  %v2847 = vadd.f32 0.0, %v2846
  %2848 = vmatmul.f32.gmra.mxu0 %v2809
  %v2849 = vpop.f32.mrf.mxu0
  %v2850 = vadd.f32 0.0, %v2849
  %2851 = vmatmul.f32.gmra.mxu0 %v2812
  %v2852 = vpop.f32.mrf.mxu0
  %v2853 = vadd.f32 0.0, %v2852
  %2854 = vmatmul.f32.gmra.mxu0 %v2815
  %v2855 = vpop.f32.mrf.mxu0
  %v2856 = vadd.f32 0.0, %v2855
  %2857 = vdwg.mxu0
  %v2858 = vadd.f32 %v2721, %v2835
  %v2859 = vadd.f32 %v2724, %v2838
  %v2860 = vadd.f32 %v2727, %v2841
  %v2861 = vadd.f32 %v2730, %v2844
  %v2862 = vadd.f32 %v2733, %v2847
  %v2863 = vadd.f32 %v2736, %v2850
  %v2864 = vadd.f32 %v2739, %v2853
  %v2865 = vadd.f32 %v2742, %v2856
  %v2866 = vld [vmem:[%s4] sm:$0x1]
  %v2868 = vperm.slane %v2866, 0
  %v2870 = vadd.f32 %v2858, %v2868
  %v2871 = vadd.f32 %v2859, %v2868
  %v2872 = vadd.f32 %v2860, %v2868
  %v2873 = vadd.f32 %v2861, %v2868
  %v2874 = vadd.f32 %v2862, %v2868
  %v2875 = vadd.f32 %v2863, %v2868
  %v2876 = vadd.f32 %v2864, %v2868
  %v2877 = vadd.f32 %v2865, %v2868
  %v2878 = vmax.f32 %v2870, 0.0
  %v2879 = vmax.f32 %v2871, 0.0
  %v2880 = vmax.f32 %v2872, 0.0
  %v2881 = vmax.f32 %v2873, 0.0
  %v2882 = vmax.f32 %v2874, 0.0
  %v2883 = vmax.f32 %v2875, 0.0
  %v2884 = vmax.f32 %v2876, 0.0
  %v2885 = vmax.f32 %v2877, 0.0
  %2886 = vst.msk [vmem:[#allocation3] sm:$0xff] %vm2469, %v2878
  %2887 = vst.msk [vmem:[#allocation3 + $0x8] sm:$0xff] %vm2469, %v2879
  %2888 = vst.msk [vmem:[#allocation3 + $0x10] sm:$0xff] %vm2469, %v2880
  %2889 = vst.msk [vmem:[#allocation3 + $0x18] sm:$0xff] %vm2469, %v2881
  %2890 = vst.msk [vmem:[#allocation3 + $0x20] sm:$0xff] %vm2469, %v2882
  %2891 = vst.msk [vmem:[#allocation3 + $0x28] sm:$0xff] %vm2469, %v2883
  %2892 = vst.msk [vmem:[#allocation3 + $0x30] sm:$0xff] %vm2469, %v2884
  %2893 = vst.msk [vmem:[#allocation3 + $0x38] sm:$0xff] %vm2469, %v2885
  %v2894 = vld [vmem:[#allocation3] ss:$8 sm:$0xf]
  %v2895 = vld [vmem:[#allocation3] ss:$8 sm:$0xf0]
  %v2896 = vor.u32 %v2894, %v2895
  %s2897 = scalar_lea.vmem [#allocation3], 1
  %v2898 = vld [vmem:[%s2897] ss:$8 sm:$0xf]
  %v2899 = vld [vmem:[%s2897] ss:$8 sm:$0xf0]
  %v2900 = vor.u32 %v2898, %v2899
  %v2901 = vmax.f32 %v2896, %v2900
  %v2902 = vld [vmem:[%s5] sm:$0xff]
  %v2903 = vld [vmem:[%s5 + $0x8] sm:$0xff]
  %v2904 = vld [vmem:[%s5 + $0x10] sm:$0xff]
  %v2905 = vld [vmem:[%s5 + $0x18] sm:$0xff]
  %v2906 = vld [vmem:[%s5 + $0x20] sm:$0xff]
  %v2907 = vld [vmem:[%s5 + $0x28] sm:$0xff]
  %v2908 = vld [vmem:[%s5 + $0x30] sm:$0xff]
  %v2909 = vld [vmem:[%s5 + $0x38] sm:$0xff]
  %s2910 = scalar_lea.vmem [#allocation3], 2
  %v2911 = vld [vmem:[%s2910] ss:$8 sm:$0xf]
  %v2912 = vld [vmem:[%s2910] ss:$8 sm:$0xf0]
  %v2913 = vor.u32 %v2911, %v2912
  %s2914 = scalar_lea.vmem [#allocation3], 3
  %v2915 = vld [vmem:[%s2914] ss:$8 sm:$0xf]
  %v2916 = vld [vmem:[%s2914] ss:$8 sm:$0xf0]
  %v2917 = vor.u32 %v2915, %v2916
  %v2918 = vmax.f32 %v2913, %v2917
  %s2919 = scalar_lea.vmem %s5, 64
  %v2920 = vld [vmem:[%s2919] sm:$0xff]
  %v2921 = vld [vmem:[%s2919 + $0x8] sm:$0xff]
  %v2922 = vld [vmem:[%s2919 + $0x10] sm:$0xff]
  %v2923 = vld [vmem:[%s2919 + $0x18] sm:$0xff]
  %v2924 = vld [vmem:[%s2919 + $0x20] sm:$0xff]
  %v2925 = vld [vmem:[%s2919 + $0x28] sm:$0xff]
  %v2926 = vld [vmem:[%s2919 + $0x30] sm:$0xff]
  %v2927 = vld [vmem:[%s2919 + $0x38] sm:$0xff]
  %v2929 = vsel %vm2469, %v2918, 0
  %2931 = vmatpush.msra.mxu0 0.0
  %2932 = vmatpush.msra.mxu0 0.0
  %2933 = vmatpush.msra.mxu0 0.0
  %2934 = vmatpush.msra.mxu0 0.0
  %2935 = vmatpush.msra.mxu0 0.0
  %2936 = vmatpush.msra.mxu0 0.0
  %2937 = vmatpush.msra.mxu0 0.0
  %2938 = vmatpush.msra.mxu0 0.0
  %2939 = vmatpush.msra.mxu0 %v2927
  %2940 = vmatpush.msra.mxu0 %v2926
  %2941 = vmatpush.msra.mxu0 %v2925
  %2942 = vmatpush.msra.mxu0 %v2924
  %2943 = vmatpush.msra.mxu0 %v2923
  %2944 = vmatpush.msra.mxu0 %v2922
  %2945 = vmatpush.msra.mxu0 %v2921
  %2946 = vmatpush.msra.mxu0 %v2920
  %2947 = vmatmul.f32.gmra.mxu0 %v2929
  %v2948 = vpop.f32.mrf.mxu0
  %v2949 = vadd.f32 0.0, %v2948
  %2950 = vdwg.mxu0
  %v2952 = vsel %vm2469, %v2901, 0
  %2954 = vmatpush.msra.mxu0 0.0
  %2955 = vmatpush.msra.mxu0 0.0
  %2956 = vmatpush.msra.mxu0 0.0
  %2957 = vmatpush.msra.mxu0 0.0
  %2958 = vmatpush.msra.mxu0 0.0
  %2959 = vmatpush.msra.mxu0 0.0
  %2960 = vmatpush.msra.mxu0 0.0
  %2961 = vmatpush.msra.mxu0 0.0
  %2962 = vmatpush.msra.mxu0 %v2909
  %2963 = vmatpush.msra.mxu0 %v2908
  %2964 = vmatpush.msra.mxu0 %v2907
  %2965 = vmatpush.msra.mxu0 %v2906
  %2966 = vmatpush.msra.mxu0 %v2905
  %2967 = vmatpush.msra.mxu0 %v2904
  %2968 = vmatpush.msra.mxu0 %v2903
  %2969 = vmatpush.msra.mxu0 %v2902
  %2970 = vmatmul.f32.gmra.mxu0 %v2952
  %v2971 = vpop.f32.mrf.mxu0
  %v2972 = vadd.f32 %v2949, %v2971
  %2973 = vdwg.mxu0
  %s2974 = scalar_lea.vmem [#allocation3], 4
  %v2975 = vld [vmem:[%s2974] ss:$8 sm:$0xf]
  %v2976 = vld [vmem:[%s2974] ss:$8 sm:$0xf0]
  %v2977 = vor.u32 %v2975, %v2976
  %s2978 = scalar_lea.vmem [#allocation3], 5
  %v2979 = vld [vmem:[%s2978] ss:$8 sm:$0xf]
  %v2980 = vld [vmem:[%s2978] ss:$8 sm:$0xf0]
  %v2981 = vor.u32 %v2979, %v2980
  %v2982 = vmax.f32 %v2977, %v2981
  %s2983 = scalar_lea.vmem %s5, 128
  %v2984 = vld [vmem:[%s2983] sm:$0xff]
  %v2985 = vld [vmem:[%s2983 + $0x8] sm:$0xff]
  %v2986 = vld [vmem:[%s2983 + $0x10] sm:$0xff]
  %v2987 = vld [vmem:[%s2983 + $0x18] sm:$0xff]
  %v2988 = vld [vmem:[%s2983 + $0x20] sm:$0xff]
  %v2989 = vld [vmem:[%s2983 + $0x28] sm:$0xff]
  %v2990 = vld [vmem:[%s2983 + $0x30] sm:$0xff]
  %v2991 = vld [vmem:[%s2983 + $0x38] sm:$0xff]
  %v2993 = vsel %vm2469, %v2982, 0
  %2995 = vmatpush.msra.mxu0 0.0
  %2996 = vmatpush.msra.mxu0 0.0
  %2997 = vmatpush.msra.mxu0 0.0
  %2998 = vmatpush.msra.mxu0 0.0
  %2999 = vmatpush.msra.mxu0 0.0
  %3000 = vmatpush.msra.mxu0 0.0
  %3001 = vmatpush.msra.mxu0 0.0
  %3002 = vmatpush.msra.mxu0 0.0
  %3003 = vmatpush.msra.mxu0 %v2991
  %3004 = vmatpush.msra.mxu0 %v2990
  %3005 = vmatpush.msra.mxu0 %v2989
  %3006 = vmatpush.msra.mxu0 %v2988
  %3007 = vmatpush.msra.mxu0 %v2987
  %3008 = vmatpush.msra.mxu0 %v2986
  %3009 = vmatpush.msra.mxu0 %v2985
  %3010 = vmatpush.msra.mxu0 %v2984
  %3011 = vmatmul.f32.gmra.mxu0 %v2993
  %v3012 = vpop.f32.mrf.mxu0
  %v3013 = vadd.f32 0.0, %v3012
  %3014 = vdwg.mxu0
  %v3015 = vadd.f32 %v2972, %v3013
  %s3016 = scalar_lea.vmem [#allocation3], 6
  %v3017 = vld [vmem:[%s3016] ss:$8 sm:$0xf]
  %v3018 = vld [vmem:[%s3016] ss:$8 sm:$0xf0]
  %v3019 = vor.u32 %v3017, %v3018
  %s3020 = scalar_lea.vmem [#allocation3], 7
  %v3021 = vld [vmem:[%s3020] ss:$8 sm:$0xf]
  %v3022 = vld [vmem:[%s3020] ss:$8 sm:$0xf0]
  %v3023 = vor.u32 %v3021, %v3022
  %v3024 = vmax.f32 %v3019, %v3023
  %s3025 = scalar_lea.vmem %s5, 192
  %v3026 = vld [vmem:[%s3025] sm:$0xff]
  %v3027 = vld [vmem:[%s3025 + $0x8] sm:$0xff]
  %v3028 = vld [vmem:[%s3025 + $0x10] sm:$0xff]
  %v3029 = vld [vmem:[%s3025 + $0x18] sm:$0xff]
  %v3030 = vld [vmem:[%s3025 + $0x20] sm:$0xff]
  %v3031 = vld [vmem:[%s3025 + $0x28] sm:$0xff]
  %v3032 = vld [vmem:[%s3025 + $0x30] sm:$0xff]
  %v3033 = vld [vmem:[%s3025 + $0x38] sm:$0xff]
  %v3035 = vsel %vm2469, %v3024, 0
  %3037 = vmatpush.msra.mxu0 0.0
  %3038 = vmatpush.msra.mxu0 0.0
  %3039 = vmatpush.msra.mxu0 0.0
  %3040 = vmatpush.msra.mxu0 0.0
  %3041 = vmatpush.msra.mxu0 0.0
  %3042 = vmatpush.msra.mxu0 0.0
  %3043 = vmatpush.msra.mxu0 0.0
  %3044 = vmatpush.msra.mxu0 0.0
  %3045 = vmatpush.msra.mxu0 %v3033
  %3046 = vmatpush.msra.mxu0 %v3032
  %3047 = vmatpush.msra.mxu0 %v3031
  %3048 = vmatpush.msra.mxu0 %v3030
  %3049 = vmatpush.msra.mxu0 %v3029
  %3050 = vmatpush.msra.mxu0 %v3028
  %3051 = vmatpush.msra.mxu0 %v3027
  %3052 = vmatpush.msra.mxu0 %v3026
  %3053 = vmatmul.f32.gmra.mxu0 %v3035
  %v3054 = vpop.f32.mrf.mxu0
  %v3055 = vadd.f32 0.0, %v3054
  %3056 = vdwg.mxu0
  %v3057 = vadd.f32 %v3015, %v3055
  %v3058 = vld [vmem:[%s6] sm:$0x1]
  %v3060 = vperm.slane %v3058, 0
  %v3062 = vadd.f32 %v3057, %v3060
  %v3063 = vmax.f32 %v3062, 0.0
  %v3064 = vld [vmem:[%s7] sm:$0xff]
  %v3065 = vld [vmem:[%s7 + $0x8] sm:$0xff]
  %v3066 = vld [vmem:[%s7 + $0x10] sm:$0xff]
  %v3067 = vld [vmem:[%s7 + $0x18] sm:$0xff]
  %v3068 = vld [vmem:[%s7 + $0x20] sm:$0xff]
  %v3069 = vld [vmem:[%s7 + $0x28] sm:$0xff]
  %v3070 = vld [vmem:[%s7 + $0x30] sm:$0xff]
  %v3071 = vld [vmem:[%s7 + $0x38] sm:$0xff]
  %v3072 = vld [vmem:[%s7 + $0x40] sm:$0xff]
  %v3073 = vld [vmem:[%s7 + $0x48] sm:$0xff]
  %v3074 = vld [vmem:[%s7 + $0x50] sm:$0xff]
  %v3075 = vld [vmem:[%s7 + $0x58] sm:$0xff]
  %v3076 = vld [vmem:[%s7 + $0x60] sm:$0xff]
  %v3077 = vld [vmem:[%s7 + $0x68] sm:$0xff]
  %v3078 = vld [vmem:[%s7 + $0x70] sm:$0xff]
  %v3079 = vld [vmem:[%s7 + $0x78] sm:$0xff]
  %v3080 = vld [vmem:[%s8] sm:$0x1]
  %v3082 = vperm.slane %v3080, 0
  %3084 = vmatpush.msra.mxu0 %v3079
  %3085 = vmatpush.msra.mxu0 %v3078
  %3086 = vmatpush.msra.mxu0 %v3077
  %3087 = vmatpush.msra.mxu0 %v3076
  %3088 = vmatpush.msra.mxu0 %v3075
  %3089 = vmatpush.msra.mxu0 %v3074
  %3090 = vmatpush.msra.mxu0 %v3073
  %3091 = vmatpush.msra.mxu0 %v3072
  %3092 = vmatpush.msra.mxu0 %v3071
  %3093 = vmatpush.msra.mxu0 %v3070
  %3094 = vmatpush.msra.mxu0 %v3069
  %3095 = vmatpush.msra.mxu0 %v3068
  %3096 = vmatpush.msra.mxu0 %v3067
  %3097 = vmatpush.msra.mxu0 %v3066
  %3098 = vmatpush.msra.mxu0 %v3065
  %3099 = vmatpush.msra.mxu0 %v3064
  %3100 = vmatmul.f32.gmra.mxu0 %v3063
  %v3101 = vpop.f32.mrf.mxu0
  %v3102 = vadd.f32 %v3082, %v3101
  %3103 = vdwg.mxu0
  %3104 = vst [vmem:[%s9] sm:$0xff] %v3102
  // Predicated region
  $region38: #{cnn_forward.1} parent=0 // pred_check
    _
  $region39: #{cnn_forward.1} parent=0 // pred_check_branch
    %3106 = sbr.rel (0) target = $region41
  $region40: #{cnn_forward.1} parent=0 // pred_region
    _
  $region41: #{cnn_forward.1} parent=0 // pred_fallthru
    _
  // Predicated region
  $region42: #{cnn_forward.1} parent=0 // pred_check
    _
  $region43: #{cnn_forward.1} parent=0 // pred_check_branch
    %3108 = sbr.rel (0) target = $region45
  $region44: #{cnn_forward.1} parent=0 // pred_region
    _
  $region45: #{cnn_forward.1} parent=0 // pred_fallthru
    _

</llo_original>
